<compile_context>
chip_gen: v7x
topology: tpu7x:2x2x1
jax: 0.10.0
libtpu: 0.0.40
codegen_flags: <defaults>
</compile_context>

<pallas_src>
import functools

import jax
import jax.numpy as jnp
from jax import lax
from jax.experimental import pallas as pl
from jax.experimental.pallas import tpu as pltpu


def _round_up(x, m):
    return (x + m - 1) // m * m


def _vmem_capacity_bytes():
    try:
        return int(pltpu.get_tpu_info().vmem_capacity_bytes)
    except Exception:
        return 64 * 1024 * 1024  # conservative (v7x per-core physical VMEM)


def _device_kind():
    try:
        return jax.devices()[0].device_kind.lower()
    except Exception:
        return ""


def _lstm_fc_kernel(x_ref, wih_ref, whh_ref, b_ref, wfc_ref, bfc_ref, out_ref,
                    gates_ref, h_ref, c_ref, *, hidden_pad, t_chunk, b_tile,
                    unroll):
    """One (batch_tile, time_chunk) grid step of the LSTM recurrence + final FC."""
    Hp = hidden_pad
    t_idx = pl.program_id(1)

    # New batch tile -> reset recurrent state carried in VMEM scratch.
    @pl.when(t_idx == 0)
    def _():
        h_ref[...] = jnp.zeros_like(h_ref)
        c_ref[...] = jnp.zeros_like(c_ref)

    # Input projection for the whole time chunk as ONE MXU GEMM, bias folded
    # in once per chunk.  bf16 operands, f32 accumulation; stored bf16 to
    # halve scratch VMEM and store traffic.
    x_flat = x_ref[...].reshape(t_chunk * b_tile, x_ref.shape[-1])
    gates_all = (jnp.dot(x_flat, wih_ref[...], preferred_element_type=jnp.float32)
                 + b_ref[...])
    gates_ref[...] = gates_all.reshape(t_chunk, b_tile, 4 * Hp).astype(
        gates_ref.dtype)

    def sigmoid_via_tanh(v):
        # One EUP op (tanh) instead of two (exp + recip); mul/add on the VPU.
        return 0.5 * jnp.tanh(0.5 * v) + 0.5

    def step(t, carry):
        h, c = carry                                        # f32 (b_tile, Hp)
        gates = (gates_ref[t].astype(jnp.float32)
                 + jnp.dot(h.astype(jnp.bfloat16), whh_ref[...],
                           preferred_element_type=jnp.float32))   # (b_tile, 4Hp)
        # Lane-aligned gate slices (Hp is a multiple of 128); PyTorch order ifgo.
        i_g = sigmoid_via_tanh(gates[:, 0 * Hp:1 * Hp])
        f_g = sigmoid_via_tanh(gates[:, 1 * Hp:2 * Hp])
        g_g = jnp.tanh(gates[:, 2 * Hp:3 * Hp])
        o_g = sigmoid_via_tanh(gates[:, 3 * Hp:4 * Hp])
        c_new = f_g * c + i_g * g_g
        h_new = o_g * jnp.tanh(c_new)
        return h_new, c_new

    h, c = lax.fori_loop(0, t_chunk, step, (h_ref[...], c_ref[...]),
                         unroll=unroll)
    h_ref[...] = h
    c_ref[...] = c

    # Final Linear applied to the last timestep's hidden state.
    @pl.when(t_idx == pl.num_programs(1) - 1)
    def _():
        out_ref[...] = (
            jnp.dot(h.astype(jnp.bfloat16), wfc_ref[...],
                    preferred_element_type=jnp.float32)
            + bfc_ref[...])


def simple_rnn_forward(x, w_ih, w_hh, b_ih, b_hh, w_fc, b_fc, *, t_chunk=None):
    """x: (B, T, I) float32, PyTorch-style batch_first input. Returns (B, O)."""
    B, T, I = x.shape
    H = w_ih.shape[0] // 4
    O = w_fc.shape[0]

    f32, bf16 = jnp.float32, jnp.bfloat16

    # Padded / tiled sizes: lane dims to 128, batch to sublane (8) / MXU tiles.
    Ip = _round_up(I, 128)
    Hp = _round_up(H, 128)
    Op = _round_up(O, 128)

    kind = _device_kind()
    narrow_mxu = any(t in kind for t in ("v2", "v3", "v4", "v5"))
    if B >= 256 and not narrow_mxu:
        # 256-wide MXU (v6e/v7x): fill the full array per recurrent push.
        Bp, b_tile = _round_up(B, 256), 256
    elif B > 128:
        Bp, b_tile = _round_up(B, 128), 128
    else:
        Bp = _round_up(B, 8)
        b_tile = Bp

    # Generation-aware VMEM budget.
    vmem_cap = _vmem_capacity_bytes()
    select_budget = int(0.55 * vmem_cap)                     # for t_chunk sizing
    vmem_cap_limit = min(int(0.70 * vmem_cap), 100 * 1024 * 1024)

    # Resident bytes with single-buffered weights; per-row bytes for the
    # double-buffered x chunk + bf16 gates scratch.
    fixed_bytes = ((Ip + Hp) * 4 * Hp * 2                    # W_ih, W_hh (bf16, 1 buf)
                   + Hp * Op * 2                             # W_fc (bf16, 1 buf)
                   + (4 * Hp + Op) * 4                       # biases (f32)
                   + 2 * b_tile * Op * 4                     # out (f32, 2 bufs)
                   + 2 * b_tile * Hp * 4)                    # h, c carries (f32)
    bytes_per_row = b_tile * (2 * Ip * 2                     # x chunk (bf16, 2 bufs)
                              + 4 * Hp * 2)                  # gates scratch (bf16)
    budget_rows = max(1, (select_budget - fixed_bytes) // bytes_per_row)

    if t_chunk is None:
        cap = min(64, budget_rows)
        t_chunk = 1
        for c in range(1, T + 1):
            if T % c == 0 and c <= cap:
                t_chunk = c
    assert T % t_chunk == 0, "t_chunk must divide T"
    unroll = max(1, min(t_chunk, 8))

    # x: (B, T, I) -> time-major, padded, bf16.  transpose + jnp.pad fuse into
    # a single XLA producer (no zeros+scatter pass).
    x_tm = jnp.transpose(x, (1, 0, 2)).astype(bf16)
    x_p = jnp.pad(x_tm, ((0, 0), (0, Bp - B), (0, Ip - I)))

    def gate_weight(w, in_dim, in_pad):
        # PyTorch (4H, in_dim), gate order [i,f,g,o] -> (in_pad, 4*Hp) so each
        # gate block starts on a 128-lane boundary; pad rows/cols are zero.
        w4 = w.reshape(4, H, in_dim).astype(f32)
        wp = jnp.zeros((4, Hp, in_pad), f32).at[:, :H, :in_dim].set(w4)
        return wp.transpose(2, 0, 1).reshape(in_pad, 4 * Hp).astype(bf16)

    wih_p = gate_weight(w_ih, I, Ip)                         # (Ip, 4Hp) bf16
    whh_p = gate_weight(w_hh, H, Hp)                         # (Hp, 4Hp) bf16
    b_p = jnp.zeros((4, Hp), f32).at[:, :H].set(
        (b_ih + b_hh).reshape(4, H).astype(f32)).reshape(1, 4 * Hp)
    wfc_p = jnp.zeros((Hp, Op), f32).at[:H, :O].set(
        w_fc.T.astype(f32)).astype(bf16)                     # (Hp, Op) bf16
    bfc_p = jnp.zeros((1, Op), f32).at[0, :O].set(b_fc.astype(f32))

    kernel = functools.partial(_lstm_fc_kernel, hidden_pad=Hp,
                               t_chunk=t_chunk, b_tile=b_tile, unroll=unroll)

    grid = (Bp // b_tile, T // t_chunk)

    est_bytes = fixed_bytes + t_chunk * bytes_per_row
    vmem_limit = int(min(vmem_cap_limit, max(4 * 1024 * 1024, 2 * est_bytes)))

    def build(single_buffer_weights):
        if single_buffer_weights:
            inv = lambda shape: pl.BlockSpec(
                shape, lambda b, t: (0,) * len(shape),
                pipeline_mode=pl.Buffered(1))
        else:
            inv = lambda shape: pl.BlockSpec(
                shape, lambda b, t: (0,) * len(shape))
        return pl.pallas_call(
            kernel,
            out_shape=jax.ShapeDtypeStruct((Bp, Op), f32),
            grid_spec=pltpu.PrefetchScalarGridSpec(
                num_scalar_prefetch=0,
                grid=grid,
                in_specs=[
                    pl.BlockSpec((t_chunk, b_tile, Ip), lambda b, t: (t, b, 0)),
                    inv((Ip, 4 * Hp)),
                    inv((Hp, 4 * Hp)),
                    inv((1, 4 * Hp)),
                    inv((Hp, Op)),
                    inv((1, Op)),
                ],
                out_specs=pl.BlockSpec((b_tile, Op), lambda b, t: (b, 0)),
                scratch_shapes=[
                    pltpu.VMEM((t_chunk, b_tile, 4 * Hp), bf16),  # per-chunk gates
                    pltpu.VMEM((b_tile, Hp), f32),                # h carry
                    pltpu.VMEM((b_tile, Hp), f32),                # c carry
                ]),
            compiler_params=pltpu.CompilerParams(
                dimension_semantics=("parallel", "arbitrary"),
                vmem_limit_bytes=vmem_limit),
        )

    # Prefer single-buffered invariant weights; fall back to default
    # double-buffering if this runtime rejects Buffered(1).
    last_err = None
    for single_buffer in (True, False):
        try:
            out_p = build(single_buffer)(x_p, wih_p, whh_p, b_p, wfc_p, bfc_p)
            break
        except Exception as e:  # pragma: no cover - defensive fallback
            last_err = e
    else:
        raise last_err

    return out_p[:B, :O]


def _reference_forward(x, w_ih, w_hh, b_ih, b_hh, w_fc, b_fc):
    """Pure-JAX f32 reference mirroring torch.nn.LSTM + Linear."""
    B, T, I = x.shape
    H = w_hh.shape[1]
    h = jnp.zeros((B, H), jnp.float32)
    c = jnp.zeros((B, H), jnp.float32)
    for t in range(T):
        gates = x[:, t, :] @ w_ih.T + b_ih + h @ w_hh.T + b_hh
        i_g = jax.nn.sigmoid(gates[:, 0 * H:1 * H])
        f_g = jax.nn.sigmoid(gates[:, 1 * H:2 * H])
        g_g = jnp.tanh(gates[:, 2 * H:3 * H])
        o_g = jax.nn.sigmoid(gates[:, 3 * H:4 * H])
        c = f_g * c + i_g * g_g
        h = o_g * jnp.tanh(c)
    return h @ w_fc.T + b_fc


if __name__ == "__main__":
    # Small shapes consistent with SimpleRNN(input_size, hidden_size, output_size)
    B, T, I, H, O = 2, 8, 16, 32, 8

    key = jax.random.PRNGKey(0)
    ks = jax.random.split(key, 7)
    scale = 1.0 / jnp.sqrt(jnp.float32(H))
    x = jax.random.normal(ks[0], (B, T, I), jnp.float32)
    w_ih = jax.random.uniform(ks[1], (4 * H, I), jnp.float32, -scale, scale)
    w_hh = jax.random.uniform(ks[2], (4 * H, H), jnp.float32, -scale, scale)
    b_ih = jax.random.uniform(ks[3], (4 * H,), jnp.float32, -scale, scale)
    b_hh = jax.random.uniform(ks[4], (4 * H,), jnp.float32, -scale, scale)
    w_fc = jax.random.uniform(ks[5], (O, H), jnp.float32, -scale, scale)
    b_fc = jax.random.uniform(ks[6], (O,), jnp.float32, -scale, scale)

    # t_chunk=4 -> grid=(1, 2): exercises the VMEM-carried h/c across chunks.
    out = simple_rnn_forward(x, w_ih, w_hh, b_ih, b_hh, w_fc, b_fc, t_chunk=4)
    out = jax.block_until_ready(out)

    ref = _reference_forward(x, w_ih, w_hh, b_ih, b_hh, w_fc, b_fc)
    assert out.shape == (B, O)
    # bf16 MXU operands / bf16 gates scratch with f32 accumulation & updates
    # vs. pure-f32 reference.
    assert jnp.allclose(out, ref, atol=2e-2, rtol=2e-2), (out, ref)

    print("KERNEL_OK")
</pallas_src>

<mosaic_0001>
module attributes {stable_mosaic.version = 11 : i64} {
  func.func @_lstm_fc_kernel(%arg0: i32, %arg1: i32, %arg2: memref<4x8x128xbf16, #tpu.memory_space<vmem>>, %arg3: memref<128x512xbf16, #tpu.memory_space<vmem>>, %arg4: memref<128x512xbf16, #tpu.memory_space<vmem>>, %arg5: memref<1x512xf32, #tpu.memory_space<vmem>>, %arg6: memref<128x128xbf16, #tpu.memory_space<vmem>>, %arg7: memref<1x128xf32, #tpu.memory_space<vmem>>, %arg8: memref<8x128xf32, #tpu.memory_space<vmem>>, %arg9: memref<4x8x512xbf16, #tpu.memory_space<vmem>>, %arg10: memref<8x128xf32, #tpu.memory_space<vmem>>, %arg11: memref<8x128xf32, #tpu.memory_space<vmem>>) attributes {dimension_semantics = [#tpu.dimension_semantics<parallel>, #tpu.dimension_semantics<arbitrary>], iteration_bounds = array<i64: 1, 2>, scalar_prefetch = 0 : i64, scratch_operands = 3 : i64, tpu.core_type = #tpu.core_type<tc>, window_params = [{transform_indices = @transform_0, window_bounds = array<i64: 4, 8, 128>}, {pipeline_mode = #tpu.pipeline_mode<synchronous>, transform_indices = @transform_1, window_bounds = array<i64: 128, 512>}, {pipeline_mode = #tpu.pipeline_mode<synchronous>, transform_indices = @transform_2, window_bounds = array<i64: 128, 512>}, {pipeline_mode = #tpu.pipeline_mode<synchronous>, transform_indices = @transform_3, window_bounds = array<i64: 1, 512>}, {pipeline_mode = #tpu.pipeline_mode<synchronous>, transform_indices = @transform_4, window_bounds = array<i64: 128, 128>}, {pipeline_mode = #tpu.pipeline_mode<synchronous>, transform_indices = @transform_5, window_bounds = array<i64: 1, 128>}, {transform_indices = @transform_6, window_bounds = array<i64: 8, 128>}]} {
    %c0_i32 = arith.constant 0 : i32
    %0 = arith.cmpi eq, %arg1, %c0_i32 : i32
    %1 = arith.extui %0 : i1 to i32
    %c0_i32_0 = arith.constant 0 : i32
    %2 = arith.cmpi ne, %1, %c0_i32_0 : i32
    scf.if %2 {
      %cst_77 = arith.constant 0.000000e+00 : f32
      %176 = vector.broadcast %cst_77 : f32 to vector<8x128xf32>
      %c0_78 = arith.constant 0 : index
      %c0_79 = arith.constant 0 : index
      %177 = vector.load %arg10[%c0_78, %c0_79] : memref<8x128xf32, #tpu.memory_space<vmem>>, vector<8x128xf32>
      tpu.vector_store %arg10[%c0_78, %c0_79], %176 {strides = array<i32>} : memref<8x128xf32, #tpu.memory_space<vmem>>, vector<8x128xf32>,
      %cst_80 = arith.constant 0.000000e+00 : f32
      %178 = vector.broadcast %cst_80 : f32 to vector<8x128xf32>
      %c0_81 = arith.constant 0 : index
      %c0_82 = arith.constant 0 : index
      %179 = vector.load %arg11[%c0_81, %c0_82] : memref<8x128xf32, #tpu.memory_space<vmem>>, vector<8x128xf32>
      tpu.vector_store %arg11[%c0_81, %c0_82], %178 {strides = array<i32>} : memref<8x128xf32, #tpu.memory_space<vmem>>, vector<8x128xf32>,
    } else {
    }
    %c0 = arith.constant 0 : index
    %c0_1 = arith.constant 0 : index
    %c0_2 = arith.constant 0 : index
    %3 = vector.load %arg2[%c0, %c0_1, %c0_2] : memref<4x8x128xbf16, #tpu.memory_space<vmem>>, vector<4x8x128xbf16>
    %4 = vector.shape_cast %3 : vector<4x8x128xbf16> to vector<32x128xbf16>
    %c0_3 = arith.constant 0 : index
    %c0_4 = arith.constant 0 : index
    %5 = vector.load %arg3[%c0_3, %c0_4] : memref<128x512xbf16, #tpu.memory_space<vmem>>, vector<128x512xbf16>
    %cst = arith.constant dense<0.000000e+00> : vector<32x512xf32>
    %6 = tpu.matmul %4, %5, %cst {dimension_numbers = #tpu.dot_dimension_numbers<[1], [0], [0], [1], [0, 0, 1, 1], [], []>} : vector<32x128xbf16>, vector<128x512xbf16>, vector<32x512xf32> -> vector<32x512xf32>
    %c0_5 = arith.constant 0 : index
    %c0_6 = arith.constant 0 : index
    %7 = vector.load %arg5[%c0_5, %c0_6] : memref<1x512xf32, #tpu.memory_space<vmem>>, vector<1x512xf32>
    %8 = vector.broadcast %7 : vector<1x512xf32> to vector<32x512xf32>
    %9 = arith.addf %6, %8 : vector<32x512xf32>
    %10 = vector.shape_cast %9 : vector<32x512xf32> to vector<4x8x512xf32>
    %11 = arith.truncf %10 : vector<4x8x512xf32> to vector<4x8x512xbf16>
    %c0_7 = arith.constant 0 : index
    %c0_8 = arith.constant 0 : index
    %c0_9 = arith.constant 0 : index
    %12 = vector.load %arg9[%c0_7, %c0_8, %c0_9] : memref<4x8x512xbf16, #tpu.memory_space<vmem>>, vector<4x8x512xbf16>
    tpu.vector_store %arg9[%c0_7, %c0_8, %c0_9], %11 {strides = array<i32>} : memref<4x8x512xbf16, #tpu.memory_space<vmem>>, vector<4x8x512xbf16>,
    %c0_10 = arith.constant 0 : index
    %c0_11 = arith.constant 0 : index
    %13 = vector.load %arg10[%c0_10, %c0_11] : memref<8x128xf32, #tpu.memory_space<vmem>>, vector<8x128xf32>
    %c0_12 = arith.constant 0 : index
    %c0_13 = arith.constant 0 : index
    %14 = vector.load %arg11[%c0_12, %c0_13] : memref<8x128xf32, #tpu.memory_space<vmem>>, vector<8x128xf32>
    %c0_i32_14 = arith.constant 0 : i32
    %15 = arith.index_cast %c0_i32_14 : i32 to index
    %c0_15 = arith.constant 0 : index
    %c0_16 = arith.constant 0 : index
    %16 = vector.load %arg9[%15, %c0_15, %c0_16] : memref<4x8x512xbf16, #tpu.memory_space<vmem>>, vector<1x8x512xbf16>
    %17 = vector.shape_cast %16 : vector<1x8x512xbf16> to vector<8x512xbf16>
    %18 = arith.extf %17 : vector<8x512xbf16> to vector<8x512xf32>
    %19 = arith.truncf %13 : vector<8x128xf32> to vector<8x128xbf16>
    %c0_17 = arith.constant 0 : index
    %c0_18 = arith.constant 0 : index
    %20 = vector.load %arg4[%c0_17, %c0_18] : memref<128x512xbf16, #tpu.memory_space<vmem>>, vector<128x512xbf16>
    %cst_19 = arith.constant dense<0.000000e+00> : vector<8x512xf32>
    %21 = tpu.matmul %19, %20, %cst_19 {dimension_numbers = #tpu.dot_dimension_numbers<[1], [0], [0], [1], [0, 0, 1, 1], [], []>} : vector<8x128xbf16>, vector<128x512xbf16>, vector<8x512xf32> -> vector<8x512xf32>
    %22 = arith.addf %18, %21 : vector<8x512xf32>
    %23 = vector.extract_strided_slice %22 {offsets = [0, 0], sizes = [8, 128], strides = [1, 1]} : vector<8x512xf32> to vector<8x128xf32>
    %cst_20 = arith.constant 5.000000e-01 : f32
    %24 = vector.broadcast %cst_20 : f32 to vector<8x128xf32>
    %25 = arith.mulf %24, %23 : vector<8x128xf32>
    %26 = math.tanh %25 : vector<8x128xf32>
    %cst_21 = arith.constant 5.000000e-01 : f32
    %27 = vector.broadcast %cst_21 : f32 to vector<8x128xf32>
    %28 = arith.mulf %27, %26 : vector<8x128xf32>
    %cst_22 = arith.constant 5.000000e-01 : f32
    %29 = vector.broadcast %cst_22 : f32 to vector<8x128xf32>
    %30 = arith.addf %28, %29 : vector<8x128xf32>
    %31 = vector.extract_strided_slice %22 {offsets = [0, 128], sizes = [8, 128], strides = [1, 1]} : vector<8x512xf32> to vector<8x128xf32>
    %cst_23 = arith.constant 5.000000e-01 : f32
    %32 = vector.broadcast %cst_23 : f32 to vector<8x128xf32>
    %33 = arith.mulf %32, %31 : vector<8x128xf32>
    %34 = math.tanh %33 : vector<8x128xf32>
    %cst_24 = arith.constant 5.000000e-01 : f32
    %35 = vector.broadcast %cst_24 : f32 to vector<8x128xf32>
    %36 = arith.mulf %35, %34 : vector<8x128xf32>
    %cst_25 = arith.constant 5.000000e-01 : f32
    %37 = vector.broadcast %cst_25 : f32 to vector<8x128xf32>
    %38 = arith.addf %36, %37 : vector<8x128xf32>
    %39 = vector.extract_strided_slice %22 {offsets = [0, 256], sizes = [8, 128], strides = [1, 1]} : vector<8x512xf32> to vector<8x128xf32>
    %40 = math.tanh %39 : vector<8x128xf32>
    %41 = vector.extract_strided_slice %22 {offsets = [0, 384], sizes = [8, 128], strides = [1, 1]} : vector<8x512xf32> to vector<8x128xf32>
    %cst_26 = arith.constant 5.000000e-01 : f32
    %42 = vector.broadcast %cst_26 : f32 to vector<8x128xf32>
    %43 = arith.mulf %42, %41 : vector<8x128xf32>
    %44 = math.tanh %43 : vector<8x128xf32>
    %cst_27 = arith.constant 5.000000e-01 : f32
    %45 = vector.broadcast %cst_27 : f32 to vector<8x128xf32>
    %46 = arith.mulf %45, %44 : vector<8x128xf32>
    %cst_28 = arith.constant 5.000000e-01 : f32
    %47 = vector.broadcast %cst_28 : f32 to vector<8x128xf32>
    %48 = arith.addf %46, %47 : vector<8x128xf32>
    %49 = arith.mulf %38, %14 : vector<8x128xf32>
    %50 = arith.mulf %30, %40 : vector<8x128xf32>
    %51 = arith.addf %49, %50 : vector<8x128xf32>
    %52 = math.tanh %51 : vector<8x128xf32>
    %53 = arith.mulf %48, %52 : vector<8x128xf32>
    %c1_i32 = arith.constant 1 : i32
    %54 = arith.index_cast %c1_i32 : i32 to index
    %c0_29 = arith.constant 0 : index
    %c0_30 = arith.constant 0 : index
    %55 = vector.load %arg9[%54, %c0_29, %c0_30] : memref<4x8x512xbf16, #tpu.memory_space<vmem>>, vector<1x8x512xbf16>
    %56 = vector.shape_cast %55 : vector<1x8x512xbf16> to vector<8x512xbf16>
    %57 = arith.extf %56 : vector<8x512xbf16> to vector<8x512xf32>
    %58 = arith.truncf %53 : vector<8x128xf32> to vector<8x128xbf16>
    %c0_31 = arith.constant 0 : index
    %c0_32 = arith.constant 0 : index
    %59 = vector.load %arg4[%c0_31, %c0_32] : memref<128x512xbf16, #tpu.memory_space<vmem>>, vector<128x512xbf16>
    %cst_33 = arith.constant dense<0.000000e+00> : vector<8x512xf32>
    %60 = tpu.matmul %58, %59, %cst_33 {dimension_numbers = #tpu.dot_dimension_numbers<[1], [0], [0], [1], [0, 0, 1, 1], [], []>} : vector<8x128xbf16>, vector<128x512xbf16>, vector<8x512xf32> -> vector<8x512xf32>
    %61 = arith.addf %57, %60 : vector<8x512xf32>
    %62 = vector.extract_strided_slice %61 {offsets = [0, 0], sizes = [8, 128], strides = [1, 1]} : vector<8x512xf32> to vector<8x128xf32>
    %cst_34 = arith.constant 5.000000e-01 : f32
    %63 = vector.broadcast %cst_34 : f32 to vector<8x128xf32>
    %64 = arith.mulf %63, %62 : vector<8x128xf32>
    %65 = math.tanh %64 : vector<8x128xf32>
    %cst_35 = arith.constant 5.000000e-01 : f32
    %66 = vector.broadcast %cst_35 : f32 to vector<8x128xf32>
    %67 = arith.mulf %66, %65 : vector<8x128xf32>
    %cst_36 = arith.constant 5.000000e-01 : f32
    %68 = vector.broadcast %cst_36 : f32 to vector<8x128xf32>
    %69 = arith.addf %67, %68 : vector<8x128xf32>
    %70 = vector.extract_strided_slice %61 {offsets = [0, 128], sizes = [8, 128], strides = [1, 1]} : vector<8x512xf32> to vector<8x128xf32>
    %cst_37 = arith.constant 5.000000e-01 : f32
    %71 = vector.broadcast %cst_37 : f32 to vector<8x128xf32>
    %72 = arith.mulf %71, %70 : vector<8x128xf32>
    %73 = math.tanh %72 : vector<8x128xf32>
    %cst_38 = arith.constant 5.000000e-01 : f32
    %74 = vector.broadcast %cst_38 : f32 to vector<8x128xf32>
    %75 = arith.mulf %74, %73 : vector<8x128xf32>
    %cst_39 = arith.constant 5.000000e-01 : f32
    %76 = vector.broadcast %cst_39 : f32 to vector<8x128xf32>
    %77 = arith.addf %75, %76 : vector<8x128xf32>
    %78 = vector.extract_strided_slice %61 {offsets = [0, 256], sizes = [8, 128], strides = [1, 1]} : vector<8x512xf32> to vector<8x128xf32>
    %79 = math.tanh %78 : vector<8x128xf32>
    %80 = vector.extract_strided_slice %61 {offsets = [0, 384], sizes = [8, 128], strides = [1, 1]} : vector<8x512xf32> to vector<8x128xf32>
    %cst_40 = arith.constant 5.000000e-01 : f32
    %81 = vector.broadcast %cst_40 : f32 to vector<8x128xf32>
    %82 = arith.mulf %81, %80 : vector<8x128xf32>
    %83 = math.tanh %82 : vector<8x128xf32>
    %cst_41 = arith.constant 5.000000e-01 : f32
    %84 = vector.broadcast %cst_41 : f32 to vector<8x128xf32>
    %85 = arith.mulf %84, %83 : vector<8x128xf32>
    %cst_42 = arith.constant 5.000000e-01 : f32
    %86 = vector.broadcast %cst_42 : f32 to vector<8x128xf32>
    %87 = arith.addf %85, %86 : vector<8x128xf32>
    %88 = arith.mulf %77, %51 : vector<8x128xf32>
    %89 = arith.mulf %69, %79 : vector<8x128xf32>
    %90 = arith.addf %88, %89 : vector<8x128xf32>
    %91 = math.tanh %90 : vector<8x128xf32>
    %92 = arith.mulf %87, %91 : vector<8x128xf32>
    %c2_i32 = arith.constant 2 : i32
    %93 = arith.index_cast %c2_i32 : i32 to index
    %c0_43 = arith.constant 0 : index
    %c0_44 = arith.constant 0 : index
    %94 = vector.load %arg9[%93, %c0_43, %c0_44] : memref<4x8x512xbf16, #tpu.memory_space<vmem>>, vector<1x8x512xbf16>
    %95 = vector.shape_cast %94 : vector<1x8x512xbf16> to vector<8x512xbf16>
    %96 = arith.extf %95 : vector<8x512xbf16> to vector<8x512xf32>
    %97 = arith.truncf %92 : vector<8x128xf32> to vector<8x128xbf16>
    %c0_45 = arith.constant 0 : index
    %c0_46 = arith.constant 0 : index
    %98 = vector.load %arg4[%c0_45, %c0_46] : memref<128x512xbf16, #tpu.memory_space<vmem>>, vector<128x512xbf16>
    %cst_47 = arith.constant dense<0.000000e+00> : vector<8x512xf32>
    %99 = tpu.matmul %97, %98, %cst_47 {dimension_numbers = #tpu.dot_dimension_numbers<[1], [0], [0], [1], [0, 0, 1, 1], [], []>} : vector<8x128xbf16>, vector<128x512xbf16>, vector<8x512xf32> -> vector<8x512xf32>
    %100 = arith.addf %96, %99 : vector<8x512xf32>
    %101 = vector.extract_strided_slice %100 {offsets = [0, 0], sizes = [8, 128], strides = [1, 1]} : vector<8x512xf32> to vector<8x128xf32>
    %cst_48 = arith.constant 5.000000e-01 : f32
    %102 = vector.broadcast %cst_48 : f32 to vector<8x128xf32>
    %103 = arith.mulf %102, %101 : vector<8x128xf32>
    %104 = math.tanh %103 : vector<8x128xf32>
    %cst_49 = arith.constant 5.000000e-01 : f32
    %105 = vector.broadcast %cst_49 : f32 to vector<8x128xf32>
    %106 = arith.mulf %105, %104 : vector<8x128xf32>
    %cst_50 = arith.constant 5.000000e-01 : f32
    %107 = vector.broadcast %cst_50 : f32 to vector<8x128xf32>
    %108 = arith.addf %106, %107 : vector<8x128xf32>
    %109 = vector.extract_strided_slice %100 {offsets = [0, 128], sizes = [8, 128], strides = [1, 1]} : vector<8x512xf32> to vector<8x128xf32>
    %cst_51 = arith.constant 5.000000e-01 : f32
    %110 = vector.broadcast %cst_51 : f32 to vector<8x128xf32>
    %111 = arith.mulf %110, %109 : vector<8x128xf32>
    %112 = math.tanh %111 : vector<8x128xf32>
    %cst_52 = arith.constant 5.000000e-01 : f32
    %113 = vector.broadcast %cst_52 : f32 to vector<8x128xf32>
    %114 = arith.mulf %113, %112 : vector<8x128xf32>
    %cst_53 = arith.constant 5.000000e-01 : f32
    %115 = vector.broadcast %cst_53 : f32 to vector<8x128xf32>
    %116 = arith.addf %114, %115 : vector<8x128xf32>
    %117 = vector.extract_strided_slice %100 {offsets = [0, 256], sizes = [8, 128], strides = [1, 1]} : vector<8x512xf32> to vector<8x128xf32>
    %118 = math.tanh %117 : vector<8x128xf32>
    %119 = vector.extract_strided_slice %100 {offsets = [0, 384], sizes = [8, 128], strides = [1, 1]} : vector<8x512xf32> to vector<8x128xf32>
    %cst_54 = arith.constant 5.000000e-01 : f32
    %120 = vector.broadcast %cst_54 : f32 to vector<8x128xf32>
    %121 = arith.mulf %120, %119 : vector<8x128xf32>
    %122 = math.tanh %121 : vector<8x128xf32>
    %cst_55 = arith.constant 5.000000e-01 : f32
    %123 = vector.broadcast %cst_55 : f32 to vector<8x128xf32>
    %124 = arith.mulf %123, %122 : vector<8x128xf32>
    %cst_56 = arith.constant 5.000000e-01 : f32
    %125 = vector.broadcast %cst_56 : f32 to vector<8x128xf32>
    %126 = arith.addf %124, %125 : vector<8x128xf32>
    %127 = arith.mulf %116, %90 : vector<8x128xf32>
    %128 = arith.mulf %108, %118 : vector<8x128xf32>
    %129 = arith.addf %127, %128 : vector<8x128xf32>
    %130 = math.tanh %129 : vector<8x128xf32>
    %131 = arith.mulf %126, %130 : vector<8x128xf32>
    %c3_i32 = arith.constant 3 : i32
    %132 = arith.index_cast %c3_i32 : i32 to index
    %c0_57 = arith.constant 0 : index
    %c0_58 = arith.constant 0 : index
    %133 = vector.load %arg9[%132, %c0_57, %c0_58] : memref<4x8x512xbf16, #tpu.memory_space<vmem>>, vector<1x8x512xbf16>
    %134 = vector.shape_cast %133 : vector<1x8x512xbf16> to vector<8x512xbf16>
    %135 = arith.extf %134 : vector<8x512xbf16> to vector<8x512xf32>
    %136 = arith.truncf %131 : vector<8x128xf32> to vector<8x128xbf16>
    %c0_59 = arith.constant 0 : index
    %c0_60 = arith.constant 0 : index
    %137 = vector.load %arg4[%c0_59, %c0_60] : memref<128x512xbf16, #tpu.memory_space<vmem>>, vector<128x512xbf16>
    %cst_61 = arith.constant dense<0.000000e+00> : vector<8x512xf32>
    %138 = tpu.matmul %136, %137, %cst_61 {dimension_numbers = #tpu.dot_dimension_numbers<[1], [0], [0], [1], [0, 0, 1, 1], [], []>} : vector<8x128xbf16>, vector<128x512xbf16>, vector<8x512xf32> -> vector<8x512xf32>
    %139 = arith.addf %135, %138 : vector<8x512xf32>
    %140 = vector.extract_strided_slice %139 {offsets = [0, 0], sizes = [8, 128], strides = [1, 1]} : vector<8x512xf32> to vector<8x128xf32>
    %cst_62 = arith.constant 5.000000e-01 : f32
    %141 = vector.broadcast %cst_62 : f32 to vector<8x128xf32>
    %142 = arith.mulf %141, %140 : vector<8x128xf32>
    %143 = math.tanh %142 : vector<8x128xf32>
    %cst_63 = arith.constant 5.000000e-01 : f32
    %144 = vector.broadcast %cst_63 : f32 to vector<8x128xf32>
    %145 = arith.mulf %144, %143 : vector<8x128xf32>
    %cst_64 = arith.constant 5.000000e-01 : f32
    %146 = vector.broadcast %cst_64 : f32 to vector<8x128xf32>
    %147 = arith.addf %145, %146 : vector<8x128xf32>
    %148 = vector.extract_strided_slice %139 {offsets = [0, 128], sizes = [8, 128], strides = [1, 1]} : vector<8x512xf32> to vector<8x128xf32>
    %cst_65 = arith.constant 5.000000e-01 : f32
    %149 = vector.broadcast %cst_65 : f32 to vector<8x128xf32>
    %150 = arith.mulf %149, %148 : vector<8x128xf32>
    %151 = math.tanh %150 : vector<8x128xf32>
    %cst_66 = arith.constant 5.000000e-01 : f32
    %152 = vector.broadcast %cst_66 : f32 to vector<8x128xf32>
    %153 = arith.mulf %152, %151 : vector<8x128xf32>
    %cst_67 = arith.constant 5.000000e-01 : f32
    %154 = vector.broadcast %cst_67 : f32 to vector<8x128xf32>
    %155 = arith.addf %153, %154 : vector<8x128xf32>
    %156 = vector.extract_strided_slice %139 {offsets = [0, 256], sizes = [8, 128], strides = [1, 1]} : vector<8x512xf32> to vector<8x128xf32>
    %157 = math.tanh %156 : vector<8x128xf32>
    %158 = vector.extract_strided_slice %139 {offsets = [0, 384], sizes = [8, 128], strides = [1, 1]} : vector<8x512xf32> to vector<8x128xf32>
    %cst_68 = arith.constant 5.000000e-01 : f32
    %159 = vector.broadcast %cst_68 : f32 to vector<8x128xf32>
    %160 = arith.mulf %159, %158 : vector<8x128xf32>
    %161 = math.tanh %160 : vector<8x128xf32>
    %cst_69 = arith.constant 5.000000e-01 : f32
    %162 = vector.broadcast %cst_69 : f32 to vector<8x128xf32>
    %163 = arith.mulf %162, %161 : vector<8x128xf32>
    %cst_70 = arith.constant 5.000000e-01 : f32
    %164 = vector.broadcast %cst_70 : f32 to vector<8x128xf32>
    %165 = arith.addf %163, %164 : vector<8x128xf32>
    %166 = arith.mulf %155, %129 : vector<8x128xf32>
    %167 = arith.mulf %147, %157 : vector<8x128xf32>
    %168 = arith.addf %166, %167 : vector<8x128xf32>
    %169 = math.tanh %168 : vector<8x128xf32>
    %170 = arith.mulf %165, %169 : vector<8x128xf32>
    %c4_i32 = arith.constant 4 : i32
    %c0_71 = arith.constant 0 : index
    %c0_72 = arith.constant 0 : index
    %171 = vector.load %arg10[%c0_71, %c0_72] : memref<8x128xf32, #tpu.memory_space<vmem>>, vector<8x128xf32>
    tpu.vector_store %arg10[%c0_71, %c0_72], %170 {strides = array<i32>} : memref<8x128xf32, #tpu.memory_space<vmem>>, vector<8x128xf32>,
    %c0_73 = arith.constant 0 : index
    %c0_74 = arith.constant 0 : index
    %172 = vector.load %arg11[%c0_73, %c0_74] : memref<8x128xf32, #tpu.memory_space<vmem>>, vector<8x128xf32>
    tpu.vector_store %arg11[%c0_73, %c0_74], %168 {strides = array<i32>} : memref<8x128xf32, #tpu.memory_space<vmem>>, vector<8x128xf32>,
    %c1_i32_75 = arith.constant 1 : i32
    %173 = arith.cmpi eq, %arg1, %c1_i32_75 : i32
    %174 = arith.extui %173 : i1 to i32
    %c0_i32_76 = arith.constant 0 : i32
    %175 = arith.cmpi ne, %174, %c0_i32_76 : i32
    scf.if %175 {
      %176 = arith.truncf %170 : vector<8x128xf32> to vector<8x128xbf16>
      %c0_77 = arith.constant 0 : index
      %c0_78 = arith.constant 0 : index
      %177 = vector.load %arg6[%c0_77, %c0_78] : memref<128x128xbf16, #tpu.memory_space<vmem>>, vector<128x128xbf16>
      %cst_79 = arith.constant dense<0.000000e+00> : vector<8x128xf32>
      %178 = tpu.matmul %176, %177, %cst_79 {dimension_numbers = #tpu.dot_dimension_numbers<[1], [0], [0], [1], [0, 0, 1, 1], [], []>} : vector<8x128xbf16>, vector<128x128xbf16>, vector<8x128xf32> -> vector<8x128xf32>
      %c0_80 = arith.constant 0 : index
      %c0_81 = arith.constant 0 : index
      %179 = vector.load %arg7[%c0_80, %c0_81] : memref<1x128xf32, #tpu.memory_space<vmem>>, vector<1x128xf32>
      %180 = vector.broadcast %179 : vector<1x128xf32> to vector<8x128xf32>
      %181 = arith.addf %178, %180 : vector<8x128xf32>
      %c0_82 = arith.constant 0 : index
      %c0_83 = arith.constant 0 : index
      %182 = vector.load %arg8[%c0_82, %c0_83] : memref<8x128xf32, #tpu.memory_space<vmem>>, vector<8x128xf32>
      tpu.vector_store %arg8[%c0_82, %c0_83], %181 {strides = array<i32>} : memref<8x128xf32, #tpu.memory_space<vmem>>, vector<8x128xf32>,
    } else {
    }
    return
  }
  func.func @transform_0(%arg0: i32, %arg1: i32) -> (i32, i32, i32) {
    %c0_i32 = arith.constant 0 : i32
    %c0_i32_0 = arith.constant 0 : i32
    return %arg1, %arg0, %c0_i32 : i32, i32, i32
  }
  func.func @transform_1(%arg0: i32, %arg1: i32) -> (i32, i32) {
    %c0_i32 = arith.constant 0 : i32
    %c0_i32_0 = arith.constant 0 : i32
    %c0_i32_1 = arith.constant 0 : i32
    return %c0_i32, %c0_i32_0 : i32, i32
  }
  func.func @transform_2(%arg0: i32, %arg1: i32) -> (i32, i32) {
    %c0_i32 = arith.constant 0 : i32
    %c0_i32_0 = arith.constant 0 : i32
    %c0_i32_1 = arith.constant 0 : i32
    return %c0_i32, %c0_i32_0 : i32, i32
  }
  func.func @transform_3(%arg0: i32, %arg1: i32) -> (i32, i32) {
    %c0_i32 = arith.constant 0 : i32
    %c0_i32_0 = arith.constant 0 : i32
    %c0_i32_1 = arith.constant 0 : i32
    return %c0_i32, %c0_i32_0 : i32, i32
  }
  func.func @transform_4(%arg0: i32, %arg1: i32) -> (i32, i32) {
    %c0_i32 = arith.constant 0 : i32
    %c0_i32_0 = arith.constant 0 : i32
    %c0_i32_1 = arith.constant 0 : i32
    return %c0_i32, %c0_i32_0 : i32, i32
  }
  func.func @transform_5(%arg0: i32, %arg1: i32) -> (i32, i32) {
    %c0_i32 = arith.constant 0 : i32
    %c0_i32_0 = arith.constant 0 : i32
    %c0_i32_1 = arith.constant 0 : i32
    return %c0_i32, %c0_i32_0 : i32, i32
  }
  func.func @transform_6(%arg0: i32, %arg1: i32) -> (i32, i32) {
    %c0_i32 = arith.constant 0 : i32
    %c0_i32_0 = arith.constant 0 : i32
    return %arg0, %c0_i32 : i32, i32
  }
}

module attributes {stable_mosaic.version = 11 : i64} {
  func.func @_lstm_fc_kernel(%arg0: i32, %arg1: i32, %arg2: memref<4x8x128xbf16, #tpu.memory_space<vmem>>, %arg3: memref<128x512xbf16, #tpu.memory_space<vmem>>, %arg4: memref<128x512xbf16, #tpu.memory_space<vmem>>, %arg5: memref<1x512xf32, #tpu.memory_space<vmem>>, %arg6: memref<128x128xbf16, #tpu.memory_space<vmem>>, %arg7: memref<1x128xf32, #tpu.memory_space<vmem>>, %arg8: memref<8x128xf32, #tpu.memory_space<vmem>>, %arg9: memref<4x8x512xbf16, #tpu.memory_space<vmem>>, %arg10: memref<8x128xf32, #tpu.memory_space<vmem>>, %arg11: memref<8x128xf32, #tpu.memory_space<vmem>>) attributes {dimension_semantics = [#tpu.dimension_semantics<parallel>, #tpu.dimension_semantics<arbitrary>], iteration_bounds = array<i64: 1, 2>, scalar_prefetch = 0 : i64, scratch_operands = 3 : i64, tpu.core_type = #tpu.core_type<tc>, window_params = [{transform_indices = @transform_0, window_bounds = array<i64: 4, 8, 128>}, {pipeline_mode = #tpu.pipeline_mode<synchronous>, transform_indices = @transform_1, window_bounds = array<i64: 128, 512>}, {pipeline_mode = #tpu.pipeline_mode<synchronous>, transform_indices = @transform_2, window_bounds = array<i64: 128, 512>}, {pipeline_mode = #tpu.pipeline_mode<synchronous>, transform_indices = @transform_3, window_bounds = array<i64: 1, 512>}, {pipeline_mode = #tpu.pipeline_mode<synchronous>, transform_indices = @transform_4, window_bounds = array<i64: 128, 128>}, {pipeline_mode = #tpu.pipeline_mode<synchronous>, transform_indices = @transform_5, window_bounds = array<i64: 1, 128>}, {transform_indices = @transform_6, window_bounds = array<i64: 8, 128>}]} {
    %c0_i32 = arith.constant 0 : i32
    %0 = arith.cmpi eq, %arg1, %c0_i32 : i32
    %1 = arith.extui %0 : i1 to i32
    %c0_i32_0 = arith.constant 0 : i32
    %2 = arith.cmpi ne, %1, %c0_i32_0 : i32
    scf.if %2 {
      %cst_77 = arith.constant 0.000000e+00 : f32
      %176 = vector.broadcast %cst_77 : f32 to vector<8x128xf32>
      %c0_78 = arith.constant 0 : index
      %c0_79 = arith.constant 0 : index
      %177 = vector.load %arg10[%c0_78, %c0_79] : memref<8x128xf32, #tpu.memory_space<vmem>>, vector<8x128xf32>
      tpu.vector_store %arg10[%c0_78, %c0_79], %176 {strides = array<i32>} : memref<8x128xf32, #tpu.memory_space<vmem>>, vector<8x128xf32>,
      %cst_80 = arith.constant 0.000000e+00 : f32
      %178 = vector.broadcast %cst_80 : f32 to vector<8x128xf32>
      %c0_81 = arith.constant 0 : index
      %c0_82 = arith.constant 0 : index
      %179 = vector.load %arg11[%c0_81, %c0_82] : memref<8x128xf32, #tpu.memory_space<vmem>>, vector<8x128xf32>
      tpu.vector_store %arg11[%c0_81, %c0_82], %178 {strides = array<i32>} : memref<8x128xf32, #tpu.memory_space<vmem>>, vector<8x128xf32>,
    } else {
    }
    %c0 = arith.constant 0 : index
    %c0_1 = arith.constant 0 : index
    %c0_2 = arith.constant 0 : index
    %3 = vector.load %arg2[%c0, %c0_1, %c0_2] : memref<4x8x128xbf16, #tpu.memory_space<vmem>>, vector<4x8x128xbf16>
    %4 = vector.shape_cast %3 : vector<4x8x128xbf16> to vector<32x128xbf16>
    %c0_3 = arith.constant 0 : index
    %c0_4 = arith.constant 0 : index
    %5 = vector.load %arg3[%c0_3, %c0_4] : memref<128x512xbf16, #tpu.memory_space<vmem>>, vector<128x512xbf16>
    %cst = arith.constant dense<0.000000e+00> : vector<32x512xf32>
    %6 = tpu.matmul %4, %5, %cst {dimension_numbers = #tpu.dot_dimension_numbers<[1], [0], [0], [1], [0, 0, 1, 1], [], []>} : vector<32x128xbf16>, vector<128x512xbf16>, vector<32x512xf32> -> vector<32x512xf32>
    %c0_5 = arith.constant 0 : index
    %c0_6 = arith.constant 0 : index
    %7 = vector.load %arg5[%c0_5, %c0_6] : memref<1x512xf32, #tpu.memory_space<vmem>>, vector<1x512xf32>
    %8 = vector.broadcast %7 : vector<1x512xf32> to vector<32x512xf32>
    %9 = arith.addf %6, %8 : vector<32x512xf32>
    %10 = vector.shape_cast %9 : vector<32x512xf32> to vector<4x8x512xf32>
    %11 = arith.truncf %10 : vector<4x8x512xf32> to vector<4x8x512xbf16>
    %c0_7 = arith.constant 0 : index
    %c0_8 = arith.constant 0 : index
    %c0_9 = arith.constant 0 : index
    %12 = vector.load %arg9[%c0_7, %c0_8, %c0_9] : memref<4x8x512xbf16, #tpu.memory_space<vmem>>, vector<4x8x512xbf16>
    tpu.vector_store %arg9[%c0_7, %c0_8, %c0_9], %11 {strides = array<i32>} : memref<4x8x512xbf16, #tpu.memory_space<vmem>>, vector<4x8x512xbf16>,
    %c0_10 = arith.constant 0 : index
    %c0_11 = arith.constant 0 : index
    %13 = vector.load %arg10[%c0_10, %c0_11] : memref<8x128xf32, #tpu.memory_space<vmem>>, vector<8x128xf32>
    %c0_12 = arith.constant 0 : index
    %c0_13 = arith.constant 0 : index
    %14 = vector.load %arg11[%c0_12, %c0_13] : memref<8x128xf32, #tpu.memory_space<vmem>>, vector<8x128xf32>
    %c0_i32_14 = arith.constant 0 : i32
    %15 = arith.index_cast %c0_i32_14 : i32 to index
    %c0_15 = arith.constant 0 : index
    %c0_16 = arith.constant 0 : index
    %16 = vector.load %arg9[%15, %c0_15, %c0_16] : memref<4x8x512xbf16, #tpu.memory_space<vmem>>, vector<1x8x512xbf16>
    %17 = vector.shape_cast %16 : vector<1x8x512xbf16> to vector<8x512xbf16>
    %18 = arith.extf %17 : vector<8x512xbf16> to vector<8x512xf32>
    %19 = arith.truncf %13 : vector<8x128xf32> to vector<8x128xbf16>
    %c0_17 = arith.constant 0 : index
    %c0_18 = arith.constant 0 : index
    %20 = vector.load %arg4[%c0_17, %c0_18] : memref<128x512xbf16, #tpu.memory_space<vmem>>, vector<128x512xbf16>
    %cst_19 = arith.constant dense<0.000000e+00> : vector<8x512xf32>
    %21 = tpu.matmul %19, %20, %cst_19 {dimension_numbers = #tpu.dot_dimension_numbers<[1], [0], [0], [1], [0, 0, 1, 1], [], []>} : vector<8x128xbf16>, vector<128x512xbf16>, vector<8x512xf32> -> vector<8x512xf32>
    %22 = arith.addf %18, %21 : vector<8x512xf32>
    %23 = vector.extract_strided_slice %22 {offsets = [0, 0], sizes = [8, 128], strides = [1, 1]} : vector<8x512xf32> to vector<8x128xf32>
    %cst_20 = arith.constant 5.000000e-01 : f32
    %24 = vector.broadcast %cst_20 : f32 to vector<8x128xf32>
    %25 = arith.mulf %24, %23 : vector<8x128xf32>
    %26 = math.tanh %25 : vector<8x128xf32>
    %cst_21 = arith.constant 5.000000e-01 : f32
    %27 = vector.broadcast %cst_21 : f32 to vector<8x128xf32>
    %28 = arith.mulf %27, %26 : vector<8x128xf32>
    %cst_22 = arith.constant 5.000000e-01 : f32
    %29 = vector.broadcast %cst_22 : f32 to vector<8x128xf32>
    %30 = arith.addf %28, %29 : vector<8x128xf32>
    %31 = vector.extract_strided_slice %22 {offsets = [0, 128], sizes = [8, 128], strides = [1, 1]} : vector<8x512xf32> to vector<8x128xf32>
    %cst_23 = arith.constant 5.000000e-01 : f32
    %32 = vector.broadcast %cst_23 : f32 to vector<8x128xf32>
    %33 = arith.mulf %32, %31 : vector<8x128xf32>
    %34 = math.tanh %33 : vector<8x128xf32>
    %cst_24 = arith.constant 5.000000e-01 : f32
    %35 = vector.broadcast %cst_24 : f32 to vector<8x128xf32>
    %36 = arith.mulf %35, %34 : vector<8x128xf32>
    %cst_25 = arith.constant 5.000000e-01 : f32
    %37 = vector.broadcast %cst_25 : f32 to vector<8x128xf32>
    %38 = arith.addf %36, %37 : vector<8x128xf32>
    %39 = vector.extract_strided_slice %22 {offsets = [0, 256], sizes = [8, 128], strides = [1, 1]} : vector<8x512xf32> to vector<8x128xf32>
    %40 = math.tanh %39 : vector<8x128xf32>
    %41 = vector.extract_strided_slice %22 {offsets = [0, 384], sizes = [8, 128], strides = [1, 1]} : vector<8x512xf32> to vector<8x128xf32>
    %cst_26 = arith.constant 5.000000e-01 : f32
    %42 = vector.broadcast %cst_26 : f32 to vector<8x128xf32>
    %43 = arith.mulf %42, %41 : vector<8x128xf32>
    %44 = math.tanh %43 : vector<8x128xf32>
    %cst_27 = arith.constant 5.000000e-01 : f32
    %45 = vector.broadcast %cst_27 : f32 to vector<8x128xf32>
    %46 = arith.mulf %45, %44 : vector<8x128xf32>
    %cst_28 = arith.constant 5.000000e-01 : f32
    %47 = vector.broadcast %cst_28 : f32 to vector<8x128xf32>
    %48 = arith.addf %46, %47 : vector<8x128xf32>
    %49 = arith.mulf %38, %14 : vector<8x128xf32>
    %50 = arith.mulf %30, %40 : vector<8x128xf32>
    %51 = arith.addf %49, %50 : vector<8x128xf32>
    %52 = math.tanh %51 : vector<8x128xf32>
    %53 = arith.mulf %48, %52 : vector<8x128xf32>
    %c1_i32 = arith.constant 1 : i32
    %54 = arith.index_cast %c1_i32 : i32 to index
    %c0_29 = arith.constant 0 : index
    %c0_30 = arith.constant 0 : index
    %55 = vector.load %arg9[%54, %c0_29, %c0_30] : memref<4x8x512xbf16, #tpu.memory_space<vmem>>, vector<1x8x512xbf16>
    %56 = vector.shape_cast %55 : vector<1x8x512xbf16> to vector<8x512xbf16>
    %57 = arith.extf %56 : vector<8x512xbf16> to vector<8x512xf32>
    %58 = arith.truncf %53 : vector<8x128xf32> to vector<8x128xbf16>
    %c0_31 = arith.constant 0 : index
    %c0_32 = arith.constant 0 : index
    %59 = vector.load %arg4[%c0_31, %c0_32] : memref<128x512xbf16, #tpu.memory_space<vmem>>, vector<128x512xbf16>
    %cst_33 = arith.constant dense<0.000000e+00> : vector<8x512xf32>
    %60 = tpu.matmul %58, %59, %cst_33 {dimension_numbers = #tpu.dot_dimension_numbers<[1], [0], [0], [1], [0, 0, 1, 1], [], []>} : vector<8x128xbf16>, vector<128x512xbf16>, vector<8x512xf32> -> vector<8x512xf32>
    %61 = arith.addf %57, %60 : vector<8x512xf32>
    %62 = vector.extract_strided_slice %61 {offsets = [0, 0], sizes = [8, 128], strides = [1, 1]} : vector<8x512xf32> to vector<8x128xf32>
    %cst_34 = arith.constant 5.000000e-01 : f32
    %63 = vector.broadcast %cst_34 : f32 to vector<8x128xf32>
    %64 = arith.mulf %63, %62 : vector<8x128xf32>
    %65 = math.tanh %64 : vector<8x128xf32>
    %cst_35 = arith.constant 5.000000e-01 : f32
    %66 = vector.broadcast %cst_35 : f32 to vector<8x128xf32>
    %67 = arith.mulf %66, %65 : vector<8x128xf32>
    %cst_36 = arith.constant 5.000000e-01 : f32
    %68 = vector.broadcast %cst_36 : f32 to vector<8x128xf32>
    %69 = arith.addf %67, %68 : vector<8x128xf32>
    %70 = vector.extract_strided_slice %61 {offsets = [0, 128], sizes = [8, 128], strides = [1, 1]} : vector<8x512xf32> to vector<8x128xf32>
    %cst_37 = arith.constant 5.000000e-01 : f32
    %71 = vector.broadcast %cst_37 : f32 to vector<8x128xf32>
    %72 = arith.mulf %71, %70 : vector<8x128xf32>
    %73 = math.tanh %72 : vector<8x128xf32>
    %cst_38 = arith.constant 5.000000e-01 : f32
    %74 = vector.broadcast %cst_38 : f32 to vector<8x128xf32>
    %75 = arith.mulf %74, %73 : vector<8x128xf32>
    %cst_39 = arith.constant 5.000000e-01 : f32
    %76 = vector.broadcast %cst_39 : f32 to vector<8x128xf32>
    %77 = arith.addf %75, %76 : vector<8x128xf32>
    %78 = vector.extract_strided_slice %61 {offsets = [0, 256], sizes = [8, 128], strides = [1, 1]} : vector<8x512xf32> to vector<8x128xf32>
    %79 = math.tanh %78 : vector<8x128xf32>
    %80 = vector.extract_strided_slice %61 {offsets = [0, 384], sizes = [8, 128], strides = [1, 1]} : vector<8x512xf32> to vector<8x128xf32>
    %cst_40 = arith.constant 5.000000e-01 : f32
    %81 = vector.broadcast %cst_40 : f32 to vector<8x128xf32>
    %82 = arith.mulf %81, %80 : vector<8x128xf32>
    %83 = math.tanh %82 : vector<8x128xf32>
    %cst_41 = arith.constant 5.000000e-01 : f32
    %84 = vector.broadcast %cst_41 : f32 to vector<8x128xf32>
    %85 = arith.mulf %84, %83 : vector<8x128xf32>
    %cst_42 = arith.constant 5.000000e-01 : f32
    %86 = vector.broadcast %cst_42 : f32 to vector<8x128xf32>
    %87 = arith.addf %85, %86 : vector<8x128xf32>
    %88 = arith.mulf %77, %51 : vector<8x128xf32>
    %89 = arith.mulf %69, %79 : vector<8x128xf32>
    %90 = arith.addf %88, %89 : vector<8x128xf32>
    %91 = math.tanh %90 : vector<8x128xf32>
    %92 = arith.mulf %87, %91 : vector<8x128xf32>
    %c2_i32 = arith.constant 2 : i32
    %93 = arith.index_cast %c2_i32 : i32 to index
    %c0_43 = arith.constant 0 : index
    %c0_44 = arith.constant 0 : index
    %94 = vector.load %arg9[%93, %c0_43, %c0_44] : memref<4x8x512xbf16, #tpu.memory_space<vmem>>, vector<1x8x512xbf16>
    %95 = vector.shape_cast %94 : vector<1x8x512xbf16> to vector<8x512xbf16>
    %96 = arith.extf %95 : vector<8x512xbf16> to vector<8x512xf32>
    %97 = arith.truncf %92 : vector<8x128xf32> to vector<8x128xbf16>
    %c0_45 = arith.constant 0 : index
    %c0_46 = arith.constant 0 : index
    %98 = vector.load %arg4[%c0_45, %c0_46] : memref<128x512xbf16, #tpu.memory_space<vmem>>, vector<128x512xbf16>
    %cst_47 = arith.constant dense<0.000000e+00> : vector<8x512xf32>
    %99 = tpu.matmul %97, %98, %cst_47 {dimension_numbers = #tpu.dot_dimension_numbers<[1], [0], [0], [1], [0, 0, 1, 1], [], []>} : vector<8x128xbf16>, vector<128x512xbf16>, vector<8x512xf32> -> vector<8x512xf32>
    %100 = arith.addf %96, %99 : vector<8x512xf32>
    %101 = vector.extract_strided_slice %100 {offsets = [0, 0], sizes = [8, 128], strides = [1, 1]} : vector<8x512xf32> to vector<8x128xf32>
    %cst_48 = arith.constant 5.000000e-01 : f32
    %102 = vector.broadcast %cst_48 : f32 to vector<8x128xf32>
    %103 = arith.mulf %102, %101 : vector<8x128xf32>
    %104 = math.tanh %103 : vector<8x128xf32>
    %cst_49 = arith.constant 5.000000e-01 : f32
    %105 = vector.broadcast %cst_49 : f32 to vector<8x128xf32>
    %106 = arith.mulf %105, %104 : vector<8x128xf32>
    %cst_50 = arith.constant 5.000000e-01 : f32
    %107 = vector.broadcast %cst_50 : f32 to vector<8x128xf32>
    %108 = arith.addf %106, %107 : vector<8x128xf32>
    %109 = vector.extract_strided_slice %100 {offsets = [0, 128], sizes = [8, 128], strides = [1, 1]} : vector<8x512xf32> to vector<8x128xf32>
    %cst_51 = arith.constant 5.000000e-01 : f32
    %110 = vector.broadcast %cst_51 : f32 to vector<8x128xf32>
    %111 = arith.mulf %110, %109 : vector<8x128xf32>
    %112 = math.tanh %111 : vector<8x128xf32>
    %cst_52 = arith.constant 5.000000e-01 : f32
    %113 = vector.broadcast %cst_52 : f32 to vector<8x128xf32>
    %114 = arith.mulf %113, %112 : vector<8x128xf32>
    %cst_53 = arith.constant 5.000000e-01 : f32
    %115 = vector.broadcast %cst_53 : f32 to vector<8x128xf32>
    %116 = arith.addf %114, %115 : vector<8x128xf32>
    %117 = vector.extract_strided_slice %100 {offsets = [0, 256], sizes = [8, 128], strides = [1, 1]} : vector<8x512xf32> to vector<8x128xf32>
    %118 = math.tanh %117 : vector<8x128xf32>
    %119 = vector.extract_strided_slice %100 {offsets = [0, 384], sizes = [8, 128], strides = [1, 1]} : vector<8x512xf32> to vector<8x128xf32>
    %cst_54 = arith.constant 5.000000e-01 : f32
    %120 = vector.broadcast %cst_54 : f32 to vector<8x128xf32>
    %121 = arith.mulf %120, %119 : vector<8x128xf32>
    %122 = math.tanh %121 : vector<8x128xf32>
    %cst_55 = arith.constant 5.000000e-01 : f32
    %123 = vector.broadcast %cst_55 : f32 to vector<8x128xf32>
    %124 = arith.mulf %123, %122 : vector<8x128xf32>
    %cst_56 = arith.constant 5.000000e-01 : f32
    %125 = vector.broadcast %cst_56 : f32 to vector<8x128xf32>
    %126 = arith.addf %124, %125 : vector<8x128xf32>
    %127 = arith.mulf %116, %90 : vector<8x128xf32>
    %128 = arith.mulf %108, %118 : vector<8x128xf32>
    %129 = arith.addf %127, %128 : vector<8x128xf32>
    %130 = math.tanh %129 : vector<8x128xf32>
    %131 = arith.mulf %126, %130 : vector<8x128xf32>
    %c3_i32 = arith.constant 3 : i32
    %132 = arith.index_cast %c3_i32 : i32 to index
    %c0_57 = arith.constant 0 : index
    %c0_58 = arith.constant 0 : index
    %133 = vector.load %arg9[%132, %c0_57, %c0_58] : memref<4x8x512xbf16, #tpu.memory_space<vmem>>, vector<1x8x512xbf16>
    %134 = vector.shape_cast %133 : vector<1x8x512xbf16> to vector<8x512xbf16>
    %135 = arith.extf %134 : vector<8x512xbf16> to vector<8x512xf32>
    %136 = arith.truncf %131 : vector<8x128xf32> to vector<8x128xbf16>
    %c0_59 = arith.constant 0 : index
    %c0_60 = arith.constant 0 : index
    %137 = vector.load %arg4[%c0_59, %c0_60] : memref<128x512xbf16, #tpu.memory_space<vmem>>, vector<128x512xbf16>
    %cst_61 = arith.constant dense<0.000000e+00> : vector<8x512xf32>
    %138 = tpu.matmul %136, %137, %cst_61 {dimension_numbers = #tpu.dot_dimension_numbers<[1], [0], [0], [1], [0, 0, 1, 1], [], []>} : vector<8x128xbf16>, vector<128x512xbf16>, vector<8x512xf32> -> vector<8x512xf32>
    %139 = arith.addf %135, %138 : vector<8x512xf32>
    %140 = vector.extract_strided_slice %139 {offsets = [0, 0], sizes = [8, 128], strides = [1, 1]} : vector<8x512xf32> to vector<8x128xf32>
    %cst_62 = arith.constant 5.000000e-01 : f32
    %141 = vector.broadcast %cst_62 : f32 to vector<8x128xf32>
    %142 = arith.mulf %141, %140 : vector<8x128xf32>
    %143 = math.tanh %142 : vector<8x128xf32>
    %cst_63 = arith.constant 5.000000e-01 : f32
    %144 = vector.broadcast %cst_63 : f32 to vector<8x128xf32>
    %145 = arith.mulf %144, %143 : vector<8x128xf32>
    %cst_64 = arith.constant 5.000000e-01 : f32
    %146 = vector.broadcast %cst_64 : f32 to vector<8x128xf32>
    %147 = arith.addf %145, %146 : vector<8x128xf32>
    %148 = vector.extract_strided_slice %139 {offsets = [0, 128], sizes = [8, 128], strides = [1, 1]} : vector<8x512xf32> to vector<8x128xf32>
    %cst_65 = arith.constant 5.000000e-01 : f32
    %149 = vector.broadcast %cst_65 : f32 to vector<8x128xf32>
    %150 = arith.mulf %149, %148 : vector<8x128xf32>
    %151 = math.tanh %150 : vector<8x128xf32>
    %cst_66 = arith.constant 5.000000e-01 : f32
    %152 = vector.broadcast %cst_66 : f32 to vector<8x128xf32>
    %153 = arith.mulf %152, %151 : vector<8x128xf32>
    %cst_67 = arith.constant 5.000000e-01 : f32
    %154 = vector.broadcast %cst_67 : f32 to vector<8x128xf32>
    %155 = arith.addf %153, %154 : vector<8x128xf32>
    %156 = vector.extract_strided_slice %139 {offsets = [0, 256], sizes = [8, 128], strides = [1, 1]} : vector<8x512xf32> to vector<8x128xf32>
    %157 = math.tanh %156 : vector<8x128xf32>
    %158 = vector.extract_strided_slice %139 {offsets = [0, 384], sizes = [8, 128], strides = [1, 1]} : vector<8x512xf32> to vector<8x128xf32>
    %cst_68 = arith.constant 5.000000e-01 : f32
    %159 = vector.broadcast %cst_68 : f32 to vector<8x128xf32>
    %160 = arith.mulf %159, %158 : vector<8x128xf32>
    %161 = math.tanh %160 : vector<8x128xf32>
    %cst_69 = arith.constant 5.000000e-01 : f32
    %162 = vector.broadcast %cst_69 : f32 to vector<8x128xf32>
    %163 = arith.mulf %162, %161 : vector<8x128xf32>
    %cst_70 = arith.constant 5.000000e-01 : f32
    %164 = vector.broadcast %cst_70 : f32 to vector<8x128xf32>
    %165 = arith.addf %163, %164 : vector<8x128xf32>
    %166 = arith.mulf %155, %129 : vector<8x128xf32>
    %167 = arith.mulf %147, %157 : vector<8x128xf32>
    %168 = arith.addf %166, %167 : vector<8x128xf32>
    %169 = math.tanh %168 : vector<8x128xf32>
    %170 = arith.mulf %165, %169 : vector<8x128xf32>
    %c4_i32 = arith.constant 4 : i32
    %c0_71 = arith.constant 0 : index
    %c0_72 = arith.constant 0 : index
    %171 = vector.load %arg10[%c0_71, %c0_72] : memref<8x128xf32, #tpu.memory_space<vmem>>, vector<8x128xf32>
    tpu.vector_store %arg10[%c0_71, %c0_72], %170 {strides = array<i32>} : memref<8x128xf32, #tpu.memory_space<vmem>>, vector<8x128xf32>,
    %c0_73 = arith.constant 0 : index
    %c0_74 = arith.constant 0 : index
    %172 = vector.load %arg11[%c0_73, %c0_74] : memref<8x128xf32, #tpu.memory_space<vmem>>, vector<8x128xf32>
    tpu.vector_store %arg11[%c0_73, %c0_74], %168 {strides = array<i32>} : memref<8x128xf32, #tpu.memory_space<vmem>>, vector<8x128xf32>,
    %c1_i32_75 = arith.constant 1 : i32
    %173 = arith.cmpi eq, %arg1, %c1_i32_75 : i32
    %174 = arith.extui %173 : i1 to i32
    %c0_i32_76 = arith.constant 0 : i32
    %175 = arith.cmpi ne, %174, %c0_i32_76 : i32
    scf.if %175 {
      %176 = arith.truncf %170 : vector<8x128xf32> to vector<8x128xbf16>
      %c0_77 = arith.constant 0 : index
      %c0_78 = arith.constant 0 : index
      %177 = vector.load %arg6[%c0_77, %c0_78] : memref<128x128xbf16, #tpu.memory_space<vmem>>, vector<128x128xbf16>
      %cst_79 = arith.constant dense<0.000000e+00> : vector<8x128xf32>
      %178 = tpu.matmul %176, %177, %cst_79 {dimension_numbers = #tpu.dot_dimension_numbers<[1], [0], [0], [1], [0, 0, 1, 1], [], []>} : vector<8x128xbf16>, vector<128x128xbf16>, vector<8x128xf32> -> vector<8x128xf32>
      %c0_80 = arith.constant 0 : index
      %c0_81 = arith.constant 0 : index
      %179 = vector.load %arg7[%c0_80, %c0_81] : memref<1x128xf32, #tpu.memory_space<vmem>>, vector<1x128xf32>
      %180 = vector.broadcast %179 : vector<1x128xf32> to vector<8x128xf32>
      %181 = arith.addf %178, %180 : vector<8x128xf32>
      %c0_82 = arith.constant 0 : index
      %c0_83 = arith.constant 0 : index
      %182 = vector.load %arg8[%c0_82, %c0_83] : memref<8x128xf32, #tpu.memory_space<vmem>>, vector<8x128xf32>
      tpu.vector_store %arg8[%c0_82, %c0_83], %181 {strides = array<i32>} : memref<8x128xf32, #tpu.memory_space<vmem>>, vector<8x128xf32>,
    } else {
    }
    return
  }
  func.func @transform_0(%arg0: i32, %arg1: i32) -> (i32, i32, i32) {
    %c0_i32 = arith.constant 0 : i32
    %c0_i32_0 = arith.constant 0 : i32
    return %arg1, %arg0, %c0_i32 : i32, i32, i32
  }
  func.func @transform_1(%arg0: i32, %arg1: i32) -> (i32, i32) {
    %c0_i32 = arith.constant 0 : i32
    %c0_i32_0 = arith.constant 0 : i32
    %c0_i32_1 = arith.constant 0 : i32
    return %c0_i32, %c0_i32_0 : i32, i32
  }
  func.func @transform_2(%arg0: i32, %arg1: i32) -> (i32, i32) {
    %c0_i32 = arith.constant 0 : i32
    %c0_i32_0 = arith.constant 0 : i32
    %c0_i32_1 = arith.constant 0 : i32
    return %c0_i32, %c0_i32_0 : i32, i32
  }
  func.func @transform_3(%arg0: i32, %arg1: i32) -> (i32, i32) {
    %c0_i32 = arith.constant 0 : i32
    %c0_i32_0 = arith.constant 0 : i32
    %c0_i32_1 = arith.constant 0 : i32
    return %c0_i32, %c0_i32_0 : i32, i32
  }
  func.func @transform_4(%arg0: i32, %arg1: i32) -> (i32, i32) {
    %c0_i32 = arith.constant 0 : i32
    %c0_i32_0 = arith.constant 0 : i32
    %c0_i32_1 = arith.constant 0 : i32
    return %c0_i32, %c0_i32_0 : i32, i32
  }
  func.func @transform_5(%arg0: i32, %arg1: i32) -> (i32, i32) {
    %c0_i32 = arith.constant 0 : i32
    %c0_i32_0 = arith.constant 0 : i32
    %c0_i32_1 = arith.constant 0 : i32
    return %c0_i32, %c0_i32_0 : i32, i32
  }
  func.func @transform_6(%arg0: i32, %arg1: i32) -> (i32, i32) {
    %c0_i32 = arith.constant 0 : i32
    %c0_i32_0 = arith.constant 0 : i32
    return %arg0, %c0_i32 : i32, i32
  }
}

</mosaic_0001>

<llo_original>
// kernel: tpu_custom_call.1
$region0: #{tpu_custom_call.1}
  #allocation0 [shape = 'u32[]', space=smem, size = 0x4, offset = 0x4, fixed_abs, tag = 'smem constant byte address 0x4 - core index']
  #allocation1 [shape = 'u32[144,128]{1,0:T(1,128)}', space=vmem, size = 0x12000, scoped, tag = 'internal scratch']
  #allocation2 [shape = 'bf16[4,8,512]{2,1,0:T(8,128)(2,1)}', space=vmem, size = 0x8000, scoped, tag = 'scratch operand']
  #allocation3 [shape = 'f32[8,128]{1,0:T(8,128)}', space=vmem, size = 0x1000, scoped, tag = 'scratch operand']
  #allocation4 [shape = 'f32[8,128]{1,0:T(8,128)}', space=vmem, size = 0x1000, scoped, tag = 'scratch operand']
  %s0 = inlined_call_operand.hbm [shape: bf16[8,8,128], index: 0, kind: input, shape index: {}]
  %s1 = inlined_call_operand.hbm [shape: bf16[128,512], index: 1, kind: input, shape index: {}]
  %s2 = inlined_call_operand.hbm [shape: bf16[128,512], index: 2, kind: input, shape index: {}]
  %s3 = inlined_call_operand.vmem [shape: f32[1,512], index: 3, kind: input, shape index: {}]
  %s4 = inlined_call_operand.hbm [shape: bf16[128,128], index: 4, kind: input, shape index: {}]
  %s5 = inlined_call_operand.vmem [shape: f32[1,128], index: 5, kind: input, shape index: {}]
  %s6 = inlined_call_operand.hbm [shape: f32[8,128], index: 6, kind: output, shape index: {}]
  %s7 = sld [smem:[#allocation0]]
  $region81: #{tpu_custom_call.1} parent=0
    _
  %s9 = ssub.s32 1, %s7
  %s10 = scalar_select 0, %s9, %s7
  $region1: #{tpu_custom_call.1} parent=0
    #allocation5 [shape = 'u8[16384]{0}', space=vmem, size = 0x4000, scoped, tag = 'input window, operand 0']
    #allocation6 [shape = 's32[2]{0}', space=sflag, size = 0x8, scoped, tag = 'scoped memory for tpu_custom_call.1']
    #allocation7 [shape = 's32[2]{0}', space=sflag, size = 0x8, scoped, tag = 'scoped memory for tpu_custom_call.1']
    #allocation8 [shape = 'u8[131072]{0}', space=vmem, size = 0x20000, scoped, tag = 'input window, operand 1, single buffered']
    #allocation9 [shape = 's32[1]{0}', space=sflag, size = 0x4, scoped, tag = 'scoped memory for tpu_custom_call.1']
    #allocation10 [shape = 'u8[131072]{0}', space=vmem, size = 0x20000, scoped, tag = 'input window, operand 2, single buffered']
    #allocation11 [shape = 'u8[32768]{0}', space=vmem, size = 0x8000, scoped, tag = 'input window, operand 4, single buffered']
    #allocation12 [shape = 's32[1]{0}', space=sflag, size = 0x4, scoped, tag = 'scoped memory for tpu_custom_call.1']
    #allocation13 [shape = 'u8[4096]{0}', space=vmem, size = 0x1000, scoped, tag = 'output window, operand 0, single buffered']
    %11 = vsyncpa [#allocation6], 0
    %s12 = scalar_lea.sflag [#allocation6], 1
    %13 = vsyncpa %s12, 0
    %14 = vsyncpa [#allocation9], 0
    %15 = vsyncpa [#allocation12], 0
    %16 = vsyncpa [#allocation7], 0
    loop: start=0, step=1, limit=4
    $region2: #{tpu_custom_call.1} parent=1 // loop_pre_header
      _
    $region3: #{tpu_custom_call.1} parent=1 // loop_header
      %s18 = sphi 0, %s22
      %p19 = scmp.ge.s32.totalorder %s18, 4
      %s25 = sphi 0, %s37
      %s26 = sphi 0, %s33
      %s27 = sphi 0, %s25
      %s28 = sphi 0, %s26
      %s29 = sphi 0, %s27
      %s30 = sphi 0, %s28
      %s42 = sphi 0, %s44
      %s45 = sphi 0, %s42
      %s46 = sphi 0, %s45
      %s62 = sphi 0, %s46
      %s66 = sphi 0, %s66
      %s68 = sphi 0, %s66
      %s69 = sphi 0, %s68
      %s83 = sphi 0, %s69
      %s87 = sphi 0, %s87
      %s89 = sphi 0, %s87
      %s90 = sphi 0, %s89
      %s104 = sphi 0, %s90
      %s108 = sphi 0, %s108
      %s110 = sphi 0, %s108
      %s111 = sphi 0, %s110
      %s125 = sphi 0, %s111
      %s129 = sphi 0, %s129
      %s131 = sphi 0, %s129
      %s132 = sphi 0, %s131
      %s146 = sphi 0, %s132
      %s150 = sphi 0, %s150
      %s152 = sphi 0, %s150
      %s153 = sphi 0, %s152
      %s167 = sphi 0, %s153
      %s173 = sphi 0, %s175
      %s176 = sphi 0, %s173
      %s177 = sphi 0, %s176
      %s193 = sphi 0, %s177
    $region4: #{tpu_custom_call.1} parent=1 // loop_header_branch
      %21 = sbr.rel (%p19) target = $region8
    $region5: #{tpu_custom_call.1} parent=1 // loop_body
      %s23 = ssub.s32 %s18, 1
      %s24 = ssub.s32 %s18, 2
      %s31 = sadd.s32 1, %s26
      %p32 = scmp.ge.s32.totalorder %s31, 2
      %s33 = scalar_select %p32, 0, %s31
      %s34 = sadd.s32 1, %s25
      %s35 = scalar_select %p32, %s34, %s25
      %p36 = scmp.ge.s32.totalorder %s35, 1
      %s37 = scalar_select %p36, 0, %s35
      %s38 = ssub.s32 %s26, %s33
      %s39 = ssub.s32 %s25, %s37
      %s40 = sor.u32 %s38, %s39
      %p41 = scmp.eq.s32.totalorder %s40, 0
      %s43 = sadd.s32 %s42, 1
      %s44 = scalar_select %p41, %s42, %s43
      %p47 = pneg %p41
      %p48 = scmp.eq.s32.totalorder %s18, 1
      %p49 = por %p47, %p48
      %p50 = scmp.ne.s32.totalorder %s42, %s45
      %p51 = scmp.eq.s32.totalorder %s18, 0
      %p52 = por %p50, %p51
      %p53 = scmp.ne.s32.totalorder %s42, %s45
      %p54 = scmp.eq.s32.totalorder %s23, 1
      %p55 = por %p53, %p54
      %p56 = scmp.ne.s32.totalorder %s45, %s46
      %p57 = scmp.eq.s32.totalorder %s23, 0
      %p58 = por %p56, %p57
      %p59 = scmp.ne.s32.totalorder %s45, %s46
      %p60 = scmp.eq.s32.totalorder %s24, 1
      %p61 = por %p59, %p60
      %p63 = scmp.ne.s32.totalorder %s46, %s62
      %p64 = scmp.eq.s32.totalorder %s24, 0
      %p65 = por %p63, %p64
      %s67 = sadd.s32 %s66, 1
      %p70 = scmp.eq.s32.totalorder %s18, 1
      %p71 = scmp.ne.s32.totalorder %s66, %s68
      %p72 = scmp.eq.s32.totalorder %s18, 0
      %p73 = por %p71, %p72
      %p74 = scmp.ne.s32.totalorder %s66, %s68
      %p75 = scmp.eq.s32.totalorder %s23, 1
      %p76 = por %p74, %p75
      %p77 = scmp.ne.s32.totalorder %s68, %s69
      %p78 = scmp.eq.s32.totalorder %s23, 0
      %p79 = por %p77, %p78
      %p80 = scmp.ne.s32.totalorder %s68, %s69
      %p81 = scmp.eq.s32.totalorder %s24, 1
      %p82 = por %p80, %p81
      %p84 = scmp.ne.s32.totalorder %s69, %s83
      %p85 = scmp.eq.s32.totalorder %s24, 0
      %p86 = por %p84, %p85
      %s88 = sadd.s32 %s87, 1
      %p91 = scmp.eq.s32.totalorder %s18, 1
      %p92 = scmp.ne.s32.totalorder %s87, %s89
      %p93 = scmp.eq.s32.totalorder %s18, 0
      %p94 = por %p92, %p93
      %p95 = scmp.ne.s32.totalorder %s87, %s89
      %p96 = scmp.eq.s32.totalorder %s23, 1
      %p97 = por %p95, %p96
      %p98 = scmp.ne.s32.totalorder %s89, %s90
      %p99 = scmp.eq.s32.totalorder %s23, 0
      %p100 = por %p98, %p99
      %p101 = scmp.ne.s32.totalorder %s89, %s90
      %p102 = scmp.eq.s32.totalorder %s24, 1
      %p103 = por %p101, %p102
      %p105 = scmp.ne.s32.totalorder %s90, %s104
      %p106 = scmp.eq.s32.totalorder %s24, 0
      %p107 = por %p105, %p106
      %s109 = sadd.s32 %s108, 1
      %p112 = scmp.eq.s32.totalorder %s18, 1
      %p113 = scmp.ne.s32.totalorder %s108, %s110
      %p114 = scmp.eq.s32.totalorder %s18, 0
      %p115 = por %p113, %p114
      %p116 = scmp.ne.s32.totalorder %s108, %s110
      %p117 = scmp.eq.s32.totalorder %s23, 1
      %p118 = por %p116, %p117
      %p119 = scmp.ne.s32.totalorder %s110, %s111
      %p120 = scmp.eq.s32.totalorder %s23, 0
      %p121 = por %p119, %p120
      %p122 = scmp.ne.s32.totalorder %s110, %s111
      %p123 = scmp.eq.s32.totalorder %s24, 1
      %p124 = por %p122, %p123
      %p126 = scmp.ne.s32.totalorder %s111, %s125
      %p127 = scmp.eq.s32.totalorder %s24, 0
      %p128 = por %p126, %p127
      %s130 = sadd.s32 %s129, 1
      %p133 = scmp.eq.s32.totalorder %s18, 1
      %p134 = scmp.ne.s32.totalorder %s129, %s131
      %p135 = scmp.eq.s32.totalorder %s18, 0
      %p136 = por %p134, %p135
      %p137 = scmp.ne.s32.totalorder %s129, %s131
      %p138 = scmp.eq.s32.totalorder %s23, 1
      %p139 = por %p137, %p138
      %p140 = scmp.ne.s32.totalorder %s131, %s132
      %p141 = scmp.eq.s32.totalorder %s23, 0
      %p142 = por %p140, %p141
      %p143 = scmp.ne.s32.totalorder %s131, %s132
      %p144 = scmp.eq.s32.totalorder %s24, 1
      %p145 = por %p143, %p144
      %p147 = scmp.ne.s32.totalorder %s132, %s146
      %p148 = scmp.eq.s32.totalorder %s24, 0
      %p149 = por %p147, %p148
      %s151 = sadd.s32 %s150, 1
      %p154 = scmp.eq.s32.totalorder %s18, 1
      %p155 = scmp.ne.s32.totalorder %s150, %s152
      %p156 = scmp.eq.s32.totalorder %s18, 0
      %p157 = por %p155, %p156
      %p158 = scmp.ne.s32.totalorder %s150, %s152
      %p159 = scmp.eq.s32.totalorder %s23, 1
      %p160 = por %p158, %p159
      %p161 = scmp.ne.s32.totalorder %s152, %s153
      %p162 = scmp.eq.s32.totalorder %s23, 0
      %p163 = por %p161, %p162
      %p164 = scmp.ne.s32.totalorder %s152, %s153
      %p165 = scmp.eq.s32.totalorder %s24, 1
      %p166 = por %p164, %p165
      %p168 = scmp.ne.s32.totalorder %s153, %s167
      %p169 = scmp.eq.s32.totalorder %s24, 0
      %p170 = por %p168, %p169
      %s171 = ssub.s32 %s25, %s37
      %p172 = scmp.eq.s32.totalorder %s171, 0
      %s174 = sadd.s32 %s173, 1
      %s175 = scalar_select %p172, %s173, %s174
      %p178 = pneg %p172
      %p179 = scmp.eq.s32.totalorder %s18, 1
      %p180 = por %p178, %p179
      %p181 = scmp.ne.s32.totalorder %s173, %s176
      %p182 = scmp.eq.s32.totalorder %s18, 0
      %p183 = por %p181, %p182
      %p184 = scmp.ne.s32.totalorder %s173, %s176
      %p185 = scmp.eq.s32.totalorder %s23, 1
      %p186 = por %p184, %p185
      %p187 = scmp.ne.s32.totalorder %s176, %s177
      %p188 = scmp.eq.s32.totalorder %s23, 0
      %p189 = por %p187, %p188
      %p190 = scmp.ne.s32.totalorder %s176, %s177
      %p191 = scmp.eq.s32.totalorder %s24, 1
      %p192 = por %p190, %p191
      %p194 = scmp.ne.s32.totalorder %s177, %s193
      %p195 = scmp.eq.s32.totalorder %s24, 0
      %p196 = por %p194, %p195
      %p197 = scmp.le.s32.totalorder 1, %s18
      %p198 = scmp.lt.s32.totalorder %s18, 3
      %p199 = pnand %p197, %p198
      %p200 = pneg %p199
      // Predicated region
      $region9: #{tpu_custom_call.1} parent=5 // pred_check
        _
      $region10: #{tpu_custom_call.1} parent=5 // pred_check_branch
        %202 = sbr.rel (%p199) target = $region12
      $region11: #{tpu_custom_call.1} parent=5 // pred_region
        %s203 = ssub.s32 %s18, 1
        // Predicated region
        $region13: #{tpu_custom_call.1} parent=11 // pred_check
          %p204 = pneg %p79
        $region14: #{tpu_custom_call.1} parent=11 // pred_check_branch
          %206 = sbr.rel (%p204) target = $region16
        $region15: #{tpu_custom_call.1} parent=11 // pred_region
          %s208 = ssub.s32 4096, 4096
          %209 = vsyncadd [#allocation9], %s208
          %s210 = sshll.u32 [#allocation8], 4
          %s211 = int_to_ptr.vmem [resolvable:$true] %s210
          %216 = dma.hbm_to_vmem [thread:$0]  %s1, 4096, %s211, [#allocation9], 256, 256, 16
        $region16: #{tpu_custom_call.1} parent=11 // pred_fallthru
          _
        // Predicated region
        $region17: #{tpu_custom_call.1} parent=11 // pred_check
          %p217 = pneg %p100
        $region18: #{tpu_custom_call.1} parent=11 // pred_check_branch
          %219 = sbr.rel (%p217) target = $region20
        $region19: #{tpu_custom_call.1} parent=11 // pred_region
          %s221 = ssub.s32 4096, 4096
          %222 = vsyncadd [#allocation9], %s221
          %s223 = sshll.u32 [#allocation10], 4
          %s224 = int_to_ptr.vmem [resolvable:$true] %s223
          %229 = dma.hbm_to_vmem [thread:$0]  %s2, 4096, %s224, [#allocation9], 256, 256, 16
        $region20: #{tpu_custom_call.1} parent=11 // pred_fallthru
          _
        // Predicated region
        $region21: #{tpu_custom_call.1} parent=11 // pred_check
          %p230 = pneg %p121
        $region22: #{tpu_custom_call.1} parent=11 // pred_check_branch
          %232 = sbr.rel (%p230) target = $region24
        $region23: #{tpu_custom_call.1} parent=11 // pred_region
          _
        $region24: #{tpu_custom_call.1} parent=11 // pred_fallthru
          _
        // Predicated region
        $region25: #{tpu_custom_call.1} parent=11 // pred_check
          %p233 = pneg %p142
        $region26: #{tpu_custom_call.1} parent=11 // pred_check_branch
          %235 = sbr.rel (%p233) target = $region28
        $region27: #{tpu_custom_call.1} parent=11 // pred_region
          %s237 = ssub.s32 1024, 1024
          %238 = vsyncadd [#allocation12], %s237
          %s239 = sshll.u32 [#allocation11], 4
          %s240 = int_to_ptr.vmem [resolvable:$true] %s239
          %245 = dma.hbm_to_vmem [thread:$0]  %s4, 1024, %s240, [#allocation12], 64, 64, 4
        $region28: #{tpu_custom_call.1} parent=11 // pred_fallthru
          _
        // Predicated region
        $region29: #{tpu_custom_call.1} parent=11 // pred_check
          %p246 = pneg %p163
        $region30: #{tpu_custom_call.1} parent=11 // pred_check_branch
          %248 = sbr.rel (%p246) target = $region32
        $region31: #{tpu_custom_call.1} parent=11 // pred_region
          _
        $region32: #{tpu_custom_call.1} parent=11 // pred_fallthru
          _
      $region12: #{tpu_custom_call.1} parent=5 // pred_fallthru
        _
      %p249 = scmp.lt.s32.totalorder %s18, 2
      // Predicated region
      $region33: #{tpu_custom_call.1} parent=5 // pred_check
        %p250 = pneg %p249
      $region34: #{tpu_custom_call.1} parent=5 // pred_check_branch
        %252 = sbr.rel (%p250) target = $region36
      $region35: #{tpu_custom_call.1} parent=5 // pred_region
        // Predicated region
        $region37: #{tpu_custom_call.1} parent=35 // pred_check
          %p253 = pneg %p52
        $region38: #{tpu_custom_call.1} parent=35 // pred_check_branch
          %255 = sbr.rel (%p253) target = $region40
        $region39: #{tpu_custom_call.1} parent=35 // pred_region
          %s256 = sand.u32 %s42, 1
          %s257 = scalar_lea.sflag [#allocation6], %s256
          %s258 = sand.u32 %s42, 1
          %s259 = smul.addr %s258, 16
          %s260 = scalar_lea.vmem [#allocation5], %s259
          %s261 = smul.u32 4, %s26
          %s263 = ssub.s32 256, 256
          %264 = vsyncadd %s257, %s263
          %s265 = sadd.s32 %s25, %s261
          %s266 = smul.addr %s265, 64
          %s267 = scalar_lea.hbm %s0, %s266
          %s268 = sshll.u32 %s260, 4
          %s269 = int_to_ptr.vmem [resolvable:$true] %s268
          %274 = dma.hbm_to_vmem [thread:$0]  %s267, 256, %s269, %s257, 64, 64, 4
        $region40: #{tpu_custom_call.1} parent=35 // pred_fallthru
          _
      $region36: #{tpu_custom_call.1} parent=5 // pred_fallthru
        _
      %p275 = scmp.le.s32.totalorder 1, %s18
      %p276 = scmp.lt.s32.totalorder %s18, 3
      %p277 = pnand %p275, %p276
      %p278 = pneg %p277
      // Predicated region
      $region41: #{tpu_custom_call.1} parent=5 // pred_check
        _
      $region42: #{tpu_custom_call.1} parent=5 // pred_check_branch
        %280 = sbr.rel (%p277) target = $region44
      $region43: #{tpu_custom_call.1} parent=5 // pred_region
        %s281 = ssub.s32 %s18, 1
        %s282 = sand.u32 %s45, 1
        %s283 = scalar_lea.sflag [#allocation6], %s282
        %s284 = sand.u32 %s45, 1
        %s285 = smul.addr %s284, 16
        %s286 = scalar_lea.vmem [#allocation5], %s285
        // Predicated region
        $region45: #{tpu_custom_call.1} parent=43 // pred_check
          %p287 = pneg %p58
        $region46: #{tpu_custom_call.1} parent=43 // pred_check_branch
          %289 = sbr.rel (%p287) target = $region48
        $region47: #{tpu_custom_call.1} parent=43 // pred_region
          %290 = dma.done %s283, 256
        $region48: #{tpu_custom_call.1} parent=43 // pred_fallthru
          _
        // Predicated region
        $region49: #{tpu_custom_call.1} parent=43 // pred_check
          %p291 = pneg %p79
        $region50: #{tpu_custom_call.1} parent=43 // pred_check_branch
          %293 = sbr.rel (%p291) target = $region52
        $region51: #{tpu_custom_call.1} parent=43 // pred_region
          %294 = dma.done [#allocation9], 4096
        $region52: #{tpu_custom_call.1} parent=43 // pred_fallthru
          _
        // Predicated region
        $region53: #{tpu_custom_call.1} parent=43 // pred_check
          %p295 = pneg %p100
        $region54: #{tpu_custom_call.1} parent=43 // pred_check_branch
          %297 = sbr.rel (%p295) target = $region56
        $region55: #{tpu_custom_call.1} parent=43 // pred_region
          %298 = dma.done [#allocation9], 4096
        $region56: #{tpu_custom_call.1} parent=43 // pred_fallthru
          _
        // Predicated region
        $region57: #{tpu_custom_call.1} parent=43 // pred_check
          %p299 = pneg %p142
        $region58: #{tpu_custom_call.1} parent=43 // pred_check_branch
          %301 = sbr.rel (%p299) target = $region60
        $region59: #{tpu_custom_call.1} parent=43 // pred_region
          %302 = dma.done [#allocation12], 1024
        $region60: #{tpu_custom_call.1} parent=43 // pred_fallthru
          _
        %s303 = sand.u32 %s45, 1
        %s304 = scalar_lea.sflag [#allocation6], %s303
        %s305 = sand.u32 %s45, 1
        %s306 = smul.addr %s305, 16
        %s307 = scalar_lea.vmem [#allocation5], %s306
        %p308 = pneg %p58
        %p309 = pneg %p55
        %p310 = pneg %p79
        %p311 = pneg %p76
        %p312 = pneg %p100
        %p313 = pneg %p97
        %p314 = pneg %p121
        %p315 = pneg %p118
        %p316 = pneg %p142
        %p317 = pneg %p139
        %p318 = pneg %p163
        %p319 = pneg %p160
        %p320 = pneg %p189
        %p321 = pneg %p186
        %s322 = smul.u32 4, %s28
        %p324 = scmp.eq.s32.totalorder %s28, 0
        // Predicated region
        $region61: #{tpu_custom_call.1} parent=43 // pred_check
          %p325 = pneg %p324
        $region62: #{tpu_custom_call.1} parent=43 // pred_check_branch
          %327 = sbr.rel (%p325) target = $region64
        $region63: #{tpu_custom_call.1} parent=43 // pred_region
          %328 = vst [vmem:[#allocation3] sm:$0xff] 0.0
          %329 = vst [vmem:[#allocation4] sm:$0xff] 0.0
        $region64: #{tpu_custom_call.1} parent=43 // pred_fallthru
          _
        %v330 = vld [vmem:[%s286] sm:$0xf]
        %v331 = vld [vmem:[%s286 + $0x4] sm:$0xf]
        %v332 = vld [vmem:[%s286 + $0x8] sm:$0xf]
        %v333 = vld [vmem:[%s286 + $0xc] sm:$0xf]
        %v334 = vld [vmem:[#allocation8] sm:$0xff]
        %v335 = vld [vmem:[#allocation8 + $0x8] sm:$0xff]
        %v336 = vld [vmem:[#allocation8 + $0x10] sm:$0xff]
        %v337 = vld [vmem:[#allocation8 + $0x18] sm:$0xff]
        %v338 = vld [vmem:[#allocation8 + $0x20] sm:$0xff]
        %v339 = vld [vmem:[#allocation8 + $0x28] sm:$0xff]
        %v340 = vld [vmem:[#allocation8 + $0x30] sm:$0xff]
        %v341 = vld [vmem:[#allocation8 + $0x38] sm:$0xff]
        %v342 = vld [vmem:[#allocation8 + $0x40] sm:$0xff]
        %v343 = vld [vmem:[#allocation8 + $0x48] sm:$0xff]
        %v344 = vld [vmem:[#allocation8 + $0x50] sm:$0xff]
        %v345 = vld [vmem:[#allocation8 + $0x58] sm:$0xff]
        %v346 = vld [vmem:[#allocation8 + $0x60] sm:$0xff]
        %v347 = vld [vmem:[#allocation8 + $0x68] sm:$0xff]
        %v348 = vld [vmem:[#allocation8 + $0x70] sm:$0xff]
        %v349 = vld [vmem:[#allocation8 + $0x78] sm:$0xff]
        %v350 = vld [vmem:[#allocation8 + $0x80] sm:$0xff]
        %v351 = vld [vmem:[#allocation8 + $0x88] sm:$0xff]
        %v352 = vld [vmem:[#allocation8 + $0x90] sm:$0xff]
        %v353 = vld [vmem:[#allocation8 + $0x98] sm:$0xff]
        %v354 = vld [vmem:[#allocation8 + $0xa0] sm:$0xff]
        %v355 = vld [vmem:[#allocation8 + $0xa8] sm:$0xff]
        %v356 = vld [vmem:[#allocation8 + $0xb0] sm:$0xff]
        %v357 = vld [vmem:[#allocation8 + $0xb8] sm:$0xff]
        %v358 = vld [vmem:[#allocation8 + $0xc0] sm:$0xff]
        %v359 = vld [vmem:[#allocation8 + $0xc8] sm:$0xff]
        %v360 = vld [vmem:[#allocation8 + $0xd0] sm:$0xff]
        %v361 = vld [vmem:[#allocation8 + $0xd8] sm:$0xff]
        %v362 = vld [vmem:[#allocation8 + $0xe0] sm:$0xff]
        %v363 = vld [vmem:[#allocation8 + $0xe8] sm:$0xff]
        %v364 = vld [vmem:[#allocation8 + $0xf0] sm:$0xff]
        %v365 = vld [vmem:[#allocation8 + $0xf8] sm:$0xff]
        %v366 = vld [vmem:[%s3] sm:$0xf]
        %v368 = vlaneseq
        %v369 = vshrl.u32 %v368, 7
        %v370 = vsub.s32 0, %v369
        %v371 = vrot.slane %v366, %v370
        %v372 = vlaneseq
        %v373 = vshrl.u32 %v372, 7
        %v374 = vsub.s32 1, %v373
        %v375 = vrot.slane %v366, %v374
        %v376 = vlaneseq
        %v377 = vshrl.u32 %v376, 7
        %v378 = vsub.s32 2, %v377
        %v379 = vrot.slane %v366, %v378
        %v380 = vlaneseq
        %v381 = vshrl.u32 %v380, 7
        %v382 = vsub.s32 3, %v381
        %v383 = vrot.slane %v366, %v382
        %v392 = vunpack.c.l.b16 %v330
        %v393 = vunpack.c.l.b16 %v331
        %v394 = vunpack.c.l.b16 %v332
        %v395 = vunpack.c.l.b16 %v333
        %v396 = vpack.c.b16 %v393, %v392
        %v397 = vpack.c.b16 %v395, %v394
        %v432 = vunpack.c.l.b16 %v334
        %v433 = vunpack.c.h.b16 %v334
        %v434 = vunpack.c.l.b16 %v335
        %v435 = vunpack.c.h.b16 %v335
        %v436 = vunpack.c.l.b16 %v336
        %v437 = vunpack.c.h.b16 %v336
        %v438 = vunpack.c.l.b16 %v337
        %v439 = vunpack.c.h.b16 %v337
        %v440 = vunpack.c.l.b16 %v338
        %v441 = vunpack.c.h.b16 %v338
        %v442 = vunpack.c.l.b16 %v339
        %v443 = vunpack.c.h.b16 %v339
        %v444 = vunpack.c.l.b16 %v340
        %v445 = vunpack.c.h.b16 %v340
        %v446 = vunpack.c.l.b16 %v341
        %v447 = vunpack.c.h.b16 %v341
        %v448 = vunpack.c.l.b16 %v342
        %v449 = vunpack.c.h.b16 %v342
        %v450 = vunpack.c.l.b16 %v343
        %v451 = vunpack.c.h.b16 %v343
        %v452 = vunpack.c.l.b16 %v344
        %v453 = vunpack.c.h.b16 %v344
        %v454 = vunpack.c.l.b16 %v345
        %v455 = vunpack.c.h.b16 %v345
        %v456 = vunpack.c.l.b16 %v346
        %v457 = vunpack.c.h.b16 %v346
        %v458 = vunpack.c.l.b16 %v347
        %v459 = vunpack.c.h.b16 %v347
        %v460 = vunpack.c.l.b16 %v348
        %v461 = vunpack.c.h.b16 %v348
        %v462 = vunpack.c.l.b16 %v349
        %v463 = vunpack.c.h.b16 %v349
        %v464 = vunpack.c.l.b16 %v350
        %v465 = vunpack.c.h.b16 %v350
        %v466 = vunpack.c.l.b16 %v351
        %v467 = vunpack.c.h.b16 %v351
        %v468 = vunpack.c.l.b16 %v352
        %v469 = vunpack.c.h.b16 %v352
        %v470 = vunpack.c.l.b16 %v353
        %v471 = vunpack.c.h.b16 %v353
        %v472 = vunpack.c.l.b16 %v354
        %v473 = vunpack.c.h.b16 %v354
        %v474 = vunpack.c.l.b16 %v355
        %v475 = vunpack.c.h.b16 %v355
        %v476 = vunpack.c.l.b16 %v356
        %v477 = vunpack.c.h.b16 %v356
        %v478 = vunpack.c.l.b16 %v357
        %v479 = vunpack.c.h.b16 %v357
        %v480 = vunpack.c.l.b16 %v358
        %v481 = vunpack.c.h.b16 %v358
        %v482 = vunpack.c.l.b16 %v359
        %v483 = vunpack.c.h.b16 %v359
        %v484 = vunpack.c.l.b16 %v360
        %v485 = vunpack.c.h.b16 %v360
        %v486 = vunpack.c.l.b16 %v361
        %v487 = vunpack.c.h.b16 %v361
        %v488 = vunpack.c.l.b16 %v362
        %v489 = vunpack.c.h.b16 %v362
        %v490 = vunpack.c.l.b16 %v363
        %v491 = vunpack.c.h.b16 %v363
        %v492 = vunpack.c.l.b16 %v364
        %v493 = vunpack.c.h.b16 %v364
        %v494 = vunpack.c.l.b16 %v365
        %v495 = vunpack.c.h.b16 %v365
        %v496 = vpack.c.b16 %v436, %v432
        %v497 = vpack.c.b16 %v437, %v433
        %v498 = vpack.c.b16 %v438, %v434
        %v499 = vpack.c.b16 %v439, %v435
        %v500 = vpack.c.b16 %v444, %v440
        %v501 = vpack.c.b16 %v445, %v441
        %v502 = vpack.c.b16 %v446, %v442
        %v503 = vpack.c.b16 %v447, %v443
        %v504 = vpack.c.b16 %v452, %v448
        %v505 = vpack.c.b16 %v453, %v449
        %v506 = vpack.c.b16 %v454, %v450
        %v507 = vpack.c.b16 %v455, %v451
        %v508 = vpack.c.b16 %v460, %v456
        %v509 = vpack.c.b16 %v461, %v457
        %v510 = vpack.c.b16 %v462, %v458
        %v511 = vpack.c.b16 %v463, %v459
        %v512 = vpack.c.b16 %v468, %v464
        %v513 = vpack.c.b16 %v469, %v465
        %v514 = vpack.c.b16 %v470, %v466
        %v515 = vpack.c.b16 %v471, %v467
        %v516 = vpack.c.b16 %v476, %v472
        %v517 = vpack.c.b16 %v477, %v473
        %v518 = vpack.c.b16 %v478, %v474
        %v519 = vpack.c.b16 %v479, %v475
        %v520 = vpack.c.b16 %v484, %v480
        %v521 = vpack.c.b16 %v485, %v481
        %v522 = vpack.c.b16 %v486, %v482
        %v523 = vpack.c.b16 %v487, %v483
        %v524 = vpack.c.b16 %v492, %v488
        %v525 = vpack.c.b16 %v493, %v489
        %v526 = vpack.c.b16 %v494, %v490
        %v527 = vpack.c.b16 %v495, %v491
        %560 = vmatprep.subr.bf16.mxu0 %v497
        %561 = vmatpush1.bf16.msra.mxu0 %v496
        %562 = vmatprep.subr.bf16.mxu0 %v501
        %563 = vmatpush1.bf16.msra.mxu0 %v500
        %564 = vmatprep.subr.bf16.mxu0 %v505
        %565 = vmatpush1.bf16.msra.mxu0 %v504
        %566 = vmatprep.subr.bf16.mxu0 %v509
        %567 = vmatpush1.bf16.msra.mxu0 %v508
        %568 = vmatprep.subr.bf16.mxu0 %v513
        %569 = vmatpush1.bf16.msra.mxu0 %v512
        %570 = vmatprep.subr.bf16.mxu0 %v517
        %571 = vmatpush1.bf16.msra.mxu0 %v516
        %572 = vmatprep.subr.bf16.mxu0 %v521
        %573 = vmatpush1.bf16.msra.mxu0 %v520
        %574 = vmatprep.subr.bf16.mxu0 %v525
        %575 = vmatpush1.bf16.msra.mxu0 %v524
        %576 = vmatprep.subr.bf16.mxu0 0
        %577 = vmatpush1.bf16.msra.mxu0 0
        %578 = vmatprep.subr.bf16.mxu0 0
        %579 = vmatpush1.bf16.msra.mxu0 0
        %580 = vmatprep.subr.bf16.mxu0 0
        %581 = vmatpush1.bf16.msra.mxu0 0
        %582 = vmatprep.subr.bf16.mxu0 0
        %583 = vmatpush1.bf16.msra.mxu0 0
        %584 = vmatprep.subr.bf16.mxu0 0
        %585 = vmatpush1.bf16.msra.mxu0 0
        %586 = vmatprep.subr.bf16.mxu0 0
        %587 = vmatpush1.bf16.msra.mxu0 0
        %588 = vmatprep.subr.bf16.mxu0 0
        %589 = vmatpush1.bf16.msra.mxu0 0
        %590 = vmatprep.subr.bf16.mxu0 0
        %591 = vmatpush1.bf16.msra.mxu0 0
        %592 = vmatprep.mubr.bf16.mxu0 0
        %593 = vmatmul.mubr.bf16.gmra.mrb[0].mxu0 %v396
        %v594 = vpop.f32.mrb[0].mxu0
        %v595 = vadd.f32 %v371, %v594
        %v596 = vpop.f32.mrb[0].mxu0
        %v597 = vadd.f32 %v375, %v596
        %v598 = vpop.f32.mrb[0].mxu0
        %v599 = vadd.f32 %v371, %v598
        %v600 = vpop.f32.mrb[0].mxu0
        %v601 = vadd.f32 %v375, %v600
        %602 = vmatprep.mubr.bf16.mxu0 0
        %603 = vmatmul.mubr.bf16.gmra.mrb[0].mxu0 %v397
        %v604 = vpop.f32.mrb[0].mxu0
        %v605 = vadd.f32 %v371, %v604
        %v606 = vpop.f32.mrb[0].mxu0
        %v607 = vadd.f32 %v375, %v606
        %v608 = vpop.f32.mrb[0].mxu0
        %v609 = vadd.f32 %v371, %v608
        %v610 = vpop.f32.mrb[0].mxu0
        %v611 = vadd.f32 %v375, %v610
        %612 = vdwg.mxu0
        %613 = vmatprep.subr.bf16.mxu0 %v499
        %614 = vmatpush1.bf16.msra.mxu0 %v498
        %615 = vmatprep.subr.bf16.mxu0 %v503
        %616 = vmatpush1.bf16.msra.mxu0 %v502
        %617 = vmatprep.subr.bf16.mxu0 %v507
        %618 = vmatpush1.bf16.msra.mxu0 %v506
        %619 = vmatprep.subr.bf16.mxu0 %v511
        %620 = vmatpush1.bf16.msra.mxu0 %v510
        %621 = vmatprep.subr.bf16.mxu0 %v515
        %622 = vmatpush1.bf16.msra.mxu0 %v514
        %623 = vmatprep.subr.bf16.mxu0 %v519
        %624 = vmatpush1.bf16.msra.mxu0 %v518
        %625 = vmatprep.subr.bf16.mxu0 %v523
        %626 = vmatpush1.bf16.msra.mxu0 %v522
        %627 = vmatprep.subr.bf16.mxu0 %v527
        %628 = vmatpush1.bf16.msra.mxu0 %v526
        %629 = vmatprep.subr.bf16.mxu0 0
        %630 = vmatpush1.bf16.msra.mxu0 0
        %631 = vmatprep.subr.bf16.mxu0 0
        %632 = vmatpush1.bf16.msra.mxu0 0
        %633 = vmatprep.subr.bf16.mxu0 0
        %634 = vmatpush1.bf16.msra.mxu0 0
        %635 = vmatprep.subr.bf16.mxu0 0
        %636 = vmatpush1.bf16.msra.mxu0 0
        %637 = vmatprep.subr.bf16.mxu0 0
        %638 = vmatpush1.bf16.msra.mxu0 0
        %639 = vmatprep.subr.bf16.mxu0 0
        %640 = vmatpush1.bf16.msra.mxu0 0
        %641 = vmatprep.subr.bf16.mxu0 0
        %642 = vmatpush1.bf16.msra.mxu0 0
        %643 = vmatprep.subr.bf16.mxu0 0
        %644 = vmatpush1.bf16.msra.mxu0 0
        %645 = vmatprep.mubr.bf16.mxu0 0
        %646 = vmatmul.mubr.bf16.gmra.mrb[0].mxu0 %v396
        %v647 = vpop.f32.mrb[0].mxu0
        %v648 = vadd.f32 %v379, %v647
        %v649 = vpop.f32.mrb[0].mxu0
        %v650 = vadd.f32 %v383, %v649
        %v651 = vpop.f32.mrb[0].mxu0
        %v652 = vadd.f32 %v379, %v651
        %v653 = vpop.f32.mrb[0].mxu0
        %v654 = vadd.f32 %v383, %v653
        %655 = vmatprep.mubr.bf16.mxu0 0
        %656 = vmatmul.mubr.bf16.gmra.mrb[0].mxu0 %v397
        %v657 = vpop.f32.mrb[0].mxu0
        %v658 = vadd.f32 %v379, %v657
        %v659 = vpop.f32.mrb[0].mxu0
        %v660 = vadd.f32 %v383, %v659
        %v661 = vpop.f32.mrb[0].mxu0
        %v662 = vadd.f32 %v379, %v661
        %v663 = vpop.f32.mrb[0].mxu0
        %v664 = vadd.f32 %v383, %v663
        %665 = vdwg.mxu0
        %v666 = vpack.c.bf16 %v595, %v595
        %v667 = vpack.c.bf16 %v597, %v597
        %v668 = vpack.c.bf16 %v648, %v648
        %v669 = vpack.c.bf16 %v650, %v650
        %v670 = vpack.c.bf16 %v599, %v599
        %v671 = vpack.c.bf16 %v601, %v601
        %v672 = vpack.c.bf16 %v652, %v652
        %v673 = vpack.c.bf16 %v654, %v654
        %v674 = vpack.c.bf16 %v605, %v605
        %v675 = vpack.c.bf16 %v607, %v607
        %v676 = vpack.c.bf16 %v658, %v658
        %v677 = vpack.c.bf16 %v660, %v660
        %v678 = vpack.c.bf16 %v609, %v609
        %v679 = vpack.c.bf16 %v611, %v611
        %v680 = vpack.c.bf16 %v662, %v662
        %v681 = vpack.c.bf16 %v664, %v664
        %v698 = vunpack.c.l.b16 %v666
        %v699 = vunpack.c.l.b16 %v667
        %v700 = vunpack.c.l.b16 %v668
        %v701 = vunpack.c.l.b16 %v669
        %v702 = vunpack.c.l.b16 %v670
        %v703 = vunpack.c.l.b16 %v671
        %v704 = vunpack.c.l.b16 %v672
        %v705 = vunpack.c.l.b16 %v673
        %v706 = vunpack.c.l.b16 %v674
        %v707 = vunpack.c.l.b16 %v675
        %v708 = vunpack.c.l.b16 %v676
        %v709 = vunpack.c.l.b16 %v677
        %v710 = vunpack.c.l.b16 %v678
        %v711 = vunpack.c.l.b16 %v679
        %v712 = vunpack.c.l.b16 %v680
        %v713 = vunpack.c.l.b16 %v681
        %v714 = vpack.c.b16 %v699, %v698
        %v715 = vpack.c.b16 %v701, %v700
        %v716 = vpack.c.b16 %v703, %v702
        %v717 = vpack.c.b16 %v705, %v704
        %v718 = vpack.c.b16 %v707, %v706
        %v719 = vpack.c.b16 %v709, %v708
        %v720 = vpack.c.b16 %v711, %v710
        %v721 = vpack.c.b16 %v713, %v712
        %730 = vst [vmem:[#allocation2] sm:$0xff] %v714
        %731 = vst [vmem:[#allocation2 + $0x8] sm:$0xff] %v715
        %732 = vst [vmem:[#allocation2 + $0x10] sm:$0xff] %v716
        %733 = vst [vmem:[#allocation2 + $0x18] sm:$0xff] %v717
        %734 = vst [vmem:[#allocation2 + $0x20] sm:$0xff] %v718
        %735 = vst [vmem:[#allocation2 + $0x28] sm:$0xff] %v719
        %736 = vst [vmem:[#allocation2 + $0x30] sm:$0xff] %v720
        %737 = vst [vmem:[#allocation2 + $0x38] sm:$0xff] %v721
        %v738 = vld [vmem:[#allocation3] sm:$0xff]
        %v739 = vld [vmem:[#allocation4] sm:$0xff]
        %v740 = vld [vmem:[#allocation2] sm:$0xff]
        %v741 = vld [vmem:[#allocation2 + $0x8] sm:$0xff]
        %v742 = vunpack.c.l.bf16 %v740
        %v743 = vunpack.c.h.bf16 %v740
        %v744 = vunpack.c.l.bf16 %v741
        %v745 = vunpack.c.h.bf16 %v741
        %v746 = vpack.c.bf16 %v738, %v738
        %v747 = vld [vmem:[#allocation10] sm:$0xff]
        %v748 = vld [vmem:[#allocation10 + $0x8] sm:$0xff]
        %v749 = vld [vmem:[#allocation10 + $0x10] sm:$0xff]
        %v750 = vld [vmem:[#allocation10 + $0x18] sm:$0xff]
        %v751 = vld [vmem:[#allocation10 + $0x20] sm:$0xff]
        %v752 = vld [vmem:[#allocation10 + $0x28] sm:$0xff]
        %v753 = vld [vmem:[#allocation10 + $0x30] sm:$0xff]
        %v754 = vld [vmem:[#allocation10 + $0x38] sm:$0xff]
        %v755 = vld [vmem:[#allocation10 + $0x40] sm:$0xff]
        %v756 = vld [vmem:[#allocation10 + $0x48] sm:$0xff]
        %v757 = vld [vmem:[#allocation10 + $0x50] sm:$0xff]
        %v758 = vld [vmem:[#allocation10 + $0x58] sm:$0xff]
        %v759 = vld [vmem:[#allocation10 + $0x60] sm:$0xff]
        %v760 = vld [vmem:[#allocation10 + $0x68] sm:$0xff]
        %v761 = vld [vmem:[#allocation10 + $0x70] sm:$0xff]
        %v762 = vld [vmem:[#allocation10 + $0x78] sm:$0xff]
        %v763 = vld [vmem:[#allocation10 + $0x80] sm:$0xff]
        %v764 = vld [vmem:[#allocation10 + $0x88] sm:$0xff]
        %v765 = vld [vmem:[#allocation10 + $0x90] sm:$0xff]
        %v766 = vld [vmem:[#allocation10 + $0x98] sm:$0xff]
        %v767 = vld [vmem:[#allocation10 + $0xa0] sm:$0xff]
        %v768 = vld [vmem:[#allocation10 + $0xa8] sm:$0xff]
        %v769 = vld [vmem:[#allocation10 + $0xb0] sm:$0xff]
        %v770 = vld [vmem:[#allocation10 + $0xb8] sm:$0xff]
        %v771 = vld [vmem:[#allocation10 + $0xc0] sm:$0xff]
        %v772 = vld [vmem:[#allocation10 + $0xc8] sm:$0xff]
        %v773 = vld [vmem:[#allocation10 + $0xd0] sm:$0xff]
        %v774 = vld [vmem:[#allocation10 + $0xd8] sm:$0xff]
        %v775 = vld [vmem:[#allocation10 + $0xe0] sm:$0xff]
        %v776 = vld [vmem:[#allocation10 + $0xe8] sm:$0xff]
        %v777 = vld [vmem:[#allocation10 + $0xf0] sm:$0xff]
        %v778 = vld [vmem:[#allocation10 + $0xf8] sm:$0xff]
        %v811 = vunpack.c.l.b16 %v747
        %v812 = vunpack.c.h.b16 %v747
        %v813 = vunpack.c.l.b16 %v748
        %v814 = vunpack.c.h.b16 %v748
        %v815 = vunpack.c.l.b16 %v749
        %v816 = vunpack.c.h.b16 %v749
        %v817 = vunpack.c.l.b16 %v750
        %v818 = vunpack.c.h.b16 %v750
        %v819 = vunpack.c.l.b16 %v751
        %v820 = vunpack.c.h.b16 %v751
        %v821 = vunpack.c.l.b16 %v752
        %v822 = vunpack.c.h.b16 %v752
        %v823 = vunpack.c.l.b16 %v753
        %v824 = vunpack.c.h.b16 %v753
        %v825 = vunpack.c.l.b16 %v754
        %v826 = vunpack.c.h.b16 %v754
        %v827 = vunpack.c.l.b16 %v755
        %v828 = vunpack.c.h.b16 %v755
        %v829 = vunpack.c.l.b16 %v756
        %v830 = vunpack.c.h.b16 %v756
        %v831 = vunpack.c.l.b16 %v757
        %v832 = vunpack.c.h.b16 %v757
        %v833 = vunpack.c.l.b16 %v758
        %v834 = vunpack.c.h.b16 %v758
        %v835 = vunpack.c.l.b16 %v759
        %v836 = vunpack.c.h.b16 %v759
        %v837 = vunpack.c.l.b16 %v760
        %v838 = vunpack.c.h.b16 %v760
        %v839 = vunpack.c.l.b16 %v761
        %v840 = vunpack.c.h.b16 %v761
        %v841 = vunpack.c.l.b16 %v762
        %v842 = vunpack.c.h.b16 %v762
        %v843 = vunpack.c.l.b16 %v763
        %v844 = vunpack.c.h.b16 %v763
        %v845 = vunpack.c.l.b16 %v764
        %v846 = vunpack.c.h.b16 %v764
        %v847 = vunpack.c.l.b16 %v765
        %v848 = vunpack.c.h.b16 %v765
        %v849 = vunpack.c.l.b16 %v766
        %v850 = vunpack.c.h.b16 %v766
        %v851 = vunpack.c.l.b16 %v767
        %v852 = vunpack.c.h.b16 %v767
        %v853 = vunpack.c.l.b16 %v768
        %v854 = vunpack.c.h.b16 %v768
        %v855 = vunpack.c.l.b16 %v769
        %v856 = vunpack.c.h.b16 %v769
        %v857 = vunpack.c.l.b16 %v770
        %v858 = vunpack.c.h.b16 %v770
        %v859 = vunpack.c.l.b16 %v771
        %v860 = vunpack.c.h.b16 %v771
        %v861 = vunpack.c.l.b16 %v772
        %v862 = vunpack.c.h.b16 %v772
        %v863 = vunpack.c.l.b16 %v773
        %v864 = vunpack.c.h.b16 %v773
        %v865 = vunpack.c.l.b16 %v774
        %v866 = vunpack.c.h.b16 %v774
        %v867 = vunpack.c.l.b16 %v775
        %v868 = vunpack.c.h.b16 %v775
        %v869 = vunpack.c.l.b16 %v776
        %v870 = vunpack.c.h.b16 %v776
        %v871 = vunpack.c.l.b16 %v777
        %v872 = vunpack.c.h.b16 %v777
        %v873 = vunpack.c.l.b16 %v778
        %v874 = vunpack.c.h.b16 %v778
        %v875 = vpack.c.b16 %v815, %v811
        %v876 = vpack.c.b16 %v816, %v812
        %v877 = vpack.c.b16 %v817, %v813
        %v878 = vpack.c.b16 %v818, %v814
        %v879 = vpack.c.b16 %v823, %v819
        %v880 = vpack.c.b16 %v824, %v820
        %v881 = vpack.c.b16 %v825, %v821
        %v882 = vpack.c.b16 %v826, %v822
        %v883 = vpack.c.b16 %v831, %v827
        %v884 = vpack.c.b16 %v832, %v828
        %v885 = vpack.c.b16 %v833, %v829
        %v886 = vpack.c.b16 %v834, %v830
        %v887 = vpack.c.b16 %v839, %v835
        %v888 = vpack.c.b16 %v840, %v836
        %v889 = vpack.c.b16 %v841, %v837
        %v890 = vpack.c.b16 %v842, %v838
        %v891 = vpack.c.b16 %v847, %v843
        %v892 = vpack.c.b16 %v848, %v844
        %v893 = vpack.c.b16 %v849, %v845
        %v894 = vpack.c.b16 %v850, %v846
        %v895 = vpack.c.b16 %v855, %v851
        %v896 = vpack.c.b16 %v856, %v852
        %v897 = vpack.c.b16 %v857, %v853
        %v898 = vpack.c.b16 %v858, %v854
        %v899 = vpack.c.b16 %v863, %v859
        %v900 = vpack.c.b16 %v864, %v860
        %v901 = vpack.c.b16 %v865, %v861
        %v902 = vpack.c.b16 %v866, %v862
        %v903 = vpack.c.b16 %v871, %v867
        %v904 = vpack.c.b16 %v872, %v868
        %v905 = vpack.c.b16 %v873, %v869
        %v906 = vpack.c.b16 %v874, %v870
        %939 = vmatprep.subr.bf16.mxu0 %v876
        %940 = vmatpush1.bf16.msra.mxu0 %v875
        %941 = vmatprep.subr.bf16.mxu0 %v880
        %942 = vmatpush1.bf16.msra.mxu0 %v879
        %943 = vmatprep.subr.bf16.mxu0 %v884
        %944 = vmatpush1.bf16.msra.mxu0 %v883
        %945 = vmatprep.subr.bf16.mxu0 %v888
        %946 = vmatpush1.bf16.msra.mxu0 %v887
        %947 = vmatprep.subr.bf16.mxu0 %v892
        %948 = vmatpush1.bf16.msra.mxu0 %v891
        %949 = vmatprep.subr.bf16.mxu0 %v896
        %950 = vmatpush1.bf16.msra.mxu0 %v895
        %951 = vmatprep.subr.bf16.mxu0 %v900
        %952 = vmatpush1.bf16.msra.mxu0 %v899
        %953 = vmatprep.subr.bf16.mxu0 %v904
        %954 = vmatpush1.bf16.msra.mxu0 %v903
        %955 = vmatprep.subr.bf16.mxu0 0
        %956 = vmatpush1.bf16.msra.mxu0 0
        %957 = vmatprep.subr.bf16.mxu0 0
        %958 = vmatpush1.bf16.msra.mxu0 0
        %959 = vmatprep.subr.bf16.mxu0 0
        %960 = vmatpush1.bf16.msra.mxu0 0
        %961 = vmatprep.subr.bf16.mxu0 0
        %962 = vmatpush1.bf16.msra.mxu0 0
        %963 = vmatprep.subr.bf16.mxu0 0
        %964 = vmatpush1.bf16.msra.mxu0 0
        %965 = vmatprep.subr.bf16.mxu0 0
        %966 = vmatpush1.bf16.msra.mxu0 0
        %967 = vmatprep.subr.bf16.mxu0 0
        %968 = vmatpush1.bf16.msra.mxu0 0
        %969 = vmatprep.subr.bf16.mxu0 0
        %970 = vmatpush1.bf16.msra.mxu0 0
        %971 = vmatprep.mubr.bf16.mxu0 0
        %972 = vmatmul.mubr.bf16.gmra.mrb[0].mxu0 %v746
        %v973 = vpop.f32.mrb[0].mxu0
        %v974 = vadd.f32 0.0, %v973
        %v975 = vpop.f32.mrb[0].mxu0
        %v976 = vadd.f32 0.0, %v975
        %v977 = vpop.f32.mrb[0].mxu0
        %v978 = vpop.f32.mrb[0].mxu0
        %979 = vdwg.mxu0
        %980 = vmatprep.subr.bf16.mxu0 %v878
        %981 = vmatpush1.bf16.msra.mxu0 %v877
        %982 = vmatprep.subr.bf16.mxu0 %v882
        %983 = vmatpush1.bf16.msra.mxu0 %v881
        %984 = vmatprep.subr.bf16.mxu0 %v886
        %985 = vmatpush1.bf16.msra.mxu0 %v885
        %986 = vmatprep.subr.bf16.mxu0 %v890
        %987 = vmatpush1.bf16.msra.mxu0 %v889
        %988 = vmatprep.subr.bf16.mxu0 %v894
        %989 = vmatpush1.bf16.msra.mxu0 %v893
        %990 = vmatprep.subr.bf16.mxu0 %v898
        %991 = vmatpush1.bf16.msra.mxu0 %v897
        %992 = vmatprep.subr.bf16.mxu0 %v902
        %993 = vmatpush1.bf16.msra.mxu0 %v901
        %994 = vmatprep.subr.bf16.mxu0 %v906
        %995 = vmatpush1.bf16.msra.mxu0 %v905
        %996 = vmatprep.subr.bf16.mxu0 0
        %997 = vmatpush1.bf16.msra.mxu0 0
        %998 = vmatprep.subr.bf16.mxu0 0
        %999 = vmatpush1.bf16.msra.mxu0 0
        %1000 = vmatprep.subr.bf16.mxu0 0
        %1001 = vmatpush1.bf16.msra.mxu0 0
        %1002 = vmatprep.subr.bf16.mxu0 0
        %1003 = vmatpush1.bf16.msra.mxu0 0
        %1004 = vmatprep.subr.bf16.mxu0 0
        %1005 = vmatpush1.bf16.msra.mxu0 0
        %1006 = vmatprep.subr.bf16.mxu0 0
        %1007 = vmatpush1.bf16.msra.mxu0 0
        %1008 = vmatprep.subr.bf16.mxu0 0
        %1009 = vmatpush1.bf16.msra.mxu0 0
        %1010 = vmatprep.subr.bf16.mxu0 0
        %1011 = vmatpush1.bf16.msra.mxu0 0
        %1012 = vmatprep.mubr.bf16.mxu0 0
        %1013 = vmatmul.mubr.bf16.gmra.mrb[0].mxu0 %v746
        %v1014 = vpop.f32.mrb[0].mxu0
        %v1015 = vadd.f32 0.0, %v1014
        %v1016 = vpop.f32.mrb[0].mxu0
        %v1017 = vadd.f32 0.0, %v1016
        %v1018 = vpop.f32.mrb[0].mxu0
        %v1019 = vpop.f32.mrb[0].mxu0
        %1020 = vdwg.mxu0
        %v1021 = vadd.f32 %v742, %v974
        %v1022 = vadd.f32 %v743, %v976
        %v1023 = vadd.f32 %v744, %v1015
        %v1024 = vadd.f32 %v745, %v1017
        %v1025 = vmul.f32 %v1021, 0.5
        %v1026 = vtanh.pop %v1025
        %v1027 = vmul.f32 %v1026, 0.5
        %v1028 = vadd.f32 %v1027, 0.5
        %v1029 = vmul.f32 %v1022, 0.5
        %v1030 = vtanh.pop %v1029
        %v1031 = vmul.f32 %v1030, 0.5
        %v1032 = vadd.f32 %v1031, 0.5
        %v1033 = vtanh.pop %v1023
        %v1034 = vmul.f32 %v1024, 0.5
        %v1035 = vtanh.pop %v1034
        %v1036 = vmul.f32 %v1035, 0.5
        %v1037 = vadd.f32 %v1036, 0.5
        %v1038 = vmul.f32 %v1032, %v739
        %v1039 = vmul.f32 %v1028, %v1033
        %v1040 = vadd.f32 %v1038, %v1039
        %v1041 = vtanh.pop %v1040
        %v1042 = vmul.f32 %v1037, %v1041
        %s1043 = scalar_lea.vmem [#allocation2], 16
        %v1044 = vld [vmem:[%s1043] sm:$0xff]
        %v1045 = vld [vmem:[%s1043 + $0x8] sm:$0xff]
        %v1046 = vunpack.c.l.bf16 %v1044
        %v1047 = vunpack.c.h.bf16 %v1044
        %v1048 = vunpack.c.l.bf16 %v1045
        %v1049 = vunpack.c.h.bf16 %v1045
        %v1050 = vpack.c.bf16 %v1042, %v1042
        %1051 = vmatprep.subr.bf16.mxu0 %v876
        %1052 = vmatpush1.bf16.msra.mxu0 %v875
        %1053 = vmatprep.subr.bf16.mxu0 %v880
        %1054 = vmatpush1.bf16.msra.mxu0 %v879
        %1055 = vmatprep.subr.bf16.mxu0 %v884
        %1056 = vmatpush1.bf16.msra.mxu0 %v883
        %1057 = vmatprep.subr.bf16.mxu0 %v888
        %1058 = vmatpush1.bf16.msra.mxu0 %v887
        %1059 = vmatprep.subr.bf16.mxu0 %v892
        %1060 = vmatpush1.bf16.msra.mxu0 %v891
        %1061 = vmatprep.subr.bf16.mxu0 %v896
        %1062 = vmatpush1.bf16.msra.mxu0 %v895
        %1063 = vmatprep.subr.bf16.mxu0 %v900
        %1064 = vmatpush1.bf16.msra.mxu0 %v899
        %1065 = vmatprep.subr.bf16.mxu0 %v904
        %1066 = vmatpush1.bf16.msra.mxu0 %v903
        %1067 = vmatprep.subr.bf16.mxu0 0
        %1068 = vmatpush1.bf16.msra.mxu0 0
        %1069 = vmatprep.subr.bf16.mxu0 0
        %1070 = vmatpush1.bf16.msra.mxu0 0
        %1071 = vmatprep.subr.bf16.mxu0 0
        %1072 = vmatpush1.bf16.msra.mxu0 0
        %1073 = vmatprep.subr.bf16.mxu0 0
        %1074 = vmatpush1.bf16.msra.mxu0 0
        %1075 = vmatprep.subr.bf16.mxu0 0
        %1076 = vmatpush1.bf16.msra.mxu0 0
        %1077 = vmatprep.subr.bf16.mxu0 0
        %1078 = vmatpush1.bf16.msra.mxu0 0
        %1079 = vmatprep.subr.bf16.mxu0 0
        %1080 = vmatpush1.bf16.msra.mxu0 0
        %1081 = vmatprep.subr.bf16.mxu0 0
        %1082 = vmatpush1.bf16.msra.mxu0 0
        %1083 = vmatprep.mubr.bf16.mxu0 0
        %1084 = vmatmul.mubr.bf16.gmra.mrb[0].mxu0 %v1050
        %v1085 = vpop.f32.mrb[0].mxu0
        %v1086 = vadd.f32 0.0, %v1085
        %v1087 = vpop.f32.mrb[0].mxu0
        %v1088 = vadd.f32 0.0, %v1087
        %v1089 = vpop.f32.mrb[0].mxu0
        %v1090 = vpop.f32.mrb[0].mxu0
        %1091 = vdwg.mxu0
        %1092 = vmatprep.subr.bf16.mxu0 %v878
        %1093 = vmatpush1.bf16.msra.mxu0 %v877
        %1094 = vmatprep.subr.bf16.mxu0 %v882
        %1095 = vmatpush1.bf16.msra.mxu0 %v881
        %1096 = vmatprep.subr.bf16.mxu0 %v886
        %1097 = vmatpush1.bf16.msra.mxu0 %v885
        %1098 = vmatprep.subr.bf16.mxu0 %v890
        %1099 = vmatpush1.bf16.msra.mxu0 %v889
        %1100 = vmatprep.subr.bf16.mxu0 %v894
        %1101 = vmatpush1.bf16.msra.mxu0 %v893
        %1102 = vmatprep.subr.bf16.mxu0 %v898
        %1103 = vmatpush1.bf16.msra.mxu0 %v897
        %1104 = vmatprep.subr.bf16.mxu0 %v902
        %1105 = vmatpush1.bf16.msra.mxu0 %v901
        %1106 = vmatprep.subr.bf16.mxu0 %v906
        %1107 = vmatpush1.bf16.msra.mxu0 %v905
        %1108 = vmatprep.subr.bf16.mxu0 0
        %1109 = vmatpush1.bf16.msra.mxu0 0
        %1110 = vmatprep.subr.bf16.mxu0 0
        %1111 = vmatpush1.bf16.msra.mxu0 0
        %1112 = vmatprep.subr.bf16.mxu0 0
        %1113 = vmatpush1.bf16.msra.mxu0 0
        %1114 = vmatprep.subr.bf16.mxu0 0
        %1115 = vmatpush1.bf16.msra.mxu0 0
        %1116 = vmatprep.subr.bf16.mxu0 0
        %1117 = vmatpush1.bf16.msra.mxu0 0
        %1118 = vmatprep.subr.bf16.mxu0 0
        %1119 = vmatpush1.bf16.msra.mxu0 0
        %1120 = vmatprep.subr.bf16.mxu0 0
        %1121 = vmatpush1.bf16.msra.mxu0 0
        %1122 = vmatprep.subr.bf16.mxu0 0
        %1123 = vmatpush1.bf16.msra.mxu0 0
        %1124 = vmatprep.mubr.bf16.mxu0 0
        %1125 = vmatmul.mubr.bf16.gmra.mrb[0].mxu0 %v1050
        %v1126 = vpop.f32.mrb[0].mxu0
        %v1127 = vadd.f32 0.0, %v1126
        %v1128 = vpop.f32.mrb[0].mxu0
        %v1129 = vadd.f32 0.0, %v1128
        %v1130 = vpop.f32.mrb[0].mxu0
        %v1131 = vpop.f32.mrb[0].mxu0
        %1132 = vdwg.mxu0
        %v1133 = vadd.f32 %v1046, %v1086
        %v1134 = vadd.f32 %v1047, %v1088
        %v1135 = vadd.f32 %v1048, %v1127
        %v1136 = vadd.f32 %v1049, %v1129
        %v1137 = vmul.f32 %v1133, 0.5
        %v1138 = vtanh.pop %v1137
        %v1139 = vmul.f32 %v1138, 0.5
        %v1140 = vadd.f32 %v1139, 0.5
        %v1141 = vmul.f32 %v1134, 0.5
        %v1142 = vtanh.pop %v1141
        %v1143 = vmul.f32 %v1142, 0.5
        %v1144 = vadd.f32 %v1143, 0.5
        %v1145 = vtanh.pop %v1135
        %v1146 = vmul.f32 %v1136, 0.5
        %v1147 = vtanh.pop %v1146
        %v1148 = vmul.f32 %v1147, 0.5
        %v1149 = vadd.f32 %v1148, 0.5
        %v1150 = vmul.f32 %v1144, %v1040
        %v1151 = vmul.f32 %v1140, %v1145
        %v1152 = vadd.f32 %v1150, %v1151
        %v1153 = vtanh.pop %v1152
        %v1154 = vmul.f32 %v1149, %v1153
        %s1155 = scalar_lea.vmem [#allocation2], 32
        %v1156 = vld [vmem:[%s1155] sm:$0xff]
        %v1157 = vld [vmem:[%s1155 + $0x8] sm:$0xff]
        %v1158 = vunpack.c.l.bf16 %v1156
        %v1159 = vunpack.c.h.bf16 %v1156
        %v1160 = vunpack.c.l.bf16 %v1157
        %v1161 = vunpack.c.h.bf16 %v1157
        %v1162 = vpack.c.bf16 %v1154, %v1154
        %1163 = vmatprep.subr.bf16.mxu0 %v876
        %1164 = vmatpush1.bf16.msra.mxu0 %v875
        %1165 = vmatprep.subr.bf16.mxu0 %v880
        %1166 = vmatpush1.bf16.msra.mxu0 %v879
        %1167 = vmatprep.subr.bf16.mxu0 %v884
        %1168 = vmatpush1.bf16.msra.mxu0 %v883
        %1169 = vmatprep.subr.bf16.mxu0 %v888
        %1170 = vmatpush1.bf16.msra.mxu0 %v887
        %1171 = vmatprep.subr.bf16.mxu0 %v892
        %1172 = vmatpush1.bf16.msra.mxu0 %v891
        %1173 = vmatprep.subr.bf16.mxu0 %v896
        %1174 = vmatpush1.bf16.msra.mxu0 %v895
        %1175 = vmatprep.subr.bf16.mxu0 %v900
        %1176 = vmatpush1.bf16.msra.mxu0 %v899
        %1177 = vmatprep.subr.bf16.mxu0 %v904
        %1178 = vmatpush1.bf16.msra.mxu0 %v903
        %1179 = vmatprep.subr.bf16.mxu0 0
        %1180 = vmatpush1.bf16.msra.mxu0 0
        %1181 = vmatprep.subr.bf16.mxu0 0
        %1182 = vmatpush1.bf16.msra.mxu0 0
        %1183 = vmatprep.subr.bf16.mxu0 0
        %1184 = vmatpush1.bf16.msra.mxu0 0
        %1185 = vmatprep.subr.bf16.mxu0 0
        %1186 = vmatpush1.bf16.msra.mxu0 0
        %1187 = vmatprep.subr.bf16.mxu0 0
        %1188 = vmatpush1.bf16.msra.mxu0 0
        %1189 = vmatprep.subr.bf16.mxu0 0
        %1190 = vmatpush1.bf16.msra.mxu0 0
        %1191 = vmatprep.subr.bf16.mxu0 0
        %1192 = vmatpush1.bf16.msra.mxu0 0
        %1193 = vmatprep.subr.bf16.mxu0 0
        %1194 = vmatpush1.bf16.msra.mxu0 0
        %1195 = vmatprep.mubr.bf16.mxu0 0
        %1196 = vmatmul.mubr.bf16.gmra.mrb[0].mxu0 %v1162
        %v1197 = vpop.f32.mrb[0].mxu0
        %v1198 = vadd.f32 0.0, %v1197
        %v1199 = vpop.f32.mrb[0].mxu0
        %v1200 = vadd.f32 0.0, %v1199
        %v1201 = vpop.f32.mrb[0].mxu0
        %v1202 = vpop.f32.mrb[0].mxu0
        %1203 = vdwg.mxu0
        %1204 = vmatprep.subr.bf16.mxu0 %v878
        %1205 = vmatpush1.bf16.msra.mxu0 %v877
        %1206 = vmatprep.subr.bf16.mxu0 %v882
        %1207 = vmatpush1.bf16.msra.mxu0 %v881
        %1208 = vmatprep.subr.bf16.mxu0 %v886
        %1209 = vmatpush1.bf16.msra.mxu0 %v885
        %1210 = vmatprep.subr.bf16.mxu0 %v890
        %1211 = vmatpush1.bf16.msra.mxu0 %v889
        %1212 = vmatprep.subr.bf16.mxu0 %v894
        %1213 = vmatpush1.bf16.msra.mxu0 %v893
        %1214 = vmatprep.subr.bf16.mxu0 %v898
        %1215 = vmatpush1.bf16.msra.mxu0 %v897
        %1216 = vmatprep.subr.bf16.mxu0 %v902
        %1217 = vmatpush1.bf16.msra.mxu0 %v901
        %1218 = vmatprep.subr.bf16.mxu0 %v906
        %1219 = vmatpush1.bf16.msra.mxu0 %v905
        %1220 = vmatprep.subr.bf16.mxu0 0
        %1221 = vmatpush1.bf16.msra.mxu0 0
        %1222 = vmatprep.subr.bf16.mxu0 0
        %1223 = vmatpush1.bf16.msra.mxu0 0
        %1224 = vmatprep.subr.bf16.mxu0 0
        %1225 = vmatpush1.bf16.msra.mxu0 0
        %1226 = vmatprep.subr.bf16.mxu0 0
        %1227 = vmatpush1.bf16.msra.mxu0 0
        %1228 = vmatprep.subr.bf16.mxu0 0
        %1229 = vmatpush1.bf16.msra.mxu0 0
        %1230 = vmatprep.subr.bf16.mxu0 0
        %1231 = vmatpush1.bf16.msra.mxu0 0
        %1232 = vmatprep.subr.bf16.mxu0 0
        %1233 = vmatpush1.bf16.msra.mxu0 0
        %1234 = vmatprep.subr.bf16.mxu0 0
        %1235 = vmatpush1.bf16.msra.mxu0 0
        %1236 = vmatprep.mubr.bf16.mxu0 0
        %1237 = vmatmul.mubr.bf16.gmra.mrb[0].mxu0 %v1162
        %v1238 = vpop.f32.mrb[0].mxu0
        %v1239 = vadd.f32 0.0, %v1238
        %v1240 = vpop.f32.mrb[0].mxu0
        %v1241 = vadd.f32 0.0, %v1240
        %v1242 = vpop.f32.mrb[0].mxu0
        %v1243 = vpop.f32.mrb[0].mxu0
        %1244 = vdwg.mxu0
        %v1245 = vadd.f32 %v1158, %v1198
        %v1246 = vadd.f32 %v1159, %v1200
        %v1247 = vadd.f32 %v1160, %v1239
        %v1248 = vadd.f32 %v1161, %v1241
        %v1249 = vmul.f32 %v1245, 0.5
        %v1250 = vtanh.pop %v1249
        %v1251 = vmul.f32 %v1250, 0.5
        %v1252 = vadd.f32 %v1251, 0.5
        %v1253 = vmul.f32 %v1246, 0.5
        %v1254 = vtanh.pop %v1253
        %v1255 = vmul.f32 %v1254, 0.5
        %v1256 = vadd.f32 %v1255, 0.5
        %v1257 = vtanh.pop %v1247
        %v1258 = vmul.f32 %v1248, 0.5
        %v1259 = vtanh.pop %v1258
        %v1260 = vmul.f32 %v1259, 0.5
        %v1261 = vadd.f32 %v1260, 0.5
        %v1262 = vmul.f32 %v1256, %v1152
        %v1263 = vmul.f32 %v1252, %v1257
        %v1264 = vadd.f32 %v1262, %v1263
        %v1265 = vtanh.pop %v1264
        %v1266 = vmul.f32 %v1261, %v1265
        %s1267 = scalar_lea.vmem [#allocation2], 48
        %v1268 = vld [vmem:[%s1267] sm:$0xff]
        %v1269 = vld [vmem:[%s1267 + $0x8] sm:$0xff]
        %v1270 = vunpack.c.l.bf16 %v1268
        %v1271 = vunpack.c.h.bf16 %v1268
        %v1272 = vunpack.c.l.bf16 %v1269
        %v1273 = vunpack.c.h.bf16 %v1269
        %v1274 = vpack.c.bf16 %v1266, %v1266
        %1275 = vmatprep.subr.bf16.mxu0 %v876
        %1276 = vmatpush1.bf16.msra.mxu0 %v875
        %1277 = vmatprep.subr.bf16.mxu0 %v880
        %1278 = vmatpush1.bf16.msra.mxu0 %v879
        %1279 = vmatprep.subr.bf16.mxu0 %v884
        %1280 = vmatpush1.bf16.msra.mxu0 %v883
        %1281 = vmatprep.subr.bf16.mxu0 %v888
        %1282 = vmatpush1.bf16.msra.mxu0 %v887
        %1283 = vmatprep.subr.bf16.mxu0 %v892
        %1284 = vmatpush1.bf16.msra.mxu0 %v891
        %1285 = vmatprep.subr.bf16.mxu0 %v896
        %1286 = vmatpush1.bf16.msra.mxu0 %v895
        %1287 = vmatprep.subr.bf16.mxu0 %v900
        %1288 = vmatpush1.bf16.msra.mxu0 %v899
        %1289 = vmatprep.subr.bf16.mxu0 %v904
        %1290 = vmatpush1.bf16.msra.mxu0 %v903
        %1291 = vmatprep.subr.bf16.mxu0 0
        %1292 = vmatpush1.bf16.msra.mxu0 0
        %1293 = vmatprep.subr.bf16.mxu0 0
        %1294 = vmatpush1.bf16.msra.mxu0 0
        %1295 = vmatprep.subr.bf16.mxu0 0
        %1296 = vmatpush1.bf16.msra.mxu0 0
        %1297 = vmatprep.subr.bf16.mxu0 0
        %1298 = vmatpush1.bf16.msra.mxu0 0
        %1299 = vmatprep.subr.bf16.mxu0 0
        %1300 = vmatpush1.bf16.msra.mxu0 0
        %1301 = vmatprep.subr.bf16.mxu0 0
        %1302 = vmatpush1.bf16.msra.mxu0 0
        %1303 = vmatprep.subr.bf16.mxu0 0
        %1304 = vmatpush1.bf16.msra.mxu0 0
        %1305 = vmatprep.subr.bf16.mxu0 0
        %1306 = vmatpush1.bf16.msra.mxu0 0
        %1307 = vmatprep.mubr.bf16.mxu0 0
        %1308 = vmatmul.mubr.bf16.gmra.mrb[0].mxu0 %v1274
        %v1309 = vpop.f32.mrb[0].mxu0
        %v1310 = vadd.f32 0.0, %v1309
        %v1311 = vpop.f32.mrb[0].mxu0
        %v1312 = vadd.f32 0.0, %v1311
        %v1313 = vpop.f32.mrb[0].mxu0
        %v1314 = vpop.f32.mrb[0].mxu0
        %1315 = vdwg.mxu0
        %1316 = vmatprep.subr.bf16.mxu0 %v878
        %1317 = vmatpush1.bf16.msra.mxu0 %v877
        %1318 = vmatprep.subr.bf16.mxu0 %v882
        %1319 = vmatpush1.bf16.msra.mxu0 %v881
        %1320 = vmatprep.subr.bf16.mxu0 %v886
        %1321 = vmatpush1.bf16.msra.mxu0 %v885
        %1322 = vmatprep.subr.bf16.mxu0 %v890
        %1323 = vmatpush1.bf16.msra.mxu0 %v889
        %1324 = vmatprep.subr.bf16.mxu0 %v894
        %1325 = vmatpush1.bf16.msra.mxu0 %v893
        %1326 = vmatprep.subr.bf16.mxu0 %v898
        %1327 = vmatpush1.bf16.msra.mxu0 %v897
        %1328 = vmatprep.subr.bf16.mxu0 %v902
        %1329 = vmatpush1.bf16.msra.mxu0 %v901
        %1330 = vmatprep.subr.bf16.mxu0 %v906
        %1331 = vmatpush1.bf16.msra.mxu0 %v905
        %1332 = vmatprep.subr.bf16.mxu0 0
        %1333 = vmatpush1.bf16.msra.mxu0 0
        %1334 = vmatprep.subr.bf16.mxu0 0
        %1335 = vmatpush1.bf16.msra.mxu0 0
        %1336 = vmatprep.subr.bf16.mxu0 0
        %1337 = vmatpush1.bf16.msra.mxu0 0
        %1338 = vmatprep.subr.bf16.mxu0 0
        %1339 = vmatpush1.bf16.msra.mxu0 0
        %1340 = vmatprep.subr.bf16.mxu0 0
        %1341 = vmatpush1.bf16.msra.mxu0 0
        %1342 = vmatprep.subr.bf16.mxu0 0
        %1343 = vmatpush1.bf16.msra.mxu0 0
        %1344 = vmatprep.subr.bf16.mxu0 0
        %1345 = vmatpush1.bf16.msra.mxu0 0
        %1346 = vmatprep.subr.bf16.mxu0 0
        %1347 = vmatpush1.bf16.msra.mxu0 0
        %1348 = vmatprep.mubr.bf16.mxu0 0
        %1349 = vmatmul.mubr.bf16.gmra.mrb[0].mxu0 %v1274
        %v1350 = vpop.f32.mrb[0].mxu0
        %v1351 = vadd.f32 0.0, %v1350
        %v1352 = vpop.f32.mrb[0].mxu0
        %v1353 = vadd.f32 0.0, %v1352
        %v1354 = vpop.f32.mrb[0].mxu0
        %v1355 = vpop.f32.mrb[0].mxu0
        %1356 = vdwg.mxu0
        %v1357 = vadd.f32 %v1270, %v1310
        %v1358 = vadd.f32 %v1271, %v1312
        %v1359 = vadd.f32 %v1272, %v1351
        %v1360 = vadd.f32 %v1273, %v1353
        %v1361 = vmul.f32 %v1357, 0.5
        %v1362 = vtanh.pop %v1361
        %v1363 = vmul.f32 %v1362, 0.5
        %v1364 = vadd.f32 %v1363, 0.5
        %v1365 = vmul.f32 %v1358, 0.5
        %v1366 = vtanh.pop %v1365
        %v1367 = vmul.f32 %v1366, 0.5
        %v1368 = vadd.f32 %v1367, 0.5
        %v1369 = vtanh.pop %v1359
        %v1370 = vmul.f32 %v1360, 0.5
        %v1371 = vtanh.pop %v1370
        %v1372 = vmul.f32 %v1371, 0.5
        %v1373 = vadd.f32 %v1372, 0.5
        %v1374 = vmul.f32 %v1368, %v1264
        %v1375 = vmul.f32 %v1364, %v1369
        %v1376 = vadd.f32 %v1374, %v1375
        %v1377 = vtanh.pop %v1376
        %v1378 = vmul.f32 %v1373, %v1377
        %1379 = vst [vmem:[#allocation3] sm:$0xff] %v1378
        %1380 = vst [vmem:[#allocation4] sm:$0xff] %v1376
        %p1381 = scmp.eq.s32.totalorder %s28, 1
        // Predicated region
        $region65: #{tpu_custom_call.1} parent=43 // pred_check
          %p1382 = pneg %p1381
        $region66: #{tpu_custom_call.1} parent=43 // pred_check_branch
          %1384 = sbr.rel (%p1382) target = $region68
        $region67: #{tpu_custom_call.1} parent=43 // pred_region
          %v1385 = vpack.c.bf16 %v1378, %v1378
          %v1386 = vld [vmem:[#allocation11] sm:$0xf]
          %v1387 = vld [vmem:[#allocation11 + $0x4] sm:$0xf]
          %v1388 = vld [vmem:[#allocation11 + $0x8] sm:$0xf]
          %v1389 = vld [vmem:[#allocation11 + $0xc] sm:$0xf]
          %v1390 = vld [vmem:[#allocation11 + $0x10] sm:$0xf]
          %v1391 = vld [vmem:[#allocation11 + $0x14] sm:$0xf]
          %v1392 = vld [vmem:[#allocation11 + $0x18] sm:$0xf]
          %v1393 = vld [vmem:[#allocation11 + $0x1c] sm:$0xf]
          %v1394 = vld [vmem:[#allocation11 + $0x20] sm:$0xf]
          %v1395 = vld [vmem:[#allocation11 + $0x24] sm:$0xf]
          %v1396 = vld [vmem:[#allocation11 + $0x28] sm:$0xf]
          %v1397 = vld [vmem:[#allocation11 + $0x2c] sm:$0xf]
          %v1398 = vld [vmem:[#allocation11 + $0x30] sm:$0xf]
          %v1399 = vld [vmem:[#allocation11 + $0x34] sm:$0xf]
          %v1400 = vld [vmem:[#allocation11 + $0x38] sm:$0xf]
          %v1401 = vld [vmem:[#allocation11 + $0x3c] sm:$0xf]
          %v1402 = vld [vmem:[%s5] sm:$0x1]
          %v1404 = vlaneseq
          %v1405 = vshrl.u32 %v1404, 7
          %v1406 = vsub.s32 0, %v1405
          %v1407 = vrot.slane %v1402, %v1406
          %v1425 = vunpack.c.l.b16 %v1386
          %v1426 = vunpack.c.l.b16 %v1387
          %v1427 = vunpack.c.l.b16 %v1388
          %v1428 = vunpack.c.l.b16 %v1389
          %v1429 = vunpack.c.l.b16 %v1390
          %v1430 = vunpack.c.l.b16 %v1391
          %v1431 = vunpack.c.l.b16 %v1392
          %v1432 = vunpack.c.l.b16 %v1393
          %v1433 = vunpack.c.l.b16 %v1394
          %v1434 = vunpack.c.l.b16 %v1395
          %v1435 = vunpack.c.l.b16 %v1396
          %v1436 = vunpack.c.l.b16 %v1397
          %v1437 = vunpack.c.l.b16 %v1398
          %v1438 = vunpack.c.l.b16 %v1399
          %v1439 = vunpack.c.l.b16 %v1400
          %v1440 = vunpack.c.l.b16 %v1401
          %v1441 = vpack.c.b16 %v1426, %v1425
          %v1442 = vpack.c.b16 %v1428, %v1427
          %v1443 = vpack.c.b16 %v1430, %v1429
          %v1444 = vpack.c.b16 %v1432, %v1431
          %v1445 = vpack.c.b16 %v1434, %v1433
          %v1446 = vpack.c.b16 %v1436, %v1435
          %v1447 = vpack.c.b16 %v1438, %v1437
          %v1448 = vpack.c.b16 %v1440, %v1439
          %1457 = vmatprep.subr.bf16.mxu0 0
          %1458 = vmatpush1.bf16.msra.mxu0 %v1441
          %1459 = vmatprep.subr.bf16.mxu0 0
          %1460 = vmatpush1.bf16.msra.mxu0 %v1442
          %1461 = vmatprep.subr.bf16.mxu0 0
          %1462 = vmatpush1.bf16.msra.mxu0 %v1443
          %1463 = vmatprep.subr.bf16.mxu0 0
          %1464 = vmatpush1.bf16.msra.mxu0 %v1444
          %1465 = vmatprep.subr.bf16.mxu0 0
          %1466 = vmatpush1.bf16.msra.mxu0 %v1445
          %1467 = vmatprep.subr.bf16.mxu0 0
          %1468 = vmatpush1.bf16.msra.mxu0 %v1446
          %1469 = vmatprep.subr.bf16.mxu0 0
          %1470 = vmatpush1.bf16.msra.mxu0 %v1447
          %1471 = vmatprep.subr.bf16.mxu0 0
          %1472 = vmatpush1.bf16.msra.mxu0 %v1448
          %1473 = vmatprep.subr.bf16.mxu0 0
          %1474 = vmatpush1.bf16.msra.mxu0 0
          %1475 = vmatprep.subr.bf16.mxu0 0
          %1476 = vmatpush1.bf16.msra.mxu0 0
          %1477 = vmatprep.subr.bf16.mxu0 0
          %1478 = vmatpush1.bf16.msra.mxu0 0
          %1479 = vmatprep.subr.bf16.mxu0 0
          %1480 = vmatpush1.bf16.msra.mxu0 0
          %1481 = vmatprep.subr.bf16.mxu0 0
          %1482 = vmatpush1.bf16.msra.mxu0 0
          %1483 = vmatprep.subr.bf16.mxu0 0
          %1484 = vmatpush1.bf16.msra.mxu0 0
          %1485 = vmatprep.subr.bf16.mxu0 0
          %1486 = vmatpush1.bf16.msra.mxu0 0
          %1487 = vmatprep.subr.bf16.mxu0 0
          %1488 = vmatpush1.bf16.msra.mxu0 0
          %1489 = vmatprep.mubr.bf16.mxu0 0
          %1490 = vmatmul.mubr.bf16.gmra.mrb[0].mxu0 %v1385
          %v1491 = vpop.f32.mrb[0].mxu0
          %v1492 = vadd.f32 %v1407, %v1491
          %v1493 = vpop.f32.mrb[0].mxu0
          %v1494 = vpop.f32.mrb[0].mxu0
          %v1495 = vpop.f32.mrb[0].mxu0
          %1496 = vdwg.mxu0
          %1497 = vst [vmem:[#allocation13] sm:$0xff] %v1492
        $region68: #{tpu_custom_call.1} parent=43 // pred_fallthru
          _
        // Predicated region
        $region69: #{tpu_custom_call.1} parent=43 // pred_check
          %p1498 = pneg %p186
        $region70: #{tpu_custom_call.1} parent=43 // pred_check_branch
          %1500 = sbr.rel (%p1498) target = $region72
        $region71: #{tpu_custom_call.1} parent=43 // pred_region
          %s1502 = ssub.s32 128, 128
          %1503 = vsyncadd [#allocation7], %s1502
          %s1504 = smul.addr %s27, 128
          %s1505 = scalar_lea.hbm %s6, %s1504
          %s1507 = sshll.u32 [#allocation13], 4
          %s1508 = int_to_ptr.vmem [resolvable:$true] %s1507
          %1510 = dma.vmem_to_hbm [thread:$0]  %s1508, 128, %s1505, [#allocation7]
        $region72: #{tpu_custom_call.1} parent=43 // pred_fallthru
          _
        // Predicated region
        $region73: #{tpu_custom_call.1} parent=43 // pred_check
          %p1511 = pneg %p186
        $region74: #{tpu_custom_call.1} parent=43 // pred_check_branch
          %1513 = sbr.rel (%p1511) target = $region76
        $region75: #{tpu_custom_call.1} parent=43 // pred_region
          %1514 = dma.done [#allocation7], 128
        $region76: #{tpu_custom_call.1} parent=43 // pred_fallthru
          _
      $region44: #{tpu_custom_call.1} parent=5 // pred_fallthru
        _
      %p1515 = scmp.le.s32.totalorder 2, %s18
      // Predicated region
      $region77: #{tpu_custom_call.1} parent=5 // pred_check
        %p1516 = pneg %p1515
      $region78: #{tpu_custom_call.1} parent=5 // pred_check_branch
        %1518 = sbr.rel (%p1516) target = $region80
      $region79: #{tpu_custom_call.1} parent=5 // pred_region
        %s1519 = ssub.s32 %s18, 2
      $region80: #{tpu_custom_call.1} parent=5 // pred_fallthru
        _
    $region6: #{tpu_custom_call.1} parent=1 // loop_footer
      %s22 = sadd.s32 1, %s18
    $region7: #{tpu_custom_call.1} parent=1 // loop_footer_branch
      %17 = sbr.rel target = $region3
    $region8: #{tpu_custom_call.1} parent=1 // loop_exit
      _
    %1520 = vsyncpa [#allocation6], 1
    %s1521 = scalar_lea.sflag [#allocation6], 1
    %1522 = vsyncpa %s1521, 1
    %1523 = vsyncpa [#allocation9], 1
    %1524 = vsyncpa [#allocation12], 1
    %1525 = vsyncpa [#allocation7], 1
    %s1526 = scalar_lea.sflag [#allocation7], 1
    %1527 = vsyncpa %s1526, 1

// kernel: tpu_custom_call.1
$region0: #{tpu_custom_call.1}
  #allocation0 [shape = 'u32[]', space=smem, size = 0x4, offset = 0x4, fixed_abs, tag = 'smem constant byte address 0x4 - core index']
  #allocation1 [shape = 'u32[144,128]{1,0:T(1,128)}', space=vmem, size = 0x12000, scoped, tag = 'internal scratch']
  #allocation2 [shape = 'bf16[4,8,512]{2,1,0:T(8,128)(2,1)}', space=vmem, size = 0x8000, scoped, tag = 'scratch operand']
  #allocation3 [shape = 'f32[8,128]{1,0:T(8,128)}', space=vmem, size = 0x1000, scoped, tag = 'scratch operand']
  #allocation4 [shape = 'f32[8,128]{1,0:T(8,128)}', space=vmem, size = 0x1000, scoped, tag = 'scratch operand']
  %s0 = inlined_call_operand.hbm [shape: bf16[8,8,128], index: 0, kind: input, shape index: {}]
  %s1 = inlined_call_operand.hbm [shape: bf16[128,512], index: 1, kind: input, shape index: {}]
  %s2 = inlined_call_operand.hbm [shape: bf16[128,512], index: 2, kind: input, shape index: {}]
  %s3 = inlined_call_operand.vmem [shape: f32[1,512], index: 3, kind: input, shape index: {}]
  %s4 = inlined_call_operand.hbm [shape: bf16[128,128], index: 4, kind: input, shape index: {}]
  %s5 = inlined_call_operand.vmem [shape: f32[1,128], index: 5, kind: input, shape index: {}]
  %s6 = inlined_call_operand.hbm [shape: f32[8,128], index: 6, kind: output, shape index: {}]
  %s7 = sld [smem:[#allocation0]]
  $region81: #{tpu_custom_call.1} parent=0
    _
  %s9 = ssub.s32 1, %s7
  %s10 = scalar_select 0, %s9, %s7
  $region1: #{tpu_custom_call.1} parent=0
    #allocation5 [shape = 'u8[16384]{0}', space=vmem, size = 0x4000, scoped, tag = 'input window, operand 0']
    #allocation6 [shape = 's32[2]{0}', space=sflag, size = 0x8, scoped, tag = 'scoped memory for tpu_custom_call.1']
    #allocation7 [shape = 's32[2]{0}', space=sflag, size = 0x8, scoped, tag = 'scoped memory for tpu_custom_call.1']
    #allocation8 [shape = 'u8[131072]{0}', space=vmem, size = 0x20000, scoped, tag = 'input window, operand 1, single buffered']
    #allocation9 [shape = 's32[1]{0}', space=sflag, size = 0x4, scoped, tag = 'scoped memory for tpu_custom_call.1']
    #allocation10 [shape = 'u8[131072]{0}', space=vmem, size = 0x20000, scoped, tag = 'input window, operand 2, single buffered']
    #allocation11 [shape = 'u8[32768]{0}', space=vmem, size = 0x8000, scoped, tag = 'input window, operand 4, single buffered']
    #allocation12 [shape = 's32[1]{0}', space=sflag, size = 0x4, scoped, tag = 'scoped memory for tpu_custom_call.1']
    #allocation13 [shape = 'u8[4096]{0}', space=vmem, size = 0x1000, scoped, tag = 'output window, operand 0, single buffered']
    %11 = vsyncpa [#allocation6], 0
    %s12 = scalar_lea.sflag [#allocation6], 1
    %13 = vsyncpa %s12, 0
    %14 = vsyncpa [#allocation9], 0
    %15 = vsyncpa [#allocation12], 0
    %16 = vsyncpa [#allocation7], 0
    loop: start=0, step=1, limit=4
    $region2: #{tpu_custom_call.1} parent=1 // loop_pre_header
      _
    $region3: #{tpu_custom_call.1} parent=1 // loop_header
      %s18 = sphi 0, %s22
      %p19 = scmp.ge.s32.totalorder %s18, 4
      %s25 = sphi 0, %s37
      %s26 = sphi 0, %s33
      %s27 = sphi 0, %s25
      %s28 = sphi 0, %s26
      %s29 = sphi 0, %s27
      %s30 = sphi 0, %s28
      %s42 = sphi 0, %s44
      %s45 = sphi 0, %s42
      %s46 = sphi 0, %s45
      %s62 = sphi 0, %s46
      %s66 = sphi 0, %s66
      %s68 = sphi 0, %s66
      %s69 = sphi 0, %s68
      %s83 = sphi 0, %s69
      %s87 = sphi 0, %s87
      %s89 = sphi 0, %s87
      %s90 = sphi 0, %s89
      %s104 = sphi 0, %s90
      %s108 = sphi 0, %s108
      %s110 = sphi 0, %s108
      %s111 = sphi 0, %s110
      %s125 = sphi 0, %s111
      %s129 = sphi 0, %s129
      %s131 = sphi 0, %s129
      %s132 = sphi 0, %s131
      %s146 = sphi 0, %s132
      %s150 = sphi 0, %s150
      %s152 = sphi 0, %s150
      %s153 = sphi 0, %s152
      %s167 = sphi 0, %s153
      %s173 = sphi 0, %s175
      %s176 = sphi 0, %s173
      %s177 = sphi 0, %s176
      %s193 = sphi 0, %s177
    $region4: #{tpu_custom_call.1} parent=1 // loop_header_branch
      %21 = sbr.rel (%p19) target = $region8
    $region5: #{tpu_custom_call.1} parent=1 // loop_body
      %s23 = ssub.s32 %s18, 1
      %s24 = ssub.s32 %s18, 2
      %s31 = sadd.s32 1, %s26
      %p32 = scmp.ge.s32.totalorder %s31, 2
      %s33 = scalar_select %p32, 0, %s31
      %s34 = sadd.s32 1, %s25
      %s35 = scalar_select %p32, %s34, %s25
      %p36 = scmp.ge.s32.totalorder %s35, 1
      %s37 = scalar_select %p36, 0, %s35
      %s38 = ssub.s32 %s26, %s33
      %s39 = ssub.s32 %s25, %s37
      %s40 = sor.u32 %s38, %s39
      %p41 = scmp.eq.s32.totalorder %s40, 0
      %s43 = sadd.s32 %s42, 1
      %s44 = scalar_select %p41, %s42, %s43
      %p47 = pneg %p41
      %p48 = scmp.eq.s32.totalorder %s18, 1
      %p49 = por %p47, %p48
      %p50 = scmp.ne.s32.totalorder %s42, %s45
      %p51 = scmp.eq.s32.totalorder %s18, 0
      %p52 = por %p50, %p51
      %p53 = scmp.ne.s32.totalorder %s42, %s45
      %p54 = scmp.eq.s32.totalorder %s23, 1
      %p55 = por %p53, %p54
      %p56 = scmp.ne.s32.totalorder %s45, %s46
      %p57 = scmp.eq.s32.totalorder %s23, 0
      %p58 = por %p56, %p57
      %p59 = scmp.ne.s32.totalorder %s45, %s46
      %p60 = scmp.eq.s32.totalorder %s24, 1
      %p61 = por %p59, %p60
      %p63 = scmp.ne.s32.totalorder %s46, %s62
      %p64 = scmp.eq.s32.totalorder %s24, 0
      %p65 = por %p63, %p64
      %s67 = sadd.s32 %s66, 1
      %p70 = scmp.eq.s32.totalorder %s18, 1
      %p71 = scmp.ne.s32.totalorder %s66, %s68
      %p72 = scmp.eq.s32.totalorder %s18, 0
      %p73 = por %p71, %p72
      %p74 = scmp.ne.s32.totalorder %s66, %s68
      %p75 = scmp.eq.s32.totalorder %s23, 1
      %p76 = por %p74, %p75
      %p77 = scmp.ne.s32.totalorder %s68, %s69
      %p78 = scmp.eq.s32.totalorder %s23, 0
      %p79 = por %p77, %p78
      %p80 = scmp.ne.s32.totalorder %s68, %s69
      %p81 = scmp.eq.s32.totalorder %s24, 1
      %p82 = por %p80, %p81
      %p84 = scmp.ne.s32.totalorder %s69, %s83
      %p85 = scmp.eq.s32.totalorder %s24, 0
      %p86 = por %p84, %p85
      %s88 = sadd.s32 %s87, 1
      %p91 = scmp.eq.s32.totalorder %s18, 1
      %p92 = scmp.ne.s32.totalorder %s87, %s89
      %p93 = scmp.eq.s32.totalorder %s18, 0
      %p94 = por %p92, %p93
      %p95 = scmp.ne.s32.totalorder %s87, %s89
      %p96 = scmp.eq.s32.totalorder %s23, 1
      %p97 = por %p95, %p96
      %p98 = scmp.ne.s32.totalorder %s89, %s90
      %p99 = scmp.eq.s32.totalorder %s23, 0
      %p100 = por %p98, %p99
      %p101 = scmp.ne.s32.totalorder %s89, %s90
      %p102 = scmp.eq.s32.totalorder %s24, 1
      %p103 = por %p101, %p102
      %p105 = scmp.ne.s32.totalorder %s90, %s104
      %p106 = scmp.eq.s32.totalorder %s24, 0
      %p107 = por %p105, %p106
      %s109 = sadd.s32 %s108, 1
      %p112 = scmp.eq.s32.totalorder %s18, 1
      %p113 = scmp.ne.s32.totalorder %s108, %s110
      %p114 = scmp.eq.s32.totalorder %s18, 0
      %p115 = por %p113, %p114
      %p116 = scmp.ne.s32.totalorder %s108, %s110
      %p117 = scmp.eq.s32.totalorder %s23, 1
      %p118 = por %p116, %p117
      %p119 = scmp.ne.s32.totalorder %s110, %s111
      %p120 = scmp.eq.s32.totalorder %s23, 0
      %p121 = por %p119, %p120
      %p122 = scmp.ne.s32.totalorder %s110, %s111
      %p123 = scmp.eq.s32.totalorder %s24, 1
      %p124 = por %p122, %p123
      %p126 = scmp.ne.s32.totalorder %s111, %s125
      %p127 = scmp.eq.s32.totalorder %s24, 0
      %p128 = por %p126, %p127
      %s130 = sadd.s32 %s129, 1
      %p133 = scmp.eq.s32.totalorder %s18, 1
      %p134 = scmp.ne.s32.totalorder %s129, %s131
      %p135 = scmp.eq.s32.totalorder %s18, 0
      %p136 = por %p134, %p135
      %p137 = scmp.ne.s32.totalorder %s129, %s131
      %p138 = scmp.eq.s32.totalorder %s23, 1
      %p139 = por %p137, %p138
      %p140 = scmp.ne.s32.totalorder %s131, %s132
      %p141 = scmp.eq.s32.totalorder %s23, 0
      %p142 = por %p140, %p141
      %p143 = scmp.ne.s32.totalorder %s131, %s132
      %p144 = scmp.eq.s32.totalorder %s24, 1
      %p145 = por %p143, %p144
      %p147 = scmp.ne.s32.totalorder %s132, %s146
      %p148 = scmp.eq.s32.totalorder %s24, 0
      %p149 = por %p147, %p148
      %s151 = sadd.s32 %s150, 1
      %p154 = scmp.eq.s32.totalorder %s18, 1
      %p155 = scmp.ne.s32.totalorder %s150, %s152
      %p156 = scmp.eq.s32.totalorder %s18, 0
      %p157 = por %p155, %p156
      %p158 = scmp.ne.s32.totalorder %s150, %s152
      %p159 = scmp.eq.s32.totalorder %s23, 1
      %p160 = por %p158, %p159
      %p161 = scmp.ne.s32.totalorder %s152, %s153
      %p162 = scmp.eq.s32.totalorder %s23, 0
      %p163 = por %p161, %p162
      %p164 = scmp.ne.s32.totalorder %s152, %s153
      %p165 = scmp.eq.s32.totalorder %s24, 1
      %p166 = por %p164, %p165
      %p168 = scmp.ne.s32.totalorder %s153, %s167
      %p169 = scmp.eq.s32.totalorder %s24, 0
      %p170 = por %p168, %p169
      %s171 = ssub.s32 %s25, %s37
      %p172 = scmp.eq.s32.totalorder %s171, 0
      %s174 = sadd.s32 %s173, 1
      %s175 = scalar_select %p172, %s173, %s174
      %p178 = pneg %p172
      %p179 = scmp.eq.s32.totalorder %s18, 1
      %p180 = por %p178, %p179
      %p181 = scmp.ne.s32.totalorder %s173, %s176
      %p182 = scmp.eq.s32.totalorder %s18, 0
      %p183 = por %p181, %p182
      %p184 = scmp.ne.s32.totalorder %s173, %s176
      %p185 = scmp.eq.s32.totalorder %s23, 1
      %p186 = por %p184, %p185
      %p187 = scmp.ne.s32.totalorder %s176, %s177
      %p188 = scmp.eq.s32.totalorder %s23, 0
      %p189 = por %p187, %p188
      %p190 = scmp.ne.s32.totalorder %s176, %s177
      %p191 = scmp.eq.s32.totalorder %s24, 1
      %p192 = por %p190, %p191
      %p194 = scmp.ne.s32.totalorder %s177, %s193
      %p195 = scmp.eq.s32.totalorder %s24, 0
      %p196 = por %p194, %p195
      %p197 = scmp.le.s32.totalorder 1, %s18
      %p198 = scmp.lt.s32.totalorder %s18, 3
      %p199 = pnand %p197, %p198
      %p200 = pneg %p199
      // Predicated region
      $region9: #{tpu_custom_call.1} parent=5 // pred_check
        _
      $region10: #{tpu_custom_call.1} parent=5 // pred_check_branch
        %202 = sbr.rel (%p199) target = $region12
      $region11: #{tpu_custom_call.1} parent=5 // pred_region
        %s203 = ssub.s32 %s18, 1
        // Predicated region
        $region13: #{tpu_custom_call.1} parent=11 // pred_check
          %p204 = pneg %p79
        $region14: #{tpu_custom_call.1} parent=11 // pred_check_branch
          %206 = sbr.rel (%p204) target = $region16
        $region15: #{tpu_custom_call.1} parent=11 // pred_region
          %s208 = ssub.s32 4096, 4096
          %209 = vsyncadd [#allocation9], %s208
          %s210 = sshll.u32 [#allocation8], 4
          %s211 = int_to_ptr.vmem [resolvable:$true] %s210
          %216 = dma.hbm_to_vmem [thread:$0]  %s1, 4096, %s211, [#allocation9], 256, 256, 16
        $region16: #{tpu_custom_call.1} parent=11 // pred_fallthru
          _
        // Predicated region
        $region17: #{tpu_custom_call.1} parent=11 // pred_check
          %p217 = pneg %p100
        $region18: #{tpu_custom_call.1} parent=11 // pred_check_branch
          %219 = sbr.rel (%p217) target = $region20
        $region19: #{tpu_custom_call.1} parent=11 // pred_region
          %s221 = ssub.s32 4096, 4096
          %222 = vsyncadd [#allocation9], %s221
          %s223 = sshll.u32 [#allocation10], 4
          %s224 = int_to_ptr.vmem [resolvable:$true] %s223
          %229 = dma.hbm_to_vmem [thread:$0]  %s2, 4096, %s224, [#allocation9], 256, 256, 16
        $region20: #{tpu_custom_call.1} parent=11 // pred_fallthru
          _
        // Predicated region
        $region21: #{tpu_custom_call.1} parent=11 // pred_check
          %p230 = pneg %p121
        $region22: #{tpu_custom_call.1} parent=11 // pred_check_branch
          %232 = sbr.rel (%p230) target = $region24
        $region23: #{tpu_custom_call.1} parent=11 // pred_region
          _
        $region24: #{tpu_custom_call.1} parent=11 // pred_fallthru
          _
        // Predicated region
        $region25: #{tpu_custom_call.1} parent=11 // pred_check
          %p233 = pneg %p142
        $region26: #{tpu_custom_call.1} parent=11 // pred_check_branch
          %235 = sbr.rel (%p233) target = $region28
        $region27: #{tpu_custom_call.1} parent=11 // pred_region
          %s237 = ssub.s32 1024, 1024
          %238 = vsyncadd [#allocation12], %s237
          %s239 = sshll.u32 [#allocation11], 4
          %s240 = int_to_ptr.vmem [resolvable:$true] %s239
          %245 = dma.hbm_to_vmem [thread:$0]  %s4, 1024, %s240, [#allocation12], 64, 64, 4
        $region28: #{tpu_custom_call.1} parent=11 // pred_fallthru
          _
        // Predicated region
        $region29: #{tpu_custom_call.1} parent=11 // pred_check
          %p246 = pneg %p163
        $region30: #{tpu_custom_call.1} parent=11 // pred_check_branch
          %248 = sbr.rel (%p246) target = $region32
        $region31: #{tpu_custom_call.1} parent=11 // pred_region
          _
        $region32: #{tpu_custom_call.1} parent=11 // pred_fallthru
          _
      $region12: #{tpu_custom_call.1} parent=5 // pred_fallthru
        _
      %p249 = scmp.lt.s32.totalorder %s18, 2
      // Predicated region
      $region33: #{tpu_custom_call.1} parent=5 // pred_check
        %p250 = pneg %p249
      $region34: #{tpu_custom_call.1} parent=5 // pred_check_branch
        %252 = sbr.rel (%p250) target = $region36
      $region35: #{tpu_custom_call.1} parent=5 // pred_region
        // Predicated region
        $region37: #{tpu_custom_call.1} parent=35 // pred_check
          %p253 = pneg %p52
        $region38: #{tpu_custom_call.1} parent=35 // pred_check_branch
          %255 = sbr.rel (%p253) target = $region40
        $region39: #{tpu_custom_call.1} parent=35 // pred_region
          %s256 = sand.u32 %s42, 1
          %s257 = scalar_lea.sflag [#allocation6], %s256
          %s258 = sand.u32 %s42, 1
          %s259 = smul.addr %s258, 16
          %s260 = scalar_lea.vmem [#allocation5], %s259
          %s261 = smul.u32 4, %s26
          %s263 = ssub.s32 256, 256
          %264 = vsyncadd %s257, %s263
          %s265 = sadd.s32 %s25, %s261
          %s266 = smul.addr %s265, 64
          %s267 = scalar_lea.hbm %s0, %s266
          %s268 = sshll.u32 %s260, 4
          %s269 = int_to_ptr.vmem [resolvable:$true] %s268
          %274 = dma.hbm_to_vmem [thread:$0]  %s267, 256, %s269, %s257, 64, 64, 4
        $region40: #{tpu_custom_call.1} parent=35 // pred_fallthru
          _
      $region36: #{tpu_custom_call.1} parent=5 // pred_fallthru
        _
      %p275 = scmp.le.s32.totalorder 1, %s18
      %p276 = scmp.lt.s32.totalorder %s18, 3
      %p277 = pnand %p275, %p276
      %p278 = pneg %p277
      // Predicated region
      $region41: #{tpu_custom_call.1} parent=5 // pred_check
        _
      $region42: #{tpu_custom_call.1} parent=5 // pred_check_branch
        %280 = sbr.rel (%p277) target = $region44
      $region43: #{tpu_custom_call.1} parent=5 // pred_region
        %s281 = ssub.s32 %s18, 1
        %s282 = sand.u32 %s45, 1
        %s283 = scalar_lea.sflag [#allocation6], %s282
        %s284 = sand.u32 %s45, 1
        %s285 = smul.addr %s284, 16
        %s286 = scalar_lea.vmem [#allocation5], %s285
        // Predicated region
        $region45: #{tpu_custom_call.1} parent=43 // pred_check
          %p287 = pneg %p58
        $region46: #{tpu_custom_call.1} parent=43 // pred_check_branch
          %289 = sbr.rel (%p287) target = $region48
        $region47: #{tpu_custom_call.1} parent=43 // pred_region
          %290 = dma.done %s283, 256
        $region48: #{tpu_custom_call.1} parent=43 // pred_fallthru
          _
        // Predicated region
        $region49: #{tpu_custom_call.1} parent=43 // pred_check
          %p291 = pneg %p79
        $region50: #{tpu_custom_call.1} parent=43 // pred_check_branch
          %293 = sbr.rel (%p291) target = $region52
        $region51: #{tpu_custom_call.1} parent=43 // pred_region
          %294 = dma.done [#allocation9], 4096
        $region52: #{tpu_custom_call.1} parent=43 // pred_fallthru
          _
        // Predicated region
        $region53: #{tpu_custom_call.1} parent=43 // pred_check
          %p295 = pneg %p100
        $region54: #{tpu_custom_call.1} parent=43 // pred_check_branch
          %297 = sbr.rel (%p295) target = $region56
        $region55: #{tpu_custom_call.1} parent=43 // pred_region
          %298 = dma.done [#allocation9], 4096
        $region56: #{tpu_custom_call.1} parent=43 // pred_fallthru
          _
        // Predicated region
        $region57: #{tpu_custom_call.1} parent=43 // pred_check
          %p299 = pneg %p142
        $region58: #{tpu_custom_call.1} parent=43 // pred_check_branch
          %301 = sbr.rel (%p299) target = $region60
        $region59: #{tpu_custom_call.1} parent=43 // pred_region
          %302 = dma.done [#allocation12], 1024
        $region60: #{tpu_custom_call.1} parent=43 // pred_fallthru
          _
        %s303 = sand.u32 %s45, 1
        %s304 = scalar_lea.sflag [#allocation6], %s303
        %s305 = sand.u32 %s45, 1
        %s306 = smul.addr %s305, 16
        %s307 = scalar_lea.vmem [#allocation5], %s306
        %p308 = pneg %p58
        %p309 = pneg %p55
        %p310 = pneg %p79
        %p311 = pneg %p76
        %p312 = pneg %p100
        %p313 = pneg %p97
        %p314 = pneg %p121
        %p315 = pneg %p118
        %p316 = pneg %p142
        %p317 = pneg %p139
        %p318 = pneg %p163
        %p319 = pneg %p160
        %p320 = pneg %p189
        %p321 = pneg %p186
        %s322 = smul.u32 4, %s28
        %p324 = scmp.eq.s32.totalorder %s28, 0
        // Predicated region
        $region61: #{tpu_custom_call.1} parent=43 // pred_check
          %p325 = pneg %p324
        $region62: #{tpu_custom_call.1} parent=43 // pred_check_branch
          %327 = sbr.rel (%p325) target = $region64
        $region63: #{tpu_custom_call.1} parent=43 // pred_region
          %328 = vst [vmem:[#allocation3] sm:$0xff] 0.0
          %329 = vst [vmem:[#allocation4] sm:$0xff] 0.0
        $region64: #{tpu_custom_call.1} parent=43 // pred_fallthru
          _
        %v330 = vld [vmem:[%s286] sm:$0xf]
        %v331 = vld [vmem:[%s286 + $0x4] sm:$0xf]
        %v332 = vld [vmem:[%s286 + $0x8] sm:$0xf]
        %v333 = vld [vmem:[%s286 + $0xc] sm:$0xf]
        %v334 = vld [vmem:[#allocation8] sm:$0xff]
        %v335 = vld [vmem:[#allocation8 + $0x8] sm:$0xff]
        %v336 = vld [vmem:[#allocation8 + $0x10] sm:$0xff]
        %v337 = vld [vmem:[#allocation8 + $0x18] sm:$0xff]
        %v338 = vld [vmem:[#allocation8 + $0x20] sm:$0xff]
        %v339 = vld [vmem:[#allocation8 + $0x28] sm:$0xff]
        %v340 = vld [vmem:[#allocation8 + $0x30] sm:$0xff]
        %v341 = vld [vmem:[#allocation8 + $0x38] sm:$0xff]
        %v342 = vld [vmem:[#allocation8 + $0x40] sm:$0xff]
        %v343 = vld [vmem:[#allocation8 + $0x48] sm:$0xff]
        %v344 = vld [vmem:[#allocation8 + $0x50] sm:$0xff]
        %v345 = vld [vmem:[#allocation8 + $0x58] sm:$0xff]
        %v346 = vld [vmem:[#allocation8 + $0x60] sm:$0xff]
        %v347 = vld [vmem:[#allocation8 + $0x68] sm:$0xff]
        %v348 = vld [vmem:[#allocation8 + $0x70] sm:$0xff]
        %v349 = vld [vmem:[#allocation8 + $0x78] sm:$0xff]
        %v350 = vld [vmem:[#allocation8 + $0x80] sm:$0xff]
        %v351 = vld [vmem:[#allocation8 + $0x88] sm:$0xff]
        %v352 = vld [vmem:[#allocation8 + $0x90] sm:$0xff]
        %v353 = vld [vmem:[#allocation8 + $0x98] sm:$0xff]
        %v354 = vld [vmem:[#allocation8 + $0xa0] sm:$0xff]
        %v355 = vld [vmem:[#allocation8 + $0xa8] sm:$0xff]
        %v356 = vld [vmem:[#allocation8 + $0xb0] sm:$0xff]
        %v357 = vld [vmem:[#allocation8 + $0xb8] sm:$0xff]
        %v358 = vld [vmem:[#allocation8 + $0xc0] sm:$0xff]
        %v359 = vld [vmem:[#allocation8 + $0xc8] sm:$0xff]
        %v360 = vld [vmem:[#allocation8 + $0xd0] sm:$0xff]
        %v361 = vld [vmem:[#allocation8 + $0xd8] sm:$0xff]
        %v362 = vld [vmem:[#allocation8 + $0xe0] sm:$0xff]
        %v363 = vld [vmem:[#allocation8 + $0xe8] sm:$0xff]
        %v364 = vld [vmem:[#allocation8 + $0xf0] sm:$0xff]
        %v365 = vld [vmem:[#allocation8 + $0xf8] sm:$0xff]
        %v366 = vld [vmem:[%s3] sm:$0xf]
        %v368 = vlaneseq
        %v369 = vshrl.u32 %v368, 7
        %v370 = vsub.s32 0, %v369
        %v371 = vrot.slane %v366, %v370
        %v372 = vlaneseq
        %v373 = vshrl.u32 %v372, 7
        %v374 = vsub.s32 1, %v373
        %v375 = vrot.slane %v366, %v374
        %v376 = vlaneseq
        %v377 = vshrl.u32 %v376, 7
        %v378 = vsub.s32 2, %v377
        %v379 = vrot.slane %v366, %v378
        %v380 = vlaneseq
        %v381 = vshrl.u32 %v380, 7
        %v382 = vsub.s32 3, %v381
        %v383 = vrot.slane %v366, %v382
        %v392 = vunpack.c.l.b16 %v330
        %v393 = vunpack.c.l.b16 %v331
        %v394 = vunpack.c.l.b16 %v332
        %v395 = vunpack.c.l.b16 %v333
        %v396 = vpack.c.b16 %v393, %v392
        %v397 = vpack.c.b16 %v395, %v394
        %v432 = vunpack.c.l.b16 %v334
        %v433 = vunpack.c.h.b16 %v334
        %v434 = vunpack.c.l.b16 %v335
        %v435 = vunpack.c.h.b16 %v335
        %v436 = vunpack.c.l.b16 %v336
        %v437 = vunpack.c.h.b16 %v336
        %v438 = vunpack.c.l.b16 %v337
        %v439 = vunpack.c.h.b16 %v337
        %v440 = vunpack.c.l.b16 %v338
        %v441 = vunpack.c.h.b16 %v338
        %v442 = vunpack.c.l.b16 %v339
        %v443 = vunpack.c.h.b16 %v339
        %v444 = vunpack.c.l.b16 %v340
        %v445 = vunpack.c.h.b16 %v340
        %v446 = vunpack.c.l.b16 %v341
        %v447 = vunpack.c.h.b16 %v341
        %v448 = vunpack.c.l.b16 %v342
        %v449 = vunpack.c.h.b16 %v342
        %v450 = vunpack.c.l.b16 %v343
        %v451 = vunpack.c.h.b16 %v343
        %v452 = vunpack.c.l.b16 %v344
        %v453 = vunpack.c.h.b16 %v344
        %v454 = vunpack.c.l.b16 %v345
        %v455 = vunpack.c.h.b16 %v345
        %v456 = vunpack.c.l.b16 %v346
        %v457 = vunpack.c.h.b16 %v346
        %v458 = vunpack.c.l.b16 %v347
        %v459 = vunpack.c.h.b16 %v347
        %v460 = vunpack.c.l.b16 %v348
        %v461 = vunpack.c.h.b16 %v348
        %v462 = vunpack.c.l.b16 %v349
        %v463 = vunpack.c.h.b16 %v349
        %v464 = vunpack.c.l.b16 %v350
        %v465 = vunpack.c.h.b16 %v350
        %v466 = vunpack.c.l.b16 %v351
        %v467 = vunpack.c.h.b16 %v351
        %v468 = vunpack.c.l.b16 %v352
        %v469 = vunpack.c.h.b16 %v352
        %v470 = vunpack.c.l.b16 %v353
        %v471 = vunpack.c.h.b16 %v353
        %v472 = vunpack.c.l.b16 %v354
        %v473 = vunpack.c.h.b16 %v354
        %v474 = vunpack.c.l.b16 %v355
        %v475 = vunpack.c.h.b16 %v355
        %v476 = vunpack.c.l.b16 %v356
        %v477 = vunpack.c.h.b16 %v356
        %v478 = vunpack.c.l.b16 %v357
        %v479 = vunpack.c.h.b16 %v357
        %v480 = vunpack.c.l.b16 %v358
        %v481 = vunpack.c.h.b16 %v358
        %v482 = vunpack.c.l.b16 %v359
        %v483 = vunpack.c.h.b16 %v359
        %v484 = vunpack.c.l.b16 %v360
        %v485 = vunpack.c.h.b16 %v360
        %v486 = vunpack.c.l.b16 %v361
        %v487 = vunpack.c.h.b16 %v361
        %v488 = vunpack.c.l.b16 %v362
        %v489 = vunpack.c.h.b16 %v362
        %v490 = vunpack.c.l.b16 %v363
        %v491 = vunpack.c.h.b16 %v363
        %v492 = vunpack.c.l.b16 %v364
        %v493 = vunpack.c.h.b16 %v364
        %v494 = vunpack.c.l.b16 %v365
        %v495 = vunpack.c.h.b16 %v365
        %v496 = vpack.c.b16 %v436, %v432
        %v497 = vpack.c.b16 %v437, %v433
        %v498 = vpack.c.b16 %v438, %v434
        %v499 = vpack.c.b16 %v439, %v435
        %v500 = vpack.c.b16 %v444, %v440
        %v501 = vpack.c.b16 %v445, %v441
        %v502 = vpack.c.b16 %v446, %v442
        %v503 = vpack.c.b16 %v447, %v443
        %v504 = vpack.c.b16 %v452, %v448
        %v505 = vpack.c.b16 %v453, %v449
        %v506 = vpack.c.b16 %v454, %v450
        %v507 = vpack.c.b16 %v455, %v451
        %v508 = vpack.c.b16 %v460, %v456
        %v509 = vpack.c.b16 %v461, %v457
        %v510 = vpack.c.b16 %v462, %v458
        %v511 = vpack.c.b16 %v463, %v459
        %v512 = vpack.c.b16 %v468, %v464
        %v513 = vpack.c.b16 %v469, %v465
        %v514 = vpack.c.b16 %v470, %v466
        %v515 = vpack.c.b16 %v471, %v467
        %v516 = vpack.c.b16 %v476, %v472
        %v517 = vpack.c.b16 %v477, %v473
        %v518 = vpack.c.b16 %v478, %v474
        %v519 = vpack.c.b16 %v479, %v475
        %v520 = vpack.c.b16 %v484, %v480
        %v521 = vpack.c.b16 %v485, %v481
        %v522 = vpack.c.b16 %v486, %v482
        %v523 = vpack.c.b16 %v487, %v483
        %v524 = vpack.c.b16 %v492, %v488
        %v525 = vpack.c.b16 %v493, %v489
        %v526 = vpack.c.b16 %v494, %v490
        %v527 = vpack.c.b16 %v495, %v491
        %560 = vmatprep.subr.bf16.mxu0 %v497
        %561 = vmatpush1.bf16.msra.mxu0 %v496
        %562 = vmatprep.subr.bf16.mxu0 %v501
        %563 = vmatpush1.bf16.msra.mxu0 %v500
        %564 = vmatprep.subr.bf16.mxu0 %v505
        %565 = vmatpush1.bf16.msra.mxu0 %v504
        %566 = vmatprep.subr.bf16.mxu0 %v509
        %567 = vmatpush1.bf16.msra.mxu0 %v508
        %568 = vmatprep.subr.bf16.mxu0 %v513
        %569 = vmatpush1.bf16.msra.mxu0 %v512
        %570 = vmatprep.subr.bf16.mxu0 %v517
        %571 = vmatpush1.bf16.msra.mxu0 %v516
        %572 = vmatprep.subr.bf16.mxu0 %v521
        %573 = vmatpush1.bf16.msra.mxu0 %v520
        %574 = vmatprep.subr.bf16.mxu0 %v525
        %575 = vmatpush1.bf16.msra.mxu0 %v524
        %576 = vmatprep.subr.bf16.mxu0 0
        %577 = vmatpush1.bf16.msra.mxu0 0
        %578 = vmatprep.subr.bf16.mxu0 0
        %579 = vmatpush1.bf16.msra.mxu0 0
        %580 = vmatprep.subr.bf16.mxu0 0
        %581 = vmatpush1.bf16.msra.mxu0 0
        %582 = vmatprep.subr.bf16.mxu0 0
        %583 = vmatpush1.bf16.msra.mxu0 0
        %584 = vmatprep.subr.bf16.mxu0 0
        %585 = vmatpush1.bf16.msra.mxu0 0
        %586 = vmatprep.subr.bf16.mxu0 0
        %587 = vmatpush1.bf16.msra.mxu0 0
        %588 = vmatprep.subr.bf16.mxu0 0
        %589 = vmatpush1.bf16.msra.mxu0 0
        %590 = vmatprep.subr.bf16.mxu0 0
        %591 = vmatpush1.bf16.msra.mxu0 0
        %592 = vmatprep.mubr.bf16.mxu0 0
        %593 = vmatmul.mubr.bf16.gmra.mrb[0].mxu0 %v396
        %v594 = vpop.f32.mrb[0].mxu0
        %v595 = vadd.f32 %v371, %v594
        %v596 = vpop.f32.mrb[0].mxu0
        %v597 = vadd.f32 %v375, %v596
        %v598 = vpop.f32.mrb[0].mxu0
        %v599 = vadd.f32 %v371, %v598
        %v600 = vpop.f32.mrb[0].mxu0
        %v601 = vadd.f32 %v375, %v600
        %602 = vmatprep.mubr.bf16.mxu0 0
        %603 = vmatmul.mubr.bf16.gmra.mrb[0].mxu0 %v397
        %v604 = vpop.f32.mrb[0].mxu0
        %v605 = vadd.f32 %v371, %v604
        %v606 = vpop.f32.mrb[0].mxu0
        %v607 = vadd.f32 %v375, %v606
        %v608 = vpop.f32.mrb[0].mxu0
        %v609 = vadd.f32 %v371, %v608
        %v610 = vpop.f32.mrb[0].mxu0
        %v611 = vadd.f32 %v375, %v610
        %612 = vdwg.mxu0
        %613 = vmatprep.subr.bf16.mxu0 %v499
        %614 = vmatpush1.bf16.msra.mxu0 %v498
        %615 = vmatprep.subr.bf16.mxu0 %v503
        %616 = vmatpush1.bf16.msra.mxu0 %v502
        %617 = vmatprep.subr.bf16.mxu0 %v507
        %618 = vmatpush1.bf16.msra.mxu0 %v506
        %619 = vmatprep.subr.bf16.mxu0 %v511
        %620 = vmatpush1.bf16.msra.mxu0 %v510
        %621 = vmatprep.subr.bf16.mxu0 %v515
        %622 = vmatpush1.bf16.msra.mxu0 %v514
        %623 = vmatprep.subr.bf16.mxu0 %v519
        %624 = vmatpush1.bf16.msra.mxu0 %v518
        %625 = vmatprep.subr.bf16.mxu0 %v523
        %626 = vmatpush1.bf16.msra.mxu0 %v522
        %627 = vmatprep.subr.bf16.mxu0 %v527
        %628 = vmatpush1.bf16.msra.mxu0 %v526
        %629 = vmatprep.subr.bf16.mxu0 0
        %630 = vmatpush1.bf16.msra.mxu0 0
        %631 = vmatprep.subr.bf16.mxu0 0
        %632 = vmatpush1.bf16.msra.mxu0 0
        %633 = vmatprep.subr.bf16.mxu0 0
        %634 = vmatpush1.bf16.msra.mxu0 0
        %635 = vmatprep.subr.bf16.mxu0 0
        %636 = vmatpush1.bf16.msra.mxu0 0
        %637 = vmatprep.subr.bf16.mxu0 0
        %638 = vmatpush1.bf16.msra.mxu0 0
        %639 = vmatprep.subr.bf16.mxu0 0
        %640 = vmatpush1.bf16.msra.mxu0 0
        %641 = vmatprep.subr.bf16.mxu0 0
        %642 = vmatpush1.bf16.msra.mxu0 0
        %643 = vmatprep.subr.bf16.mxu0 0
        %644 = vmatpush1.bf16.msra.mxu0 0
        %645 = vmatprep.mubr.bf16.mxu0 0
        %646 = vmatmul.mubr.bf16.gmra.mrb[0].mxu0 %v396
        %v647 = vpop.f32.mrb[0].mxu0
        %v648 = vadd.f32 %v379, %v647
        %v649 = vpop.f32.mrb[0].mxu0
        %v650 = vadd.f32 %v383, %v649
        %v651 = vpop.f32.mrb[0].mxu0
        %v652 = vadd.f32 %v379, %v651
        %v653 = vpop.f32.mrb[0].mxu0
        %v654 = vadd.f32 %v383, %v653
        %655 = vmatprep.mubr.bf16.mxu0 0
        %656 = vmatmul.mubr.bf16.gmra.mrb[0].mxu0 %v397
        %v657 = vpop.f32.mrb[0].mxu0
        %v658 = vadd.f32 %v379, %v657
        %v659 = vpop.f32.mrb[0].mxu0
        %v660 = vadd.f32 %v383, %v659
        %v661 = vpop.f32.mrb[0].mxu0
        %v662 = vadd.f32 %v379, %v661
        %v663 = vpop.f32.mrb[0].mxu0
        %v664 = vadd.f32 %v383, %v663
        %665 = vdwg.mxu0
        %v666 = vpack.c.bf16 %v595, %v595
        %v667 = vpack.c.bf16 %v597, %v597
        %v668 = vpack.c.bf16 %v648, %v648
        %v669 = vpack.c.bf16 %v650, %v650
        %v670 = vpack.c.bf16 %v599, %v599
        %v671 = vpack.c.bf16 %v601, %v601
        %v672 = vpack.c.bf16 %v652, %v652
        %v673 = vpack.c.bf16 %v654, %v654
        %v674 = vpack.c.bf16 %v605, %v605
        %v675 = vpack.c.bf16 %v607, %v607
        %v676 = vpack.c.bf16 %v658, %v658
        %v677 = vpack.c.bf16 %v660, %v660
        %v678 = vpack.c.bf16 %v609, %v609
        %v679 = vpack.c.bf16 %v611, %v611
        %v680 = vpack.c.bf16 %v662, %v662
        %v681 = vpack.c.bf16 %v664, %v664
        %v698 = vunpack.c.l.b16 %v666
        %v699 = vunpack.c.l.b16 %v667
        %v700 = vunpack.c.l.b16 %v668
        %v701 = vunpack.c.l.b16 %v669
        %v702 = vunpack.c.l.b16 %v670
        %v703 = vunpack.c.l.b16 %v671
        %v704 = vunpack.c.l.b16 %v672
        %v705 = vunpack.c.l.b16 %v673
        %v706 = vunpack.c.l.b16 %v674
        %v707 = vunpack.c.l.b16 %v675
        %v708 = vunpack.c.l.b16 %v676
        %v709 = vunpack.c.l.b16 %v677
        %v710 = vunpack.c.l.b16 %v678
        %v711 = vunpack.c.l.b16 %v679
        %v712 = vunpack.c.l.b16 %v680
        %v713 = vunpack.c.l.b16 %v681
        %v714 = vpack.c.b16 %v699, %v698
        %v715 = vpack.c.b16 %v701, %v700
        %v716 = vpack.c.b16 %v703, %v702
        %v717 = vpack.c.b16 %v705, %v704
        %v718 = vpack.c.b16 %v707, %v706
        %v719 = vpack.c.b16 %v709, %v708
        %v720 = vpack.c.b16 %v711, %v710
        %v721 = vpack.c.b16 %v713, %v712
        %730 = vst [vmem:[#allocation2] sm:$0xff] %v714
        %731 = vst [vmem:[#allocation2 + $0x8] sm:$0xff] %v715
        %732 = vst [vmem:[#allocation2 + $0x10] sm:$0xff] %v716
        %733 = vst [vmem:[#allocation2 + $0x18] sm:$0xff] %v717
        %734 = vst [vmem:[#allocation2 + $0x20] sm:$0xff] %v718
        %735 = vst [vmem:[#allocation2 + $0x28] sm:$0xff] %v719
        %736 = vst [vmem:[#allocation2 + $0x30] sm:$0xff] %v720
        %737 = vst [vmem:[#allocation2 + $0x38] sm:$0xff] %v721
        %v738 = vld [vmem:[#allocation3] sm:$0xff]
        %v739 = vld [vmem:[#allocation4] sm:$0xff]
        %v740 = vld [vmem:[#allocation2] sm:$0xff]
        %v741 = vld [vmem:[#allocation2 + $0x8] sm:$0xff]
        %v742 = vunpack.c.l.bf16 %v740
        %v743 = vunpack.c.h.bf16 %v740
        %v744 = vunpack.c.l.bf16 %v741
        %v745 = vunpack.c.h.bf16 %v741
        %v746 = vpack.c.bf16 %v738, %v738
        %v747 = vld [vmem:[#allocation10] sm:$0xff]
        %v748 = vld [vmem:[#allocation10 + $0x8] sm:$0xff]
        %v749 = vld [vmem:[#allocation10 + $0x10] sm:$0xff]
        %v750 = vld [vmem:[#allocation10 + $0x18] sm:$0xff]
        %v751 = vld [vmem:[#allocation10 + $0x20] sm:$0xff]
        %v752 = vld [vmem:[#allocation10 + $0x28] sm:$0xff]
        %v753 = vld [vmem:[#allocation10 + $0x30] sm:$0xff]
        %v754 = vld [vmem:[#allocation10 + $0x38] sm:$0xff]
        %v755 = vld [vmem:[#allocation10 + $0x40] sm:$0xff]
        %v756 = vld [vmem:[#allocation10 + $0x48] sm:$0xff]
        %v757 = vld [vmem:[#allocation10 + $0x50] sm:$0xff]
        %v758 = vld [vmem:[#allocation10 + $0x58] sm:$0xff]
        %v759 = vld [vmem:[#allocation10 + $0x60] sm:$0xff]
        %v760 = vld [vmem:[#allocation10 + $0x68] sm:$0xff]
        %v761 = vld [vmem:[#allocation10 + $0x70] sm:$0xff]
        %v762 = vld [vmem:[#allocation10 + $0x78] sm:$0xff]
        %v763 = vld [vmem:[#allocation10 + $0x80] sm:$0xff]
        %v764 = vld [vmem:[#allocation10 + $0x88] sm:$0xff]
        %v765 = vld [vmem:[#allocation10 + $0x90] sm:$0xff]
        %v766 = vld [vmem:[#allocation10 + $0x98] sm:$0xff]
        %v767 = vld [vmem:[#allocation10 + $0xa0] sm:$0xff]
        %v768 = vld [vmem:[#allocation10 + $0xa8] sm:$0xff]
        %v769 = vld [vmem:[#allocation10 + $0xb0] sm:$0xff]
        %v770 = vld [vmem:[#allocation10 + $0xb8] sm:$0xff]
        %v771 = vld [vmem:[#allocation10 + $0xc0] sm:$0xff]
        %v772 = vld [vmem:[#allocation10 + $0xc8] sm:$0xff]
        %v773 = vld [vmem:[#allocation10 + $0xd0] sm:$0xff]
        %v774 = vld [vmem:[#allocation10 + $0xd8] sm:$0xff]
        %v775 = vld [vmem:[#allocation10 + $0xe0] sm:$0xff]
        %v776 = vld [vmem:[#allocation10 + $0xe8] sm:$0xff]
        %v777 = vld [vmem:[#allocation10 + $0xf0] sm:$0xff]
        %v778 = vld [vmem:[#allocation10 + $0xf8] sm:$0xff]
        %v811 = vunpack.c.l.b16 %v747
        %v812 = vunpack.c.h.b16 %v747
        %v813 = vunpack.c.l.b16 %v748
        %v814 = vunpack.c.h.b16 %v748
        %v815 = vunpack.c.l.b16 %v749
        %v816 = vunpack.c.h.b16 %v749
        %v817 = vunpack.c.l.b16 %v750
        %v818 = vunpack.c.h.b16 %v750
        %v819 = vunpack.c.l.b16 %v751
        %v820 = vunpack.c.h.b16 %v751
        %v821 = vunpack.c.l.b16 %v752
        %v822 = vunpack.c.h.b16 %v752
        %v823 = vunpack.c.l.b16 %v753
        %v824 = vunpack.c.h.b16 %v753
        %v825 = vunpack.c.l.b16 %v754
        %v826 = vunpack.c.h.b16 %v754
        %v827 = vunpack.c.l.b16 %v755
        %v828 = vunpack.c.h.b16 %v755
        %v829 = vunpack.c.l.b16 %v756
        %v830 = vunpack.c.h.b16 %v756
        %v831 = vunpack.c.l.b16 %v757
        %v832 = vunpack.c.h.b16 %v757
        %v833 = vunpack.c.l.b16 %v758
        %v834 = vunpack.c.h.b16 %v758
        %v835 = vunpack.c.l.b16 %v759
        %v836 = vunpack.c.h.b16 %v759
        %v837 = vunpack.c.l.b16 %v760
        %v838 = vunpack.c.h.b16 %v760
        %v839 = vunpack.c.l.b16 %v761
        %v840 = vunpack.c.h.b16 %v761
        %v841 = vunpack.c.l.b16 %v762
        %v842 = vunpack.c.h.b16 %v762
        %v843 = vunpack.c.l.b16 %v763
        %v844 = vunpack.c.h.b16 %v763
        %v845 = vunpack.c.l.b16 %v764
        %v846 = vunpack.c.h.b16 %v764
        %v847 = vunpack.c.l.b16 %v765
        %v848 = vunpack.c.h.b16 %v765
        %v849 = vunpack.c.l.b16 %v766
        %v850 = vunpack.c.h.b16 %v766
        %v851 = vunpack.c.l.b16 %v767
        %v852 = vunpack.c.h.b16 %v767
        %v853 = vunpack.c.l.b16 %v768
        %v854 = vunpack.c.h.b16 %v768
        %v855 = vunpack.c.l.b16 %v769
        %v856 = vunpack.c.h.b16 %v769
        %v857 = vunpack.c.l.b16 %v770
        %v858 = vunpack.c.h.b16 %v770
        %v859 = vunpack.c.l.b16 %v771
        %v860 = vunpack.c.h.b16 %v771
        %v861 = vunpack.c.l.b16 %v772
        %v862 = vunpack.c.h.b16 %v772
        %v863 = vunpack.c.l.b16 %v773
        %v864 = vunpack.c.h.b16 %v773
        %v865 = vunpack.c.l.b16 %v774
        %v866 = vunpack.c.h.b16 %v774
        %v867 = vunpack.c.l.b16 %v775
        %v868 = vunpack.c.h.b16 %v775
        %v869 = vunpack.c.l.b16 %v776
        %v870 = vunpack.c.h.b16 %v776
        %v871 = vunpack.c.l.b16 %v777
        %v872 = vunpack.c.h.b16 %v777
        %v873 = vunpack.c.l.b16 %v778
        %v874 = vunpack.c.h.b16 %v778
        %v875 = vpack.c.b16 %v815, %v811
        %v876 = vpack.c.b16 %v816, %v812
        %v877 = vpack.c.b16 %v817, %v813
        %v878 = vpack.c.b16 %v818, %v814
        %v879 = vpack.c.b16 %v823, %v819
        %v880 = vpack.c.b16 %v824, %v820
        %v881 = vpack.c.b16 %v825, %v821
        %v882 = vpack.c.b16 %v826, %v822
        %v883 = vpack.c.b16 %v831, %v827
        %v884 = vpack.c.b16 %v832, %v828
        %v885 = vpack.c.b16 %v833, %v829
        %v886 = vpack.c.b16 %v834, %v830
        %v887 = vpack.c.b16 %v839, %v835
        %v888 = vpack.c.b16 %v840, %v836
        %v889 = vpack.c.b16 %v841, %v837
        %v890 = vpack.c.b16 %v842, %v838
        %v891 = vpack.c.b16 %v847, %v843
        %v892 = vpack.c.b16 %v848, %v844
        %v893 = vpack.c.b16 %v849, %v845
        %v894 = vpack.c.b16 %v850, %v846
        %v895 = vpack.c.b16 %v855, %v851
        %v896 = vpack.c.b16 %v856, %v852
        %v897 = vpack.c.b16 %v857, %v853
        %v898 = vpack.c.b16 %v858, %v854
        %v899 = vpack.c.b16 %v863, %v859
        %v900 = vpack.c.b16 %v864, %v860
        %v901 = vpack.c.b16 %v865, %v861
        %v902 = vpack.c.b16 %v866, %v862
        %v903 = vpack.c.b16 %v871, %v867
        %v904 = vpack.c.b16 %v872, %v868
        %v905 = vpack.c.b16 %v873, %v869
        %v906 = vpack.c.b16 %v874, %v870
        %939 = vmatprep.subr.bf16.mxu0 %v876
        %940 = vmatpush1.bf16.msra.mxu0 %v875
        %941 = vmatprep.subr.bf16.mxu0 %v880
        %942 = vmatpush1.bf16.msra.mxu0 %v879
        %943 = vmatprep.subr.bf16.mxu0 %v884
        %944 = vmatpush1.bf16.msra.mxu0 %v883
        %945 = vmatprep.subr.bf16.mxu0 %v888
        %946 = vmatpush1.bf16.msra.mxu0 %v887
        %947 = vmatprep.subr.bf16.mxu0 %v892
        %948 = vmatpush1.bf16.msra.mxu0 %v891
        %949 = vmatprep.subr.bf16.mxu0 %v896
        %950 = vmatpush1.bf16.msra.mxu0 %v895
        %951 = vmatprep.subr.bf16.mxu0 %v900
        %952 = vmatpush1.bf16.msra.mxu0 %v899
        %953 = vmatprep.subr.bf16.mxu0 %v904
        %954 = vmatpush1.bf16.msra.mxu0 %v903
        %955 = vmatprep.subr.bf16.mxu0 0
        %956 = vmatpush1.bf16.msra.mxu0 0
        %957 = vmatprep.subr.bf16.mxu0 0
        %958 = vmatpush1.bf16.msra.mxu0 0
        %959 = vmatprep.subr.bf16.mxu0 0
        %960 = vmatpush1.bf16.msra.mxu0 0
        %961 = vmatprep.subr.bf16.mxu0 0
        %962 = vmatpush1.bf16.msra.mxu0 0
        %963 = vmatprep.subr.bf16.mxu0 0
        %964 = vmatpush1.bf16.msra.mxu0 0
        %965 = vmatprep.subr.bf16.mxu0 0
        %966 = vmatpush1.bf16.msra.mxu0 0
        %967 = vmatprep.subr.bf16.mxu0 0
        %968 = vmatpush1.bf16.msra.mxu0 0
        %969 = vmatprep.subr.bf16.mxu0 0
        %970 = vmatpush1.bf16.msra.mxu0 0
        %971 = vmatprep.mubr.bf16.mxu0 0
        %972 = vmatmul.mubr.bf16.gmra.mrb[0].mxu0 %v746
        %v973 = vpop.f32.mrb[0].mxu0
        %v974 = vadd.f32 0.0, %v973
        %v975 = vpop.f32.mrb[0].mxu0
        %v976 = vadd.f32 0.0, %v975
        %v977 = vpop.f32.mrb[0].mxu0
        %v978 = vpop.f32.mrb[0].mxu0
        %979 = vdwg.mxu0
        %980 = vmatprep.subr.bf16.mxu0 %v878
        %981 = vmatpush1.bf16.msra.mxu0 %v877
        %982 = vmatprep.subr.bf16.mxu0 %v882
        %983 = vmatpush1.bf16.msra.mxu0 %v881
        %984 = vmatprep.subr.bf16.mxu0 %v886
        %985 = vmatpush1.bf16.msra.mxu0 %v885
        %986 = vmatprep.subr.bf16.mxu0 %v890
        %987 = vmatpush1.bf16.msra.mxu0 %v889
        %988 = vmatprep.subr.bf16.mxu0 %v894
        %989 = vmatpush1.bf16.msra.mxu0 %v893
        %990 = vmatprep.subr.bf16.mxu0 %v898
        %991 = vmatpush1.bf16.msra.mxu0 %v897
        %992 = vmatprep.subr.bf16.mxu0 %v902
        %993 = vmatpush1.bf16.msra.mxu0 %v901
        %994 = vmatprep.subr.bf16.mxu0 %v906
        %995 = vmatpush1.bf16.msra.mxu0 %v905
        %996 = vmatprep.subr.bf16.mxu0 0
        %997 = vmatpush1.bf16.msra.mxu0 0
        %998 = vmatprep.subr.bf16.mxu0 0
        %999 = vmatpush1.bf16.msra.mxu0 0
        %1000 = vmatprep.subr.bf16.mxu0 0
        %1001 = vmatpush1.bf16.msra.mxu0 0
        %1002 = vmatprep.subr.bf16.mxu0 0
        %1003 = vmatpush1.bf16.msra.mxu0 0
        %1004 = vmatprep.subr.bf16.mxu0 0
        %1005 = vmatpush1.bf16.msra.mxu0 0
        %1006 = vmatprep.subr.bf16.mxu0 0
        %1007 = vmatpush1.bf16.msra.mxu0 0
        %1008 = vmatprep.subr.bf16.mxu0 0
        %1009 = vmatpush1.bf16.msra.mxu0 0
        %1010 = vmatprep.subr.bf16.mxu0 0
        %1011 = vmatpush1.bf16.msra.mxu0 0
        %1012 = vmatprep.mubr.bf16.mxu0 0
        %1013 = vmatmul.mubr.bf16.gmra.mrb[0].mxu0 %v746
        %v1014 = vpop.f32.mrb[0].mxu0
        %v1015 = vadd.f32 0.0, %v1014
        %v1016 = vpop.f32.mrb[0].mxu0
        %v1017 = vadd.f32 0.0, %v1016
        %v1018 = vpop.f32.mrb[0].mxu0
        %v1019 = vpop.f32.mrb[0].mxu0
        %1020 = vdwg.mxu0
        %v1021 = vadd.f32 %v742, %v974
        %v1022 = vadd.f32 %v743, %v976
        %v1023 = vadd.f32 %v744, %v1015
        %v1024 = vadd.f32 %v745, %v1017
        %v1025 = vmul.f32 %v1021, 0.5
        %v1026 = vtanh.pop %v1025
        %v1027 = vmul.f32 %v1026, 0.5
        %v1028 = vadd.f32 %v1027, 0.5
        %v1029 = vmul.f32 %v1022, 0.5
        %v1030 = vtanh.pop %v1029
        %v1031 = vmul.f32 %v1030, 0.5
        %v1032 = vadd.f32 %v1031, 0.5
        %v1033 = vtanh.pop %v1023
        %v1034 = vmul.f32 %v1024, 0.5
        %v1035 = vtanh.pop %v1034
        %v1036 = vmul.f32 %v1035, 0.5
        %v1037 = vadd.f32 %v1036, 0.5
        %v1038 = vmul.f32 %v1032, %v739
        %v1039 = vmul.f32 %v1028, %v1033
        %v1040 = vadd.f32 %v1038, %v1039
        %v1041 = vtanh.pop %v1040
        %v1042 = vmul.f32 %v1037, %v1041
        %s1043 = scalar_lea.vmem [#allocation2], 16
        %v1044 = vld [vmem:[%s1043] sm:$0xff]
        %v1045 = vld [vmem:[%s1043 + $0x8] sm:$0xff]
        %v1046 = vunpack.c.l.bf16 %v1044
        %v1047 = vunpack.c.h.bf16 %v1044
        %v1048 = vunpack.c.l.bf16 %v1045
        %v1049 = vunpack.c.h.bf16 %v1045
        %v1050 = vpack.c.bf16 %v1042, %v1042
        %1051 = vmatprep.subr.bf16.mxu0 %v876
        %1052 = vmatpush1.bf16.msra.mxu0 %v875
        %1053 = vmatprep.subr.bf16.mxu0 %v880
        %1054 = vmatpush1.bf16.msra.mxu0 %v879
        %1055 = vmatprep.subr.bf16.mxu0 %v884
        %1056 = vmatpush1.bf16.msra.mxu0 %v883
        %1057 = vmatprep.subr.bf16.mxu0 %v888
        %1058 = vmatpush1.bf16.msra.mxu0 %v887
        %1059 = vmatprep.subr.bf16.mxu0 %v892
        %1060 = vmatpush1.bf16.msra.mxu0 %v891
        %1061 = vmatprep.subr.bf16.mxu0 %v896
        %1062 = vmatpush1.bf16.msra.mxu0 %v895
        %1063 = vmatprep.subr.bf16.mxu0 %v900
        %1064 = vmatpush1.bf16.msra.mxu0 %v899
        %1065 = vmatprep.subr.bf16.mxu0 %v904
        %1066 = vmatpush1.bf16.msra.mxu0 %v903
        %1067 = vmatprep.subr.bf16.mxu0 0
        %1068 = vmatpush1.bf16.msra.mxu0 0
        %1069 = vmatprep.subr.bf16.mxu0 0
        %1070 = vmatpush1.bf16.msra.mxu0 0
        %1071 = vmatprep.subr.bf16.mxu0 0
        %1072 = vmatpush1.bf16.msra.mxu0 0
        %1073 = vmatprep.subr.bf16.mxu0 0
        %1074 = vmatpush1.bf16.msra.mxu0 0
        %1075 = vmatprep.subr.bf16.mxu0 0
        %1076 = vmatpush1.bf16.msra.mxu0 0
        %1077 = vmatprep.subr.bf16.mxu0 0
        %1078 = vmatpush1.bf16.msra.mxu0 0
        %1079 = vmatprep.subr.bf16.mxu0 0
        %1080 = vmatpush1.bf16.msra.mxu0 0
        %1081 = vmatprep.subr.bf16.mxu0 0
        %1082 = vmatpush1.bf16.msra.mxu0 0
        %1083 = vmatprep.mubr.bf16.mxu0 0
        %1084 = vmatmul.mubr.bf16.gmra.mrb[0].mxu0 %v1050
        %v1085 = vpop.f32.mrb[0].mxu0
        %v1086 = vadd.f32 0.0, %v1085
        %v1087 = vpop.f32.mrb[0].mxu0
        %v1088 = vadd.f32 0.0, %v1087
        %v1089 = vpop.f32.mrb[0].mxu0
        %v1090 = vpop.f32.mrb[0].mxu0
        %1091 = vdwg.mxu0
        %1092 = vmatprep.subr.bf16.mxu0 %v878
        %1093 = vmatpush1.bf16.msra.mxu0 %v877
        %1094 = vmatprep.subr.bf16.mxu0 %v882
        %1095 = vmatpush1.bf16.msra.mxu0 %v881
        %1096 = vmatprep.subr.bf16.mxu0 %v886
        %1097 = vmatpush1.bf16.msra.mxu0 %v885
        %1098 = vmatprep.subr.bf16.mxu0 %v890
        %1099 = vmatpush1.bf16.msra.mxu0 %v889
        %1100 = vmatprep.subr.bf16.mxu0 %v894
        %1101 = vmatpush1.bf16.msra.mxu0 %v893
        %1102 = vmatprep.subr.bf16.mxu0 %v898
        %1103 = vmatpush1.bf16.msra.mxu0 %v897
        %1104 = vmatprep.subr.bf16.mxu0 %v902
        %1105 = vmatpush1.bf16.msra.mxu0 %v901
        %1106 = vmatprep.subr.bf16.mxu0 %v906
        %1107 = vmatpush1.bf16.msra.mxu0 %v905
        %1108 = vmatprep.subr.bf16.mxu0 0
        %1109 = vmatpush1.bf16.msra.mxu0 0
        %1110 = vmatprep.subr.bf16.mxu0 0
        %1111 = vmatpush1.bf16.msra.mxu0 0
        %1112 = vmatprep.subr.bf16.mxu0 0
        %1113 = vmatpush1.bf16.msra.mxu0 0
        %1114 = vmatprep.subr.bf16.mxu0 0
        %1115 = vmatpush1.bf16.msra.mxu0 0
        %1116 = vmatprep.subr.bf16.mxu0 0
        %1117 = vmatpush1.bf16.msra.mxu0 0
        %1118 = vmatprep.subr.bf16.mxu0 0
        %1119 = vmatpush1.bf16.msra.mxu0 0
        %1120 = vmatprep.subr.bf16.mxu0 0
        %1121 = vmatpush1.bf16.msra.mxu0 0
        %1122 = vmatprep.subr.bf16.mxu0 0
        %1123 = vmatpush1.bf16.msra.mxu0 0
        %1124 = vmatprep.mubr.bf16.mxu0 0
        %1125 = vmatmul.mubr.bf16.gmra.mrb[0].mxu0 %v1050
        %v1126 = vpop.f32.mrb[0].mxu0
        %v1127 = vadd.f32 0.0, %v1126
        %v1128 = vpop.f32.mrb[0].mxu0
        %v1129 = vadd.f32 0.0, %v1128
        %v1130 = vpop.f32.mrb[0].mxu0
        %v1131 = vpop.f32.mrb[0].mxu0
        %1132 = vdwg.mxu0
        %v1133 = vadd.f32 %v1046, %v1086
        %v1134 = vadd.f32 %v1047, %v1088
        %v1135 = vadd.f32 %v1048, %v1127
        %v1136 = vadd.f32 %v1049, %v1129
        %v1137 = vmul.f32 %v1133, 0.5
        %v1138 = vtanh.pop %v1137
        %v1139 = vmul.f32 %v1138, 0.5
        %v1140 = vadd.f32 %v1139, 0.5
        %v1141 = vmul.f32 %v1134, 0.5
        %v1142 = vtanh.pop %v1141
        %v1143 = vmul.f32 %v1142, 0.5
        %v1144 = vadd.f32 %v1143, 0.5
        %v1145 = vtanh.pop %v1135
        %v1146 = vmul.f32 %v1136, 0.5
        %v1147 = vtanh.pop %v1146
        %v1148 = vmul.f32 %v1147, 0.5
        %v1149 = vadd.f32 %v1148, 0.5
        %v1150 = vmul.f32 %v1144, %v1040
        %v1151 = vmul.f32 %v1140, %v1145
        %v1152 = vadd.f32 %v1150, %v1151
        %v1153 = vtanh.pop %v1152
        %v1154 = vmul.f32 %v1149, %v1153
        %s1155 = scalar_lea.vmem [#allocation2], 32
        %v1156 = vld [vmem:[%s1155] sm:$0xff]
        %v1157 = vld [vmem:[%s1155 + $0x8] sm:$0xff]
        %v1158 = vunpack.c.l.bf16 %v1156
        %v1159 = vunpack.c.h.bf16 %v1156
        %v1160 = vunpack.c.l.bf16 %v1157
        %v1161 = vunpack.c.h.bf16 %v1157
        %v1162 = vpack.c.bf16 %v1154, %v1154
        %1163 = vmatprep.subr.bf16.mxu0 %v876
        %1164 = vmatpush1.bf16.msra.mxu0 %v875
        %1165 = vmatprep.subr.bf16.mxu0 %v880
        %1166 = vmatpush1.bf16.msra.mxu0 %v879
        %1167 = vmatprep.subr.bf16.mxu0 %v884
        %1168 = vmatpush1.bf16.msra.mxu0 %v883
        %1169 = vmatprep.subr.bf16.mxu0 %v888
        %1170 = vmatpush1.bf16.msra.mxu0 %v887
        %1171 = vmatprep.subr.bf16.mxu0 %v892
        %1172 = vmatpush1.bf16.msra.mxu0 %v891
        %1173 = vmatprep.subr.bf16.mxu0 %v896
        %1174 = vmatpush1.bf16.msra.mxu0 %v895
        %1175 = vmatprep.subr.bf16.mxu0 %v900
        %1176 = vmatpush1.bf16.msra.mxu0 %v899
        %1177 = vmatprep.subr.bf16.mxu0 %v904
        %1178 = vmatpush1.bf16.msra.mxu0 %v903
        %1179 = vmatprep.subr.bf16.mxu0 0
        %1180 = vmatpush1.bf16.msra.mxu0 0
        %1181 = vmatprep.subr.bf16.mxu0 0
        %1182 = vmatpush1.bf16.msra.mxu0 0
        %1183 = vmatprep.subr.bf16.mxu0 0
        %1184 = vmatpush1.bf16.msra.mxu0 0
        %1185 = vmatprep.subr.bf16.mxu0 0
        %1186 = vmatpush1.bf16.msra.mxu0 0
        %1187 = vmatprep.subr.bf16.mxu0 0
        %1188 = vmatpush1.bf16.msra.mxu0 0
        %1189 = vmatprep.subr.bf16.mxu0 0
        %1190 = vmatpush1.bf16.msra.mxu0 0
        %1191 = vmatprep.subr.bf16.mxu0 0
        %1192 = vmatpush1.bf16.msra.mxu0 0
        %1193 = vmatprep.subr.bf16.mxu0 0
        %1194 = vmatpush1.bf16.msra.mxu0 0
        %1195 = vmatprep.mubr.bf16.mxu0 0
        %1196 = vmatmul.mubr.bf16.gmra.mrb[0].mxu0 %v1162
        %v1197 = vpop.f32.mrb[0].mxu0
        %v1198 = vadd.f32 0.0, %v1197
        %v1199 = vpop.f32.mrb[0].mxu0
        %v1200 = vadd.f32 0.0, %v1199
        %v1201 = vpop.f32.mrb[0].mxu0
        %v1202 = vpop.f32.mrb[0].mxu0
        %1203 = vdwg.mxu0
        %1204 = vmatprep.subr.bf16.mxu0 %v878
        %1205 = vmatpush1.bf16.msra.mxu0 %v877
        %1206 = vmatprep.subr.bf16.mxu0 %v882
        %1207 = vmatpush1.bf16.msra.mxu0 %v881
        %1208 = vmatprep.subr.bf16.mxu0 %v886
        %1209 = vmatpush1.bf16.msra.mxu0 %v885
        %1210 = vmatprep.subr.bf16.mxu0 %v890
        %1211 = vmatpush1.bf16.msra.mxu0 %v889
        %1212 = vmatprep.subr.bf16.mxu0 %v894
        %1213 = vmatpush1.bf16.msra.mxu0 %v893
        %1214 = vmatprep.subr.bf16.mxu0 %v898
        %1215 = vmatpush1.bf16.msra.mxu0 %v897
        %1216 = vmatprep.subr.bf16.mxu0 %v902
        %1217 = vmatpush1.bf16.msra.mxu0 %v901
        %1218 = vmatprep.subr.bf16.mxu0 %v906
        %1219 = vmatpush1.bf16.msra.mxu0 %v905
        %1220 = vmatprep.subr.bf16.mxu0 0
        %1221 = vmatpush1.bf16.msra.mxu0 0
        %1222 = vmatprep.subr.bf16.mxu0 0
        %1223 = vmatpush1.bf16.msra.mxu0 0
        %1224 = vmatprep.subr.bf16.mxu0 0
        %1225 = vmatpush1.bf16.msra.mxu0 0
        %1226 = vmatprep.subr.bf16.mxu0 0
        %1227 = vmatpush1.bf16.msra.mxu0 0
        %1228 = vmatprep.subr.bf16.mxu0 0
        %1229 = vmatpush1.bf16.msra.mxu0 0
        %1230 = vmatprep.subr.bf16.mxu0 0
        %1231 = vmatpush1.bf16.msra.mxu0 0
        %1232 = vmatprep.subr.bf16.mxu0 0
        %1233 = vmatpush1.bf16.msra.mxu0 0
        %1234 = vmatprep.subr.bf16.mxu0 0
        %1235 = vmatpush1.bf16.msra.mxu0 0
        %1236 = vmatprep.mubr.bf16.mxu0 0
        %1237 = vmatmul.mubr.bf16.gmra.mrb[0].mxu0 %v1162
        %v1238 = vpop.f32.mrb[0].mxu0
        %v1239 = vadd.f32 0.0, %v1238
        %v1240 = vpop.f32.mrb[0].mxu0
        %v1241 = vadd.f32 0.0, %v1240
        %v1242 = vpop.f32.mrb[0].mxu0
        %v1243 = vpop.f32.mrb[0].mxu0
        %1244 = vdwg.mxu0
        %v1245 = vadd.f32 %v1158, %v1198
        %v1246 = vadd.f32 %v1159, %v1200
        %v1247 = vadd.f32 %v1160, %v1239
        %v1248 = vadd.f32 %v1161, %v1241
        %v1249 = vmul.f32 %v1245, 0.5
        %v1250 = vtanh.pop %v1249
        %v1251 = vmul.f32 %v1250, 0.5
        %v1252 = vadd.f32 %v1251, 0.5
        %v1253 = vmul.f32 %v1246, 0.5
        %v1254 = vtanh.pop %v1253
        %v1255 = vmul.f32 %v1254, 0.5
        %v1256 = vadd.f32 %v1255, 0.5
        %v1257 = vtanh.pop %v1247
        %v1258 = vmul.f32 %v1248, 0.5
        %v1259 = vtanh.pop %v1258
        %v1260 = vmul.f32 %v1259, 0.5
        %v1261 = vadd.f32 %v1260, 0.5
        %v1262 = vmul.f32 %v1256, %v1152
        %v1263 = vmul.f32 %v1252, %v1257
        %v1264 = vadd.f32 %v1262, %v1263
        %v1265 = vtanh.pop %v1264
        %v1266 = vmul.f32 %v1261, %v1265
        %s1267 = scalar_lea.vmem [#allocation2], 48
        %v1268 = vld [vmem:[%s1267] sm:$0xff]
        %v1269 = vld [vmem:[%s1267 + $0x8] sm:$0xff]
        %v1270 = vunpack.c.l.bf16 %v1268
        %v1271 = vunpack.c.h.bf16 %v1268
        %v1272 = vunpack.c.l.bf16 %v1269
        %v1273 = vunpack.c.h.bf16 %v1269
        %v1274 = vpack.c.bf16 %v1266, %v1266
        %1275 = vmatprep.subr.bf16.mxu0 %v876
        %1276 = vmatpush1.bf16.msra.mxu0 %v875
        %1277 = vmatprep.subr.bf16.mxu0 %v880
        %1278 = vmatpush1.bf16.msra.mxu0 %v879
        %1279 = vmatprep.subr.bf16.mxu0 %v884
        %1280 = vmatpush1.bf16.msra.mxu0 %v883
        %1281 = vmatprep.subr.bf16.mxu0 %v888
        %1282 = vmatpush1.bf16.msra.mxu0 %v887
        %1283 = vmatprep.subr.bf16.mxu0 %v892
        %1284 = vmatpush1.bf16.msra.mxu0 %v891
        %1285 = vmatprep.subr.bf16.mxu0 %v896
        %1286 = vmatpush1.bf16.msra.mxu0 %v895
        %1287 = vmatprep.subr.bf16.mxu0 %v900
        %1288 = vmatpush1.bf16.msra.mxu0 %v899
        %1289 = vmatprep.subr.bf16.mxu0 %v904
        %1290 = vmatpush1.bf16.msra.mxu0 %v903
        %1291 = vmatprep.subr.bf16.mxu0 0
        %1292 = vmatpush1.bf16.msra.mxu0 0
        %1293 = vmatprep.subr.bf16.mxu0 0
        %1294 = vmatpush1.bf16.msra.mxu0 0
        %1295 = vmatprep.subr.bf16.mxu0 0
        %1296 = vmatpush1.bf16.msra.mxu0 0
        %1297 = vmatprep.subr.bf16.mxu0 0
        %1298 = vmatpush1.bf16.msra.mxu0 0
        %1299 = vmatprep.subr.bf16.mxu0 0
        %1300 = vmatpush1.bf16.msra.mxu0 0
        %1301 = vmatprep.subr.bf16.mxu0 0
        %1302 = vmatpush1.bf16.msra.mxu0 0
        %1303 = vmatprep.subr.bf16.mxu0 0
        %1304 = vmatpush1.bf16.msra.mxu0 0
        %1305 = vmatprep.subr.bf16.mxu0 0
        %1306 = vmatpush1.bf16.msra.mxu0 0
        %1307 = vmatprep.mubr.bf16.mxu0 0
        %1308 = vmatmul.mubr.bf16.gmra.mrb[0].mxu0 %v1274
        %v1309 = vpop.f32.mrb[0].mxu0
        %v1310 = vadd.f32 0.0, %v1309
        %v1311 = vpop.f32.mrb[0].mxu0
        %v1312 = vadd.f32 0.0, %v1311
        %v1313 = vpop.f32.mrb[0].mxu0
        %v1314 = vpop.f32.mrb[0].mxu0
        %1315 = vdwg.mxu0
        %1316 = vmatprep.subr.bf16.mxu0 %v878
        %1317 = vmatpush1.bf16.msra.mxu0 %v877
        %1318 = vmatprep.subr.bf16.mxu0 %v882
        %1319 = vmatpush1.bf16.msra.mxu0 %v881
        %1320 = vmatprep.subr.bf16.mxu0 %v886
        %1321 = vmatpush1.bf16.msra.mxu0 %v885
        %1322 = vmatprep.subr.bf16.mxu0 %v890
        %1323 = vmatpush1.bf16.msra.mxu0 %v889
        %1324 = vmatprep.subr.bf16.mxu0 %v894
        %1325 = vmatpush1.bf16.msra.mxu0 %v893
        %1326 = vmatprep.subr.bf16.mxu0 %v898
        %1327 = vmatpush1.bf16.msra.mxu0 %v897
        %1328 = vmatprep.subr.bf16.mxu0 %v902
        %1329 = vmatpush1.bf16.msra.mxu0 %v901
        %1330 = vmatprep.subr.bf16.mxu0 %v906
        %1331 = vmatpush1.bf16.msra.mxu0 %v905
        %1332 = vmatprep.subr.bf16.mxu0 0
        %1333 = vmatpush1.bf16.msra.mxu0 0
        %1334 = vmatprep.subr.bf16.mxu0 0
        %1335 = vmatpush1.bf16.msra.mxu0 0
        %1336 = vmatprep.subr.bf16.mxu0 0
        %1337 = vmatpush1.bf16.msra.mxu0 0
        %1338 = vmatprep.subr.bf16.mxu0 0
        %1339 = vmatpush1.bf16.msra.mxu0 0
        %1340 = vmatprep.subr.bf16.mxu0 0
        %1341 = vmatpush1.bf16.msra.mxu0 0
        %1342 = vmatprep.subr.bf16.mxu0 0
        %1343 = vmatpush1.bf16.msra.mxu0 0
        %1344 = vmatprep.subr.bf16.mxu0 0
        %1345 = vmatpush1.bf16.msra.mxu0 0
        %1346 = vmatprep.subr.bf16.mxu0 0
        %1347 = vmatpush1.bf16.msra.mxu0 0
        %1348 = vmatprep.mubr.bf16.mxu0 0
        %1349 = vmatmul.mubr.bf16.gmra.mrb[0].mxu0 %v1274
        %v1350 = vpop.f32.mrb[0].mxu0
        %v1351 = vadd.f32 0.0, %v1350
        %v1352 = vpop.f32.mrb[0].mxu0
        %v1353 = vadd.f32 0.0, %v1352
        %v1354 = vpop.f32.mrb[0].mxu0
        %v1355 = vpop.f32.mrb[0].mxu0
        %1356 = vdwg.mxu0
        %v1357 = vadd.f32 %v1270, %v1310
        %v1358 = vadd.f32 %v1271, %v1312
        %v1359 = vadd.f32 %v1272, %v1351
        %v1360 = vadd.f32 %v1273, %v1353
        %v1361 = vmul.f32 %v1357, 0.5
        %v1362 = vtanh.pop %v1361
        %v1363 = vmul.f32 %v1362, 0.5
        %v1364 = vadd.f32 %v1363, 0.5
        %v1365 = vmul.f32 %v1358, 0.5
        %v1366 = vtanh.pop %v1365
        %v1367 = vmul.f32 %v1366, 0.5
        %v1368 = vadd.f32 %v1367, 0.5
        %v1369 = vtanh.pop %v1359
        %v1370 = vmul.f32 %v1360, 0.5
        %v1371 = vtanh.pop %v1370
        %v1372 = vmul.f32 %v1371, 0.5
        %v1373 = vadd.f32 %v1372, 0.5
        %v1374 = vmul.f32 %v1368, %v1264
        %v1375 = vmul.f32 %v1364, %v1369
        %v1376 = vadd.f32 %v1374, %v1375
        %v1377 = vtanh.pop %v1376
        %v1378 = vmul.f32 %v1373, %v1377
        %1379 = vst [vmem:[#allocation3] sm:$0xff] %v1378
        %1380 = vst [vmem:[#allocation4] sm:$0xff] %v1376
        %p1381 = scmp.eq.s32.totalorder %s28, 1
        // Predicated region
        $region65: #{tpu_custom_call.1} parent=43 // pred_check
          %p1382 = pneg %p1381
        $region66: #{tpu_custom_call.1} parent=43 // pred_check_branch
          %1384 = sbr.rel (%p1382) target = $region68
        $region67: #{tpu_custom_call.1} parent=43 // pred_region
          %v1385 = vpack.c.bf16 %v1378, %v1378
          %v1386 = vld [vmem:[#allocation11] sm:$0xf]
          %v1387 = vld [vmem:[#allocation11 + $0x4] sm:$0xf]
          %v1388 = vld [vmem:[#allocation11 + $0x8] sm:$0xf]
          %v1389 = vld [vmem:[#allocation11 + $0xc] sm:$0xf]
          %v1390 = vld [vmem:[#allocation11 + $0x10] sm:$0xf]
          %v1391 = vld [vmem:[#allocation11 + $0x14] sm:$0xf]
          %v1392 = vld [vmem:[#allocation11 + $0x18] sm:$0xf]
          %v1393 = vld [vmem:[#allocation11 + $0x1c] sm:$0xf]
          %v1394 = vld [vmem:[#allocation11 + $0x20] sm:$0xf]
          %v1395 = vld [vmem:[#allocation11 + $0x24] sm:$0xf]
          %v1396 = vld [vmem:[#allocation11 + $0x28] sm:$0xf]
          %v1397 = vld [vmem:[#allocation11 + $0x2c] sm:$0xf]
          %v1398 = vld [vmem:[#allocation11 + $0x30] sm:$0xf]
          %v1399 = vld [vmem:[#allocation11 + $0x34] sm:$0xf]
          %v1400 = vld [vmem:[#allocation11 + $0x38] sm:$0xf]
          %v1401 = vld [vmem:[#allocation11 + $0x3c] sm:$0xf]
          %v1402 = vld [vmem:[%s5] sm:$0x1]
          %v1404 = vlaneseq
          %v1405 = vshrl.u32 %v1404, 7
          %v1406 = vsub.s32 0, %v1405
          %v1407 = vrot.slane %v1402, %v1406
          %v1425 = vunpack.c.l.b16 %v1386
          %v1426 = vunpack.c.l.b16 %v1387
          %v1427 = vunpack.c.l.b16 %v1388
          %v1428 = vunpack.c.l.b16 %v1389
          %v1429 = vunpack.c.l.b16 %v1390
          %v1430 = vunpack.c.l.b16 %v1391
          %v1431 = vunpack.c.l.b16 %v1392
          %v1432 = vunpack.c.l.b16 %v1393
          %v1433 = vunpack.c.l.b16 %v1394
          %v1434 = vunpack.c.l.b16 %v1395
          %v1435 = vunpack.c.l.b16 %v1396
          %v1436 = vunpack.c.l.b16 %v1397
          %v1437 = vunpack.c.l.b16 %v1398
          %v1438 = vunpack.c.l.b16 %v1399
          %v1439 = vunpack.c.l.b16 %v1400
          %v1440 = vunpack.c.l.b16 %v1401
          %v1441 = vpack.c.b16 %v1426, %v1425
          %v1442 = vpack.c.b16 %v1428, %v1427
          %v1443 = vpack.c.b16 %v1430, %v1429
          %v1444 = vpack.c.b16 %v1432, %v1431
          %v1445 = vpack.c.b16 %v1434, %v1433
          %v1446 = vpack.c.b16 %v1436, %v1435
          %v1447 = vpack.c.b16 %v1438, %v1437
          %v1448 = vpack.c.b16 %v1440, %v1439
          %1457 = vmatprep.subr.bf16.mxu0 0
          %1458 = vmatpush1.bf16.msra.mxu0 %v1441
          %1459 = vmatprep.subr.bf16.mxu0 0
          %1460 = vmatpush1.bf16.msra.mxu0 %v1442
          %1461 = vmatprep.subr.bf16.mxu0 0
          %1462 = vmatpush1.bf16.msra.mxu0 %v1443
          %1463 = vmatprep.subr.bf16.mxu0 0
          %1464 = vmatpush1.bf16.msra.mxu0 %v1444
          %1465 = vmatprep.subr.bf16.mxu0 0
          %1466 = vmatpush1.bf16.msra.mxu0 %v1445
          %1467 = vmatprep.subr.bf16.mxu0 0
          %1468 = vmatpush1.bf16.msra.mxu0 %v1446
          %1469 = vmatprep.subr.bf16.mxu0 0
          %1470 = vmatpush1.bf16.msra.mxu0 %v1447
          %1471 = vmatprep.subr.bf16.mxu0 0
          %1472 = vmatpush1.bf16.msra.mxu0 %v1448
          %1473 = vmatprep.subr.bf16.mxu0 0
          %1474 = vmatpush1.bf16.msra.mxu0 0
          %1475 = vmatprep.subr.bf16.mxu0 0
          %1476 = vmatpush1.bf16.msra.mxu0 0
          %1477 = vmatprep.subr.bf16.mxu0 0
          %1478 = vmatpush1.bf16.msra.mxu0 0
          %1479 = vmatprep.subr.bf16.mxu0 0
          %1480 = vmatpush1.bf16.msra.mxu0 0
          %1481 = vmatprep.subr.bf16.mxu0 0
          %1482 = vmatpush1.bf16.msra.mxu0 0
          %1483 = vmatprep.subr.bf16.mxu0 0
          %1484 = vmatpush1.bf16.msra.mxu0 0
          %1485 = vmatprep.subr.bf16.mxu0 0
          %1486 = vmatpush1.bf16.msra.mxu0 0
          %1487 = vmatprep.subr.bf16.mxu0 0
          %1488 = vmatpush1.bf16.msra.mxu0 0
          %1489 = vmatprep.mubr.bf16.mxu0 0
          %1490 = vmatmul.mubr.bf16.gmra.mrb[0].mxu0 %v1385
          %v1491 = vpop.f32.mrb[0].mxu0
          %v1492 = vadd.f32 %v1407, %v1491
          %v1493 = vpop.f32.mrb[0].mxu0
          %v1494 = vpop.f32.mrb[0].mxu0
          %v1495 = vpop.f32.mrb[0].mxu0
          %1496 = vdwg.mxu0
          %1497 = vst [vmem:[#allocation13] sm:$0xff] %v1492
        $region68: #{tpu_custom_call.1} parent=43 // pred_fallthru
          _
        // Predicated region
        $region69: #{tpu_custom_call.1} parent=43 // pred_check
          %p1498 = pneg %p186
        $region70: #{tpu_custom_call.1} parent=43 // pred_check_branch
          %1500 = sbr.rel (%p1498) target = $region72
        $region71: #{tpu_custom_call.1} parent=43 // pred_region
          %s1502 = ssub.s32 128, 128
          %1503 = vsyncadd [#allocation7], %s1502
          %s1504 = smul.addr %s27, 128
          %s1505 = scalar_lea.hbm %s6, %s1504
          %s1507 = sshll.u32 [#allocation13], 4
          %s1508 = int_to_ptr.vmem [resolvable:$true] %s1507
          %1510 = dma.vmem_to_hbm [thread:$0]  %s1508, 128, %s1505, [#allocation7]
        $region72: #{tpu_custom_call.1} parent=43 // pred_fallthru
          _
        // Predicated region
        $region73: #{tpu_custom_call.1} parent=43 // pred_check
          %p1511 = pneg %p186
        $region74: #{tpu_custom_call.1} parent=43 // pred_check_branch
          %1513 = sbr.rel (%p1511) target = $region76
        $region75: #{tpu_custom_call.1} parent=43 // pred_region
          %1514 = dma.done [#allocation7], 128
        $region76: #{tpu_custom_call.1} parent=43 // pred_fallthru
          _
      $region44: #{tpu_custom_call.1} parent=5 // pred_fallthru
        _
      %p1515 = scmp.le.s32.totalorder 2, %s18
      // Predicated region
      $region77: #{tpu_custom_call.1} parent=5 // pred_check
        %p1516 = pneg %p1515
      $region78: #{tpu_custom_call.1} parent=5 // pred_check_branch
        %1518 = sbr.rel (%p1516) target = $region80
      $region79: #{tpu_custom_call.1} parent=5 // pred_region
        %s1519 = ssub.s32 %s18, 2
      $region80: #{tpu_custom_call.1} parent=5 // pred_fallthru
        _
    $region6: #{tpu_custom_call.1} parent=1 // loop_footer
      %s22 = sadd.s32 1, %s18
    $region7: #{tpu_custom_call.1} parent=1 // loop_footer_branch
      %17 = sbr.rel target = $region3
    $region8: #{tpu_custom_call.1} parent=1 // loop_exit
      _
    %1520 = vsyncpa [#allocation6], 1
    %s1521 = scalar_lea.sflag [#allocation6], 1
    %1522 = vsyncpa %s1521, 1
    %1523 = vsyncpa [#allocation9], 1
    %1524 = vsyncpa [#allocation12], 1
    %1525 = vsyncpa [#allocation7], 1
    %s1526 = scalar_lea.sflag [#allocation7], 1
    %1527 = vsyncpa %s1526, 1

</llo_original>
